<compile_context>
chip_gen: v5e
topology: v5e:2x2
jax: 0.10.0
libtpu: 0.0.40
codegen_flags: <defaults>
</compile_context>

<pallas_src>
import functools

import jax
import jax.numpy as jnp
from jax.experimental import pallas as pl
from jax.experimental.pallas import tpu as pltpu

NB_PAD = 128  # decoder-head output padded to a full 128-lane register


# ------------------------------ fused kernel -------------------------------- #

def _fused_encoder_decoder_kernel(
    x_ref,       # (1, H, W, C)          f32   input image block (NHWC)
    wm_ref,      # (1, 1, NB)            f32   watermark bits for this batch element
    w1_ref,      # (9*(C+NB), Hd)        bf16  encoder conv1, im2col-flattened
    b1_ref,      # (1, Hd)               f32
    w2_ref,      # (9*Hd, C)             bf16  encoder conv2, im2col-flattened
    b2_ref,      # (1, C)                f32
    wd_ref,      # (9*C, Hd)             bf16  decoder conv, im2col-flattened
    bd_ref,      # (1, Hd)               f32
    wfc_ref,     # (Hd, NB_PAD)          f32   decoder FC (zero-padded columns)
    bfc_ref,     # (1, NB_PAD)           f32
    o_wm_ref,    # (1, H, W, C)          f32   watermarked image block
    o_ex_ref,    # (1, 1, NB_PAD)        f32   extracted logits (padded)
    pad_cat,     # scratch (1, H+2, W+2, C+NB) f32  concat(image, wm) halo
    pad_h,       # scratch (1, H+2, W+2, Hd)   f32  hidden halo
    pad_c,       # scratch (1, H+2, W+2, C)    f32  watermarked-image halo
    *,
    scaling_i, scaling_w, mxu_dtype,
):
    _, H, W, C = x_ref.shape
    NB = wm_ref.shape[-1]
    Hd = b1_ref.shape[-1]
    P = H * W  # pixels per batch element (one batch element per grid step)

    def zero_border(ref):
        """Zero only the 1-pixel halo border (review item 7), not the whole buffer."""
        _, hp, wp, cc = ref.shape
        ref[:, 0:1, :, :] = jnp.zeros((1, 1, wp, cc), ref.dtype)
        ref[:, hp - 1:hp, :, :] = jnp.zeros((1, 1, wp, cc), ref.dtype)
        ref[:, :, 0:1, :] = jnp.zeros((1, hp, 1, cc), ref.dtype)
        ref[:, :, wp - 1:wp, :] = jnp.zeros((1, hp, 1, cc), ref.dtype)

    def im2col(pad_ref):
        """Gather the 9 shifted 3x3 windows into one (P, 9*Cin) patch (review item 1).
        Tap order (dy outer, dx inner) matches the weight flattening in
        prepare_params.  Single bf16 cast per conv (replaces 9 per-tap casts)."""
        cin = pad_ref.shape[-1]
        pieces = [
            pad_ref[:, dy:dy + H, dx:dx + W, :].reshape(P, cin)
            for dy in range(3) for dx in range(3)
        ]
        return jnp.concatenate(pieces, axis=-1).astype(mxu_dtype)  # (P, 9*cin)

    # ---------------- encoder conv1: concat(x, wm) -> conv3x3 -> ReLU -----------
    # The watermark channels are written ONCE (one broadcast + one interior store)
    # and folded into the im2col contraction K — no per-tap broadcasts, no border
    # masks (zero halo reproduces the zero padding of the concat input exactly).
    zero_border(pad_cat)
    wm_map = jnp.broadcast_to(wm_ref[...].reshape(1, 1, 1, NB), (1, H, W, NB))
    pad_cat[:, 1:H + 1, 1:W + 1, :] = jnp.concatenate([x_ref[...], wm_map], axis=-1)

    h1 = jnp.maximum(
        jnp.dot(im2col(pad_cat), w1_ref[...], preferred_element_type=jnp.float32)
        + b1_ref[...],
        0.0)                                                       # (P, Hd) f32

    # ---------------- encoder conv2 + blend --------------------------------------
    zero_border(pad_h)
    pad_h[:, 1:H + 1, 1:W + 1, :] = h1.reshape(1, H, W, Hd)
    enc = jnp.dot(im2col(pad_h), w2_ref[...],
                  preferred_element_type=jnp.float32) + b2_ref[...]  # (P, C) f32

    wmk = x_ref[...].reshape(P, C) * scaling_i + enc * scaling_w     # blend in f32
    wmk4 = wmk.reshape(1, H, W, C)
    o_wm_ref[...] = wmk4

    # noise layer: identity in eval mode.
    # TODO(synk): training-mode noise_layer is not modeled (reference only applies it
    # when module.training is True).

    # ---------------- decoder conv + GAP + FC (d1 never leaves VMEM) --------------
    zero_border(pad_c)
    pad_c[:, 1:H + 1, 1:W + 1, :] = wmk4
    d1 = jnp.maximum(
        jnp.dot(im2col(pad_c), wd_ref[...], preferred_element_type=jnp.float32)
        + bd_ref[...],
        0.0)                                                       # (P, Hd) f32
    pooled = jnp.mean(d1.reshape(1, P, Hd), axis=1)                # (1, Hd) GAP
    logits = jnp.dot(pooled, wfc_ref[...],
                     preferred_element_type=jnp.float32) + bfc_ref[...]
    o_ex_ref[...] = logits.reshape(1, 1, NB_PAD)


# ------------------------------ parameters ---------------------------------- #

def init_params(key, *, img_channels, hidden, num_bits):
    ks = jax.random.split(key, 4)
    s = 0.05
    return {
        "w_e1": s * jax.random.normal(ks[0], (3, 3, img_channels + num_bits, hidden), jnp.float32),
        "b_e1": jnp.zeros((1, hidden), jnp.float32),
        "w_e2": s * jax.random.normal(ks[1], (3, 3, hidden, img_channels), jnp.float32),
        "b_e2": jnp.zeros((1, img_channels), jnp.float32),
        "w_d1": s * jax.random.normal(ks[2], (3, 3, img_channels, hidden), jnp.float32),
        "b_d1": jnp.zeros((1, hidden), jnp.float32),
        "w_fc": s * jax.random.normal(ks[3], (hidden, num_bits), jnp.float32),
        "b_fc": jnp.zeros((1, num_bits), jnp.float32),
    }


def prepare_params(params, *, mxu_dtype=jnp.bfloat16):
    """One-time (outside jit) weight prep:
      * conv weights flattened to im2col form (9*Cin, Cout) — tap-major (dy, dx),
        channels [image, watermark] within each tap for conv1 (matches the in-kernel
        concat order), and cast to bf16 for the MXU (review items 1/11);
      * FC padded to 128 output lanes so the logits store is lane-dense."""
    w_e1, w_e2, w_d1 = params["w_e1"], params["w_e2"], params["w_d1"]
    cin1, hidden = w_e1.shape[2], w_e1.shape[3]
    c_img = w_d1.shape[2]
    num_bits = params["w_fc"].shape[1]
    assert 0 < num_bits <= NB_PAD
    pad_cols = NB_PAD - num_bits
    return {
        "w_e1": w_e1.reshape(9 * cin1, hidden).astype(mxu_dtype),
        "b_e1": params["b_e1"].astype(jnp.float32),
        "w_e2": w_e2.reshape(9 * hidden, c_img).astype(mxu_dtype),
        "b_e2": params["b_e2"].astype(jnp.float32),
        "w_d1": w_d1.reshape(9 * c_img, hidden).astype(mxu_dtype),
        "b_d1": params["b_d1"].astype(jnp.float32),
        "w_fc": jnp.pad(params["w_fc"], ((0, 0), (0, pad_cols))).astype(jnp.float32),
        "b_fc": jnp.pad(params["b_fc"], ((0, 0), (0, pad_cols))).astype(jnp.float32),
    }


# ------------------------------ forward wrappers ----------------------------- #

def encoder_decoder_forward_nhwc(prepared, x_nhwc, watermark, *,
                                 scaling_i=0.4, scaling_w=1.0,
                                 mxu_dtype=jnp.bfloat16):
    """Layout-clean NHWC entry point (review item 8): no transposes anywhere.
    Mirrors EncoderDecoder.forward (eval mode)."""
    B, H, W, C = x_nhwc.shape
    NB = watermark.shape[-1]
    Hd = prepared["b_e1"].shape[-1]
    CIN1 = C + NB

    x = x_nhwc.astype(jnp.float32)
    wm3 = watermark.astype(jnp.float32).reshape(B, 1, NB)

    kernel = functools.partial(_fused_encoder_decoder_kernel,
                               scaling_i=scaling_i, scaling_w=scaling_w,
                               mxu_dtype=mxu_dtype)

    def full(shape):
        # whole-array block, same block every grid step (weights / biases)
        return pl.BlockSpec(shape, lambda b: (0,) * len(shape))

    o_wm, o_ex = pl.pallas_call(
        kernel,
        grid=(B,),  # one batch element per step; "parallel" -> split across v7x cores
        out_shape=(jax.ShapeDtypeStruct((B, H, W, C), jnp.float32),
                   jax.ShapeDtypeStruct((B, 1, NB_PAD), jnp.float32)),
        in_specs=[
            pl.BlockSpec((1, H, W, C), lambda b: (b, 0, 0, 0)),
            pl.BlockSpec((1, 1, NB), lambda b: (b, 0, 0)),
            full(prepared["w_e1"].shape),
            full(prepared["b_e1"].shape),
            full(prepared["w_e2"].shape),
            full(prepared["b_e2"].shape),
            full(prepared["w_d1"].shape),
            full(prepared["b_d1"].shape),
            full(prepared["w_fc"].shape),
            full(prepared["b_fc"].shape),
        ],
        out_specs=(pl.BlockSpec((1, H, W, C), lambda b: (b, 0, 0, 0)),
                   pl.BlockSpec((1, 1, NB_PAD), lambda b: (b, 0, 0))),
        scratch_shapes=[
            pltpu.VMEM((1, H + 2, W + 2, CIN1), jnp.float32),  # concat halo
            pltpu.VMEM((1, H + 2, W + 2, Hd), jnp.float32),    # hidden halo
            pltpu.VMEM((1, H + 2, W + 2, C), jnp.float32),     # watermarked halo
        ],
        compiler_params=pltpu.CompilerParams(
            dimension_semantics=("parallel",),
            # <0.5 MiB actually used per step; 32 MiB is safe on v5e/v6e (128 MiB)
            # and v7x (64 MiB) alike (review item 10).
            vmem_limit_bytes=32 * 1024 * 1024),
    )(x, wm3,
      prepared["w_e1"], prepared["b_e1"],
      prepared["w_e2"], prepared["b_e2"],
      prepared["w_d1"], prepared["b_d1"],
      prepared["w_fc"], prepared["b_fc"])

    extracted = o_ex.reshape(B, NB_PAD)[:, :NB]
    return o_wm, extracted, watermark


def encoder_decoder_forward(prepared, x_nchw, watermark=None, *, key=None,
                            num_bits=30, scaling_i=0.4, scaling_w=1.0,
                            mxu_dtype=jnp.bfloat16):
    """PyTorch-convention (NCHW) wrapper. Prefer `encoder_decoder_forward_nhwc` in
    production to avoid the NCHW<->NHWC layout round-trip outside the kernel."""
    if watermark is None:  # mirrors torch.randint(0, 2, (B, num_bits)).float()
        watermark = jax.random.randint(
            key, (x_nchw.shape[0], num_bits), 0, 2).astype(jnp.float32)
    x_nhwc = jnp.transpose(x_nchw, (0, 2, 3, 1))
    wmk_nhwc, extracted, wm = encoder_decoder_forward_nhwc(
        prepared, x_nhwc, watermark,
        scaling_i=scaling_i, scaling_w=scaling_w, mxu_dtype=mxu_dtype)
    return jnp.transpose(wmk_nhwc, (0, 3, 1, 2)), extracted, wm


# ------------------------------ pure-JAX reference --------------------------- #

def _reference_forward(params, x_nchw, wm, *, scaling_i, scaling_w):
    hi = jax.lax.Precision.HIGHEST
    x = jnp.transpose(x_nchw, (0, 2, 3, 1))
    B, H, W, C = x.shape
    nb = wm.shape[-1]

    def conv3x3(inp, w, b):
        pad = jnp.pad(inp, ((0, 0), (1, 1), (1, 1), (0, 0)))
        acc = jnp.zeros((B, H, W, w.shape[-1]), jnp.float32) + b.reshape(1, 1, 1, -1)
        for dy in range(3):
            for dx in range(3):
                acc = acc + jnp.einsum('bhwc,cf->bhwf',
                                       pad[:, dy:dy + H, dx:dx + W, :], w[dy, dx],
                                       precision=hi)
        return acc

    wm_map = jnp.broadcast_to(wm[:, None, None, :], (B, H, W, nb))
    xcat = jnp.concatenate([x, wm_map], axis=-1)
    h1 = jnp.maximum(conv3x3(xcat, params["w_e1"], params["b_e1"]), 0.0)
    enc = conv3x3(h1, params["w_e2"], params["b_e2"])
    watermarked = x * scaling_i + enc * scaling_w
    d1 = jnp.maximum(conv3x3(watermarked, params["w_d1"], params["b_d1"]), 0.0)
    pooled = jnp.mean(d1, axis=(1, 2))
    extracted = jnp.dot(pooled, params["w_fc"], precision=hi) + params["b_fc"]
    return jnp.transpose(watermarked, (0, 3, 1, 2)), extracted


# ----------------------------------- main ------------------------------------ #

if __name__ == "__main__":
    B, C, H, W = 2, 4, 16, 16
    HIDDEN, NUM_BITS = 32, 30
    SCALING_I, SCALING_W = 0.4, 1.0

    root = jax.random.PRNGKey(0)
    k_param, k_x, k_wm = jax.random.split(root, 3)

    params = init_params(k_param, img_channels=C, hidden=HIDDEN, num_bits=NUM_BITS)
    prepared = prepare_params(params)  # one-time weight prep (outside jit)

    x = jax.random.normal(k_x, (B, C, H, W), jnp.float32)
    # watermark: random 0/1 bits as float, same semantics as torch.randint(0,2,...).float()
    watermark = jax.random.randint(k_wm, (B, NUM_BITS), 0, 2).astype(jnp.float32)

    fwd = jax.jit(functools.partial(encoder_decoder_forward,
                                    scaling_i=SCALING_I, scaling_w=SCALING_W))
    watermarked, extracted, wm_out = fwd(prepared, x, watermark)
    jax.block_until_ready((watermarked, extracted, wm_out))

    assert watermarked.shape == (B, C, H, W)
    assert extracted.shape == (B, NUM_BITS)
    assert wm_out.shape == (B, NUM_BITS)

    # numerical check vs. pure-JAX f32 reference (kernel uses bf16 on the MXU)
    ref_wm, ref_ex = _reference_forward(params, x, watermark,
                                        scaling_i=SCALING_I, scaling_w=SCALING_W)
    assert jnp.allclose(watermarked, ref_wm, atol=2e-2, rtol=2e-2)
    assert jnp.allclose(extracted, ref_ex, atol=2e-2, rtol=2e-2)

    print("KERNEL_OK")
</pallas_src>

<mosaic_0001>
module attributes {stable_mosaic.version = 11 : i64} {
  func.func @_fused_encoder_decoder_kernel(%arg0: i32, %arg1: memref<1x16x16x4xf32, #tpu.memory_space<vmem>>, %arg2: memref<1x1x30xf32, #tpu.memory_space<vmem>>, %arg3: memref<306x32xbf16, #tpu.memory_space<vmem>>, %arg4: memref<1x32xf32, #tpu.memory_space<vmem>>, %arg5: memref<288x4xbf16, #tpu.memory_space<vmem>>, %arg6: memref<1x4xf32, #tpu.memory_space<vmem>>, %arg7: memref<36x32xbf16, #tpu.memory_space<vmem>>, %arg8: memref<1x32xf32, #tpu.memory_space<vmem>>, %arg9: memref<32x128xf32, #tpu.memory_space<vmem>>, %arg10: memref<1x128xf32, #tpu.memory_space<vmem>>, %arg11: memref<1x16x16x4xf32, #tpu.memory_space<vmem>>, %arg12: memref<1x1x128xf32, #tpu.memory_space<vmem>>, %arg13: memref<1x18x18x34xf32, #tpu.memory_space<vmem>>, %arg14: memref<1x18x18x32xf32, #tpu.memory_space<vmem>>, %arg15: memref<1x18x18x4xf32, #tpu.memory_space<vmem>>) attributes {dimension_semantics = [#tpu.dimension_semantics<parallel>], iteration_bounds = array<i64: 2>, scalar_prefetch = 0 : i64, scratch_operands = 3 : i64, tpu.core_type = #tpu.core_type<tc>, window_params = [{transform_indices = @transform_0, window_bounds = array<i64: 1, 16, 16, 4>}, {transform_indices = @transform_1, window_bounds = array<i64: 1, 1, 30>}, {pipeline_mode = #tpu.pipeline_mode<synchronous>, transform_indices = @transform_2, window_bounds = array<i64: 306, 32>}, {pipeline_mode = #tpu.pipeline_mode<synchronous>, transform_indices = @transform_3, window_bounds = array<i64: 1, 32>}, {pipeline_mode = #tpu.pipeline_mode<synchronous>, transform_indices = @transform_4, window_bounds = array<i64: 288, 4>}, {pipeline_mode = #tpu.pipeline_mode<synchronous>, transform_indices = @transform_5, window_bounds = array<i64: 1, 4>}, {pipeline_mode = #tpu.pipeline_mode<synchronous>, transform_indices = @transform_6, window_bounds = array<i64: 36, 32>}, {pipeline_mode = #tpu.pipeline_mode<synchronous>, transform_indices = @transform_7, window_bounds = array<i64: 1, 32>}, {pipeline_mode = #tpu.pipeline_mode<synchronous>, transform_indices = @transform_8, window_bounds = array<i64: 32, 128>}, {pipeline_mode = #tpu.pipeline_mode<synchronous>, transform_indices = @transform_9, window_bounds = array<i64: 1, 128>}, {transform_indices = @transform_10, window_bounds = array<i64: 1, 16, 16, 4>}, {transform_indices = @transform_11, window_bounds = array<i64: 1, 1, 128>}]} {
    %cst = arith.constant 0.000000e+00 : f32
    %0 = vector.broadcast %cst : f32 to vector<1x1x18x34xf32>
    %c0 = arith.constant 0 : index
    %c0_0 = arith.constant 0 : index
    %c0_1 = arith.constant 0 : index
    %c0_2 = arith.constant 0 : index
    %1 = vector.load %arg13[%c0, %c0_0, %c0_1, %c0_2] : memref<1x18x18x34xf32, #tpu.memory_space<vmem>>, vector<1x1x18x34xf32>
    tpu.vector_store %arg13[%c0, %c0_0, %c0_1, %c0_2], %0 {strides = array<i32>} : memref<1x18x18x34xf32, #tpu.memory_space<vmem>>, vector<1x1x18x34xf32>,
    %cst_3 = arith.constant 0.000000e+00 : f32
    %2 = vector.broadcast %cst_3 : f32 to vector<1x1x18x34xf32>
    %c0_4 = arith.constant 0 : index
    %c17 = arith.constant 17 : index
    %c0_5 = arith.constant 0 : index
    %c0_6 = arith.constant 0 : index
    %3 = vector.load %arg13[%c0_4, %c17, %c0_5, %c0_6] : memref<1x18x18x34xf32, #tpu.memory_space<vmem>>, vector<1x1x18x34xf32>
    tpu.vector_store %arg13[%c0_4, %c17, %c0_5, %c0_6], %2 {strides = array<i32>} : memref<1x18x18x34xf32, #tpu.memory_space<vmem>>, vector<1x1x18x34xf32>,
    %cst_7 = arith.constant 0.000000e+00 : f32
    %4 = vector.broadcast %cst_7 : f32 to vector<1x18x1x34xf32>
    %c0_8 = arith.constant 0 : index
    %c0_9 = arith.constant 0 : index
    %c0_10 = arith.constant 0 : index
    %c0_11 = arith.constant 0 : index
    %5 = vector.load %arg13[%c0_8, %c0_9, %c0_10, %c0_11] : memref<1x18x18x34xf32, #tpu.memory_space<vmem>>, vector<1x18x1x34xf32>
    tpu.vector_store %arg13[%c0_8, %c0_9, %c0_10, %c0_11], %4 {strides = array<i32>} : memref<1x18x18x34xf32, #tpu.memory_space<vmem>>, vector<1x18x1x34xf32>,
    %cst_12 = arith.constant 0.000000e+00 : f32
    %6 = vector.broadcast %cst_12 : f32 to vector<1x18x1x34xf32>
    %c0_13 = arith.constant 0 : index
    %c0_14 = arith.constant 0 : index
    %c17_15 = arith.constant 17 : index
    %c0_16 = arith.constant 0 : index
    %7 = vector.load %arg13[%c0_13, %c0_14, %c17_15, %c0_16] : memref<1x18x18x34xf32, #tpu.memory_space<vmem>>, vector<1x18x1x34xf32>
    tpu.vector_store %arg13[%c0_13, %c0_14, %c17_15, %c0_16], %6 {strides = array<i32>} : memref<1x18x18x34xf32, #tpu.memory_space<vmem>>, vector<1x18x1x34xf32>,
    %c0_17 = arith.constant 0 : index
    %c0_18 = arith.constant 0 : index
    %c0_19 = arith.constant 0 : index
    %8 = vector.load %arg2[%c0_17, %c0_18, %c0_19] : memref<1x1x30xf32, #tpu.memory_space<vmem>>, vector<1x1x30xf32>
    %9 = vector.shape_cast %8 : vector<1x1x30xf32> to vector<1x1x1x30xf32>
    %10 = vector.shape_cast %9 : vector<1x1x1x30xf32> to vector<1x1x1x30xf32>
    %11 = vector.broadcast %10 : vector<1x1x1x30xf32> to vector<1x16x16x30xf32>
    %c0_20 = arith.constant 0 : index
    %c0_21 = arith.constant 0 : index
    %c0_22 = arith.constant 0 : index
    %c0_23 = arith.constant 0 : index
    %12 = vector.load %arg1[%c0_20, %c0_21, %c0_22, %c0_23] : memref<1x16x16x4xf32, #tpu.memory_space<vmem>>, vector<1x16x16x4xf32>
    %13 = tpu.concatenate %12, %11 in 3 : vector<1x16x16x4xf32>, vector<1x16x16x30xf32> -> vector<1x16x16x34xf32>
    %c0_24 = arith.constant 0 : index
    %c1 = arith.constant 1 : index
    %c1_25 = arith.constant 1 : index
    %c0_26 = arith.constant 0 : index
    %14 = vector.load %arg13[%c0_24, %c1, %c1_25, %c0_26] : memref<1x18x18x34xf32, #tpu.memory_space<vmem>>, vector<1x16x16x34xf32>
    tpu.vector_store %arg13[%c0_24, %c1, %c1_25, %c0_26], %13 {strides = array<i32>} : memref<1x18x18x34xf32, #tpu.memory_space<vmem>>, vector<1x16x16x34xf32>,
    %c0_27 = arith.constant 0 : index
    %c0_28 = arith.constant 0 : index
    %c0_29 = arith.constant 0 : index
    %c0_30 = arith.constant 0 : index
    %15 = vector.load %arg13[%c0_27, %c0_28, %c0_29, %c0_30] : memref<1x18x18x34xf32, #tpu.memory_space<vmem>>, vector<1x16x16x34xf32>
    %16 = vector.shape_cast %15 : vector<1x16x16x34xf32> to vector<256x34xf32>
    %c0_31 = arith.constant 0 : index
    %c0_32 = arith.constant 0 : index
    %c1_33 = arith.constant 1 : index
    %c0_34 = arith.constant 0 : index
    %17 = vector.load %arg13[%c0_31, %c0_32, %c1_33, %c0_34] : memref<1x18x18x34xf32, #tpu.memory_space<vmem>>, vector<1x16x16x34xf32>
    %18 = vector.shape_cast %17 : vector<1x16x16x34xf32> to vector<256x34xf32>
    %c0_35 = arith.constant 0 : index
    %c0_36 = arith.constant 0 : index
    %c2 = arith.constant 2 : index
    %c0_37 = arith.constant 0 : index
    %19 = vector.load %arg13[%c0_35, %c0_36, %c2, %c0_37] : memref<1x18x18x34xf32, #tpu.memory_space<vmem>>, vector<1x16x16x34xf32>
    %20 = vector.shape_cast %19 : vector<1x16x16x34xf32> to vector<256x34xf32>
    %c0_38 = arith.constant 0 : index
    %c1_39 = arith.constant 1 : index
    %c0_40 = arith.constant 0 : index
    %c0_41 = arith.constant 0 : index
    %21 = vector.load %arg13[%c0_38, %c1_39, %c0_40, %c0_41] : memref<1x18x18x34xf32, #tpu.memory_space<vmem>>, vector<1x16x16x34xf32>
    %22 = vector.shape_cast %21 : vector<1x16x16x34xf32> to vector<256x34xf32>
    %c0_42 = arith.constant 0 : index
    %c1_43 = arith.constant 1 : index
    %c1_44 = arith.constant 1 : index
    %c0_45 = arith.constant 0 : index
    %23 = vector.load %arg13[%c0_42, %c1_43, %c1_44, %c0_45] : memref<1x18x18x34xf32, #tpu.memory_space<vmem>>, vector<1x16x16x34xf32>
    %24 = vector.shape_cast %23 : vector<1x16x16x34xf32> to vector<256x34xf32>
    %c0_46 = arith.constant 0 : index
    %c1_47 = arith.constant 1 : index
    %c2_48 = arith.constant 2 : index
    %c0_49 = arith.constant 0 : index
    %25 = vector.load %arg13[%c0_46, %c1_47, %c2_48, %c0_49] : memref<1x18x18x34xf32, #tpu.memory_space<vmem>>, vector<1x16x16x34xf32>
    %26 = vector.shape_cast %25 : vector<1x16x16x34xf32> to vector<256x34xf32>
    %c0_50 = arith.constant 0 : index
    %c2_51 = arith.constant 2 : index
    %c0_52 = arith.constant 0 : index
    %c0_53 = arith.constant 0 : index
    %27 = vector.load %arg13[%c0_50, %c2_51, %c0_52, %c0_53] : memref<1x18x18x34xf32, #tpu.memory_space<vmem>>, vector<1x16x16x34xf32>
    %28 = vector.shape_cast %27 : vector<1x16x16x34xf32> to vector<256x34xf32>
    %c0_54 = arith.constant 0 : index
    %c2_55 = arith.constant 2 : index
    %c1_56 = arith.constant 1 : index
    %c0_57 = arith.constant 0 : index
    %29 = vector.load %arg13[%c0_54, %c2_55, %c1_56, %c0_57] : memref<1x18x18x34xf32, #tpu.memory_space<vmem>>, vector<1x16x16x34xf32>
    %30 = vector.shape_cast %29 : vector<1x16x16x34xf32> to vector<256x34xf32>
    %c0_58 = arith.constant 0 : index
    %c2_59 = arith.constant 2 : index
    %c2_60 = arith.constant 2 : index
    %c0_61 = arith.constant 0 : index
    %31 = vector.load %arg13[%c0_58, %c2_59, %c2_60, %c0_61] : memref<1x18x18x34xf32, #tpu.memory_space<vmem>>, vector<1x16x16x34xf32>
    %32 = vector.shape_cast %31 : vector<1x16x16x34xf32> to vector<256x34xf32>
    %33 = tpu.concatenate %16, %18, %20, %22, %24, %26, %28, %30, %32 in 1 : vector<256x34xf32>, vector<256x34xf32>, vector<256x34xf32>, vector<256x34xf32>, vector<256x34xf32>, vector<256x34xf32>, vector<256x34xf32>, vector<256x34xf32>, vector<256x34xf32> -> vector<256x306xf32>
    %34 = arith.truncf %33 : vector<256x306xf32> to vector<256x306xbf16>
    %c0_62 = arith.constant 0 : index
    %c0_63 = arith.constant 0 : index
    %35 = vector.load %arg3[%c0_62, %c0_63] : memref<306x32xbf16, #tpu.memory_space<vmem>>, vector<306x32xbf16>
    %cst_64 = arith.constant dense<0.000000e+00> : vector<256x32xf32>
    %36 = tpu.matmul %34, %35, %cst_64 {dimension_numbers = #tpu.dot_dimension_numbers<[1], [0], [0], [1], [0, 0, 1, 1], [], []>} : vector<256x306xbf16>, vector<306x32xbf16>, vector<256x32xf32> -> vector<256x32xf32>
    %c0_65 = arith.constant 0 : index
    %c0_66 = arith.constant 0 : index
    %37 = vector.load %arg4[%c0_65, %c0_66] : memref<1x32xf32, #tpu.memory_space<vmem>>, vector<1x32xf32>
    %38 = vector.broadcast %37 : vector<1x32xf32> to vector<256x32xf32>
    %39 = arith.addf %36, %38 : vector<256x32xf32>
    %cst_67 = arith.constant 0.000000e+00 : f32
    %40 = vector.broadcast %cst_67 : f32 to vector<256x32xf32>
    %41 = arith.maximumf %39, %40 : vector<256x32xf32>
    %cst_68 = arith.constant 0.000000e+00 : f32
    %42 = vector.broadcast %cst_68 : f32 to vector<1x1x18x32xf32>
    %c0_69 = arith.constant 0 : index
    %c0_70 = arith.constant 0 : index
    %c0_71 = arith.constant 0 : index
    %c0_72 = arith.constant 0 : index
    %43 = vector.load %arg14[%c0_69, %c0_70, %c0_71, %c0_72] : memref<1x18x18x32xf32, #tpu.memory_space<vmem>>, vector<1x1x18x32xf32>
    tpu.vector_store %arg14[%c0_69, %c0_70, %c0_71, %c0_72], %42 {strides = array<i32>} : memref<1x18x18x32xf32, #tpu.memory_space<vmem>>, vector<1x1x18x32xf32>,
    %cst_73 = arith.constant 0.000000e+00 : f32
    %44 = vector.broadcast %cst_73 : f32 to vector<1x1x18x32xf32>
    %c0_74 = arith.constant 0 : index
    %c17_75 = arith.constant 17 : index
    %c0_76 = arith.constant 0 : index
    %c0_77 = arith.constant 0 : index
    %45 = vector.load %arg14[%c0_74, %c17_75, %c0_76, %c0_77] : memref<1x18x18x32xf32, #tpu.memory_space<vmem>>, vector<1x1x18x32xf32>
    tpu.vector_store %arg14[%c0_74, %c17_75, %c0_76, %c0_77], %44 {strides = array<i32>} : memref<1x18x18x32xf32, #tpu.memory_space<vmem>>, vector<1x1x18x32xf32>,
    %cst_78 = arith.constant 0.000000e+00 : f32
    %46 = vector.broadcast %cst_78 : f32 to vector<1x18x1x32xf32>
    %c0_79 = arith.constant 0 : index
    %c0_80 = arith.constant 0 : index
    %c0_81 = arith.constant 0 : index
    %c0_82 = arith.constant 0 : index
    %47 = vector.load %arg14[%c0_79, %c0_80, %c0_81, %c0_82] : memref<1x18x18x32xf32, #tpu.memory_space<vmem>>, vector<1x18x1x32xf32>
    tpu.vector_store %arg14[%c0_79, %c0_80, %c0_81, %c0_82], %46 {strides = array<i32>} : memref<1x18x18x32xf32, #tpu.memory_space<vmem>>, vector<1x18x1x32xf32>,
    %cst_83 = arith.constant 0.000000e+00 : f32
    %48 = vector.broadcast %cst_83 : f32 to vector<1x18x1x32xf32>
    %c0_84 = arith.constant 0 : index
    %c0_85 = arith.constant 0 : index
    %c17_86 = arith.constant 17 : index
    %c0_87 = arith.constant 0 : index
    %49 = vector.load %arg14[%c0_84, %c0_85, %c17_86, %c0_87] : memref<1x18x18x32xf32, #tpu.memory_space<vmem>>, vector<1x18x1x32xf32>
    tpu.vector_store %arg14[%c0_84, %c0_85, %c17_86, %c0_87], %48 {strides = array<i32>} : memref<1x18x18x32xf32, #tpu.memory_space<vmem>>, vector<1x18x1x32xf32>,
    %50 = vector.shape_cast %41 : vector<256x32xf32> to vector<1x16x16x32xf32>
    %c0_88 = arith.constant 0 : index
    %c1_89 = arith.constant 1 : index
    %c1_90 = arith.constant 1 : index
    %c0_91 = arith.constant 0 : index
    %51 = vector.load %arg14[%c0_88, %c1_89, %c1_90, %c0_91] : memref<1x18x18x32xf32, #tpu.memory_space<vmem>>, vector<1x16x16x32xf32>
    tpu.vector_store %arg14[%c0_88, %c1_89, %c1_90, %c0_91], %50 {strides = array<i32>} : memref<1x18x18x32xf32, #tpu.memory_space<vmem>>, vector<1x16x16x32xf32>,
    %c0_92 = arith.constant 0 : index
    %c0_93 = arith.constant 0 : index
    %c0_94 = arith.constant 0 : index
    %c0_95 = arith.constant 0 : index
    %52 = vector.load %arg14[%c0_92, %c0_93, %c0_94, %c0_95] : memref<1x18x18x32xf32, #tpu.memory_space<vmem>>, vector<1x16x16x32xf32>
    %53 = vector.shape_cast %52 : vector<1x16x16x32xf32> to vector<256x32xf32>
    %c0_96 = arith.constant 0 : index
    %c0_97 = arith.constant 0 : index
    %c1_98 = arith.constant 1 : index
    %c0_99 = arith.constant 0 : index
    %54 = vector.load %arg14[%c0_96, %c0_97, %c1_98, %c0_99] : memref<1x18x18x32xf32, #tpu.memory_space<vmem>>, vector<1x16x16x32xf32>
    %55 = vector.shape_cast %54 : vector<1x16x16x32xf32> to vector<256x32xf32>
    %c0_100 = arith.constant 0 : index
    %c0_101 = arith.constant 0 : index
    %c2_102 = arith.constant 2 : index
    %c0_103 = arith.constant 0 : index
    %56 = vector.load %arg14[%c0_100, %c0_101, %c2_102, %c0_103] : memref<1x18x18x32xf32, #tpu.memory_space<vmem>>, vector<1x16x16x32xf32>
    %57 = vector.shape_cast %56 : vector<1x16x16x32xf32> to vector<256x32xf32>
    %c0_104 = arith.constant 0 : index
    %c1_105 = arith.constant 1 : index
    %c0_106 = arith.constant 0 : index
    %c0_107 = arith.constant 0 : index
    %58 = vector.load %arg14[%c0_104, %c1_105, %c0_106, %c0_107] : memref<1x18x18x32xf32, #tpu.memory_space<vmem>>, vector<1x16x16x32xf32>
    %59 = vector.shape_cast %58 : vector<1x16x16x32xf32> to vector<256x32xf32>
    %c0_108 = arith.constant 0 : index
    %c1_109 = arith.constant 1 : index
    %c1_110 = arith.constant 1 : index
    %c0_111 = arith.constant 0 : index
    %60 = vector.load %arg14[%c0_108, %c1_109, %c1_110, %c0_111] : memref<1x18x18x32xf32, #tpu.memory_space<vmem>>, vector<1x16x16x32xf32>
    %61 = vector.shape_cast %60 : vector<1x16x16x32xf32> to vector<256x32xf32>
    %c0_112 = arith.constant 0 : index
    %c1_113 = arith.constant 1 : index
    %c2_114 = arith.constant 2 : index
    %c0_115 = arith.constant 0 : index
    %62 = vector.load %arg14[%c0_112, %c1_113, %c2_114, %c0_115] : memref<1x18x18x32xf32, #tpu.memory_space<vmem>>, vector<1x16x16x32xf32>
    %63 = vector.shape_cast %62 : vector<1x16x16x32xf32> to vector<256x32xf32>
    %c0_116 = arith.constant 0 : index
    %c2_117 = arith.constant 2 : index
    %c0_118 = arith.constant 0 : index
    %c0_119 = arith.constant 0 : index
    %64 = vector.load %arg14[%c0_116, %c2_117, %c0_118, %c0_119] : memref<1x18x18x32xf32, #tpu.memory_space<vmem>>, vector<1x16x16x32xf32>
    %65 = vector.shape_cast %64 : vector<1x16x16x32xf32> to vector<256x32xf32>
    %c0_120 = arith.constant 0 : index
    %c2_121 = arith.constant 2 : index
    %c1_122 = arith.constant 1 : index
    %c0_123 = arith.constant 0 : index
    %66 = vector.load %arg14[%c0_120, %c2_121, %c1_122, %c0_123] : memref<1x18x18x32xf32, #tpu.memory_space<vmem>>, vector<1x16x16x32xf32>
    %67 = vector.shape_cast %66 : vector<1x16x16x32xf32> to vector<256x32xf32>
    %c0_124 = arith.constant 0 : index
    %c2_125 = arith.constant 2 : index
    %c2_126 = arith.constant 2 : index
    %c0_127 = arith.constant 0 : index
    %68 = vector.load %arg14[%c0_124, %c2_125, %c2_126, %c0_127] : memref<1x18x18x32xf32, #tpu.memory_space<vmem>>, vector<1x16x16x32xf32>
    %69 = vector.shape_cast %68 : vector<1x16x16x32xf32> to vector<256x32xf32>
    %70 = tpu.concatenate %53, %55, %57, %59, %61, %63, %65, %67, %69 in 1 : vector<256x32xf32>, vector<256x32xf32>, vector<256x32xf32>, vector<256x32xf32>, vector<256x32xf32>, vector<256x32xf32>, vector<256x32xf32>, vector<256x32xf32>, vector<256x32xf32> -> vector<256x288xf32>
    %71 = arith.truncf %70 : vector<256x288xf32> to vector<256x288xbf16>
    %c0_128 = arith.constant 0 : index
    %c0_129 = arith.constant 0 : index
    %72 = vector.load %arg5[%c0_128, %c0_129] : memref<288x4xbf16, #tpu.memory_space<vmem>>, vector<288x4xbf16>
    %cst_130 = arith.constant dense<0.000000e+00> : vector<256x4xf32>
    %73 = tpu.matmul %71, %72, %cst_130 {dimension_numbers = #tpu.dot_dimension_numbers<[1], [0], [0], [1], [0, 0, 1, 1], [], []>} : vector<256x288xbf16>, vector<288x4xbf16>, vector<256x4xf32> -> vector<256x4xf32>
    %c0_131 = arith.constant 0 : index
    %c0_132 = arith.constant 0 : index
    %74 = vector.load %arg6[%c0_131, %c0_132] : memref<1x4xf32, #tpu.memory_space<vmem>>, vector<1x4xf32>
    %75 = vector.broadcast %74 : vector<1x4xf32> to vector<256x4xf32>
    %76 = arith.addf %73, %75 : vector<256x4xf32>
    %c0_133 = arith.constant 0 : index
    %c0_134 = arith.constant 0 : index
    %c0_135 = arith.constant 0 : index
    %c0_136 = arith.constant 0 : index
    %77 = vector.load %arg1[%c0_133, %c0_134, %c0_135, %c0_136] : memref<1x16x16x4xf32, #tpu.memory_space<vmem>>, vector<1x16x16x4xf32>
    %78 = vector.shape_cast %77 : vector<1x16x16x4xf32> to vector<256x4xf32>
    %cst_137 = arith.constant 4.000000e-01 : f32
    %79 = vector.broadcast %cst_137 : f32 to vector<256x4xf32>
    %80 = arith.mulf %78, %79 : vector<256x4xf32>
    %cst_138 = arith.constant 1.000000e+00 : f32
    %81 = vector.broadcast %cst_138 : f32 to vector<256x4xf32>
    %82 = arith.mulf %76, %81 : vector<256x4xf32>
    %83 = arith.addf %80, %82 : vector<256x4xf32>
    %84 = vector.shape_cast %83 : vector<256x4xf32> to vector<1x16x16x4xf32>
    %c0_139 = arith.constant 0 : index
    %c0_140 = arith.constant 0 : index
    %c0_141 = arith.constant 0 : index
    %c0_142 = arith.constant 0 : index
    %85 = vector.load %arg11[%c0_139, %c0_140, %c0_141, %c0_142] : memref<1x16x16x4xf32, #tpu.memory_space<vmem>>, vector<1x16x16x4xf32>
    tpu.vector_store %arg11[%c0_139, %c0_140, %c0_141, %c0_142], %84 {strides = array<i32>} : memref<1x16x16x4xf32, #tpu.memory_space<vmem>>, vector<1x16x16x4xf32>,
    %cst_143 = arith.constant 0.000000e+00 : f32
    %86 = vector.broadcast %cst_143 : f32 to vector<1x1x18x4xf32>
    %c0_144 = arith.constant 0 : index
    %c0_145 = arith.constant 0 : index
    %c0_146 = arith.constant 0 : index
    %c0_147 = arith.constant 0 : index
    %87 = vector.load %arg15[%c0_144, %c0_145, %c0_146, %c0_147] : memref<1x18x18x4xf32, #tpu.memory_space<vmem>>, vector<1x1x18x4xf32>
    tpu.vector_store %arg15[%c0_144, %c0_145, %c0_146, %c0_147], %86 {strides = array<i32>} : memref<1x18x18x4xf32, #tpu.memory_space<vmem>>, vector<1x1x18x4xf32>,
    %cst_148 = arith.constant 0.000000e+00 : f32
    %88 = vector.broadcast %cst_148 : f32 to vector<1x1x18x4xf32>
    %c0_149 = arith.constant 0 : index
    %c17_150 = arith.constant 17 : index
    %c0_151 = arith.constant 0 : index
    %c0_152 = arith.constant 0 : index
    %89 = vector.load %arg15[%c0_149, %c17_150, %c0_151, %c0_152] : memref<1x18x18x4xf32, #tpu.memory_space<vmem>>, vector<1x1x18x4xf32>
    tpu.vector_store %arg15[%c0_149, %c17_150, %c0_151, %c0_152], %88 {strides = array<i32>} : memref<1x18x18x4xf32, #tpu.memory_space<vmem>>, vector<1x1x18x4xf32>,
    %cst_153 = arith.constant 0.000000e+00 : f32
    %90 = vector.broadcast %cst_153 : f32 to vector<1x18x1x4xf32>
    %c0_154 = arith.constant 0 : index
    %c0_155 = arith.constant 0 : index
    %c0_156 = arith.constant 0 : index
    %c0_157 = arith.constant 0 : index
    %91 = vector.load %arg15[%c0_154, %c0_155, %c0_156, %c0_157] : memref<1x18x18x4xf32, #tpu.memory_space<vmem>>, vector<1x18x1x4xf32>
    tpu.vector_store %arg15[%c0_154, %c0_155, %c0_156, %c0_157], %90 {strides = array<i32>} : memref<1x18x18x4xf32, #tpu.memory_space<vmem>>, vector<1x18x1x4xf32>,
    %cst_158 = arith.constant 0.000000e+00 : f32
    %92 = vector.broadcast %cst_158 : f32 to vector<1x18x1x4xf32>
    %c0_159 = arith.constant 0 : index
    %c0_160 = arith.constant 0 : index
    %c17_161 = arith.constant 17 : index
    %c0_162 = arith.constant 0 : index
    %93 = vector.load %arg15[%c0_159, %c0_160, %c17_161, %c0_162] : memref<1x18x18x4xf32, #tpu.memory_space<vmem>>, vector<1x18x1x4xf32>
    tpu.vector_store %arg15[%c0_159, %c0_160, %c17_161, %c0_162], %92 {strides = array<i32>} : memref<1x18x18x4xf32, #tpu.memory_space<vmem>>, vector<1x18x1x4xf32>,
    %c0_163 = arith.constant 0 : index
    %c1_164 = arith.constant 1 : index
    %c1_165 = arith.constant 1 : index
    %c0_166 = arith.constant 0 : index
    %94 = vector.load %arg15[%c0_163, %c1_164, %c1_165, %c0_166] : memref<1x18x18x4xf32, #tpu.memory_space<vmem>>, vector<1x16x16x4xf32>
    tpu.vector_store %arg15[%c0_163, %c1_164, %c1_165, %c0_166], %84 {strides = array<i32>} : memref<1x18x18x4xf32, #tpu.memory_space<vmem>>, vector<1x16x16x4xf32>,
    %c0_167 = arith.constant 0 : index
    %c0_168 = arith.constant 0 : index
    %c0_169 = arith.constant 0 : index
    %c0_170 = arith.constant 0 : index
    %95 = vector.load %arg15[%c0_167, %c0_168, %c0_169, %c0_170] : memref<1x18x18x4xf32, #tpu.memory_space<vmem>>, vector<1x16x16x4xf32>
    %96 = vector.shape_cast %95 : vector<1x16x16x4xf32> to vector<256x4xf32>
    %c0_171 = arith.constant 0 : index
    %c0_172 = arith.constant 0 : index
    %c1_173 = arith.constant 1 : index
    %c0_174 = arith.constant 0 : index
    %97 = vector.load %arg15[%c0_171, %c0_172, %c1_173, %c0_174] : memref<1x18x18x4xf32, #tpu.memory_space<vmem>>, vector<1x16x16x4xf32>
    %98 = vector.shape_cast %97 : vector<1x16x16x4xf32> to vector<256x4xf32>
    %c0_175 = arith.constant 0 : index
    %c0_176 = arith.constant 0 : index
    %c2_177 = arith.constant 2 : index
    %c0_178 = arith.constant 0 : index
    %99 = vector.load %arg15[%c0_175, %c0_176, %c2_177, %c0_178] : memref<1x18x18x4xf32, #tpu.memory_space<vmem>>, vector<1x16x16x4xf32>
    %100 = vector.shape_cast %99 : vector<1x16x16x4xf32> to vector<256x4xf32>
    %c0_179 = arith.constant 0 : index
    %c1_180 = arith.constant 1 : index
    %c0_181 = arith.constant 0 : index
    %c0_182 = arith.constant 0 : index
    %101 = vector.load %arg15[%c0_179, %c1_180, %c0_181, %c0_182] : memref<1x18x18x4xf32, #tpu.memory_space<vmem>>, vector<1x16x16x4xf32>
    %102 = vector.shape_cast %101 : vector<1x16x16x4xf32> to vector<256x4xf32>
    %c0_183 = arith.constant 0 : index
    %c1_184 = arith.constant 1 : index
    %c1_185 = arith.constant 1 : index
    %c0_186 = arith.constant 0 : index
    %103 = vector.load %arg15[%c0_183, %c1_184, %c1_185, %c0_186] : memref<1x18x18x4xf32, #tpu.memory_space<vmem>>, vector<1x16x16x4xf32>
    %104 = vector.shape_cast %103 : vector<1x16x16x4xf32> to vector<256x4xf32>
    %c0_187 = arith.constant 0 : index
    %c1_188 = arith.constant 1 : index
    %c2_189 = arith.constant 2 : index
    %c0_190 = arith.constant 0 : index
    %105 = vector.load %arg15[%c0_187, %c1_188, %c2_189, %c0_190] : memref<1x18x18x4xf32, #tpu.memory_space<vmem>>, vector<1x16x16x4xf32>
    %106 = vector.shape_cast %105 : vector<1x16x16x4xf32> to vector<256x4xf32>
    %c0_191 = arith.constant 0 : index
    %c2_192 = arith.constant 2 : index
    %c0_193 = arith.constant 0 : index
    %c0_194 = arith.constant 0 : index
    %107 = vector.load %arg15[%c0_191, %c2_192, %c0_193, %c0_194] : memref<1x18x18x4xf32, #tpu.memory_space<vmem>>, vector<1x16x16x4xf32>
    %108 = vector.shape_cast %107 : vector<1x16x16x4xf32> to vector<256x4xf32>
    %c0_195 = arith.constant 0 : index
    %c2_196 = arith.constant 2 : index
    %c1_197 = arith.constant 1 : index
    %c0_198 = arith.constant 0 : index
    %109 = vector.load %arg15[%c0_195, %c2_196, %c1_197, %c0_198] : memref<1x18x18x4xf32, #tpu.memory_space<vmem>>, vector<1x16x16x4xf32>
    %110 = vector.shape_cast %109 : vector<1x16x16x4xf32> to vector<256x4xf32>
    %c0_199 = arith.constant 0 : index
    %c2_200 = arith.constant 2 : index
    %c2_201 = arith.constant 2 : index
    %c0_202 = arith.constant 0 : index
    %111 = vector.load %arg15[%c0_199, %c2_200, %c2_201, %c0_202] : memref<1x18x18x4xf32, #tpu.memory_space<vmem>>, vector<1x16x16x4xf32>
    %112 = vector.shape_cast %111 : vector<1x16x16x4xf32> to vector<256x4xf32>
    %113 = tpu.concatenate %96, %98, %100, %102, %104, %106, %108, %110, %112 in 1 : vector<256x4xf32>, vector<256x4xf32>, vector<256x4xf32>, vector<256x4xf32>, vector<256x4xf32>, vector<256x4xf32>, vector<256x4xf32>, vector<256x4xf32>, vector<256x4xf32> -> vector<256x36xf32>
    %114 = arith.truncf %113 : vector<256x36xf32> to vector<256x36xbf16>
    %c0_203 = arith.constant 0 : index
    %c0_204 = arith.constant 0 : index
    %115 = vector.load %arg7[%c0_203, %c0_204] : memref<36x32xbf16, #tpu.memory_space<vmem>>, vector<36x32xbf16>
    %cst_205 = arith.constant dense<0.000000e+00> : vector<256x32xf32>
    %116 = tpu.matmul %114, %115, %cst_205 {dimension_numbers = #tpu.dot_dimension_numbers<[1], [0], [0], [1], [0, 0, 1, 1], [], []>} : vector<256x36xbf16>, vector<36x32xbf16>, vector<256x32xf32> -> vector<256x32xf32>
    %c0_206 = arith.constant 0 : index
    %c0_207 = arith.constant 0 : index
    %117 = vector.load %arg8[%c0_206, %c0_207] : memref<1x32xf32, #tpu.memory_space<vmem>>, vector<1x32xf32>
    %118 = vector.broadcast %117 : vector<1x32xf32> to vector<256x32xf32>
    %119 = arith.addf %116, %118 : vector<256x32xf32>
    %cst_208 = arith.constant 0.000000e+00 : f32
    %120 = vector.broadcast %cst_208 : f32 to vector<256x32xf32>
    %121 = arith.maximumf %119, %120 : vector<256x32xf32>
    %122 = vector.shape_cast %121 : vector<256x32xf32> to vector<1x256x32xf32>
    %cst_209 = arith.constant dense<0.000000e+00> : vector<1x32xf32>
    %123 = vector.multi_reduction <add>, %122, %cst_209 [1] : vector<1x256x32xf32> to vector<1x32xf32>
    %cst_210 = arith.constant 2.560000e+02 : f32
    %124 = vector.broadcast %cst_210 : f32 to vector<1x32xf32>
    %125 = arith.divf %123, %124 : vector<1x32xf32>
    %c0_211 = arith.constant 0 : index
    %c0_212 = arith.constant 0 : index
    %126 = vector.load %arg9[%c0_211, %c0_212] : memref<32x128xf32, #tpu.memory_space<vmem>>, vector<32x128xf32>
    %cst_213 = arith.constant dense<0.000000e+00> : vector<1x128xf32>
    %127 = tpu.matmul %125, %126, %cst_213 {dimension_numbers = #tpu.dot_dimension_numbers<[1], [0], [0], [1], [0, 0, 1, 1], [], []>} : vector<1x32xf32>, vector<32x128xf32>, vector<1x128xf32> -> vector<1x128xf32>
    %c0_214 = arith.constant 0 : index
    %c0_215 = arith.constant 0 : index
    %128 = vector.load %arg10[%c0_214, %c0_215] : memref<1x128xf32, #tpu.memory_space<vmem>>, vector<1x128xf32>
    %129 = arith.addf %127, %128 : vector<1x128xf32>
    %130 = vector.shape_cast %129 : vector<1x128xf32> to vector<1x1x128xf32>
    %c0_216 = arith.constant 0 : index
    %c0_217 = arith.constant 0 : index
    %c0_218 = arith.constant 0 : index
    %131 = vector.load %arg12[%c0_216, %c0_217, %c0_218] : memref<1x1x128xf32, #tpu.memory_space<vmem>>, vector<1x1x128xf32>
    tpu.vector_store %arg12[%c0_216, %c0_217, %c0_218], %130 {strides = array<i32>} : memref<1x1x128xf32, #tpu.memory_space<vmem>>, vector<1x1x128xf32>,
    return
  }
  func.func @transform_0(%arg0: i32) -> (i32, i32, i32, i32) {
    %c0_i32 = arith.constant 0 : i32
    %c0_i32_0 = arith.constant 0 : i32
    %c0_i32_1 = arith.constant 0 : i32
    %c0_i32_2 = arith.constant 0 : i32
    return %arg0, %c0_i32, %c0_i32_0, %c0_i32_1 : i32, i32, i32, i32
  }
  func.func @transform_1(%arg0: i32) -> (i32, i32, i32) {
    %c0_i32 = arith.constant 0 : i32
    %c0_i32_0 = arith.constant 0 : i32
    %c0_i32_1 = arith.constant 0 : i32
    return %arg0, %c0_i32, %c0_i32_0 : i32, i32, i32
  }
  func.func @transform_2(%arg0: i32) -> (i32, i32) {
    %c0_i32 = arith.constant 0 : i32
    %c0_i32_0 = arith.constant 0 : i32
    %c0_i32_1 = arith.constant 0 : i32
    return %c0_i32, %c0_i32_0 : i32, i32
  }
  func.func @transform_3(%arg0: i32) -> (i32, i32) {
    %c0_i32 = arith.constant 0 : i32
    %c0_i32_0 = arith.constant 0 : i32
    %c0_i32_1 = arith.constant 0 : i32
    return %c0_i32, %c0_i32_0 : i32, i32
  }
  func.func @transform_4(%arg0: i32) -> (i32, i32) {
    %c0_i32 = arith.constant 0 : i32
    %c0_i32_0 = arith.constant 0 : i32
    %c0_i32_1 = arith.constant 0 : i32
    return %c0_i32, %c0_i32_0 : i32, i32
  }
  func.func @transform_5(%arg0: i32) -> (i32, i32) {
    %c0_i32 = arith.constant 0 : i32
    %c0_i32_0 = arith.constant 0 : i32
    %c0_i32_1 = arith.constant 0 : i32
    return %c0_i32, %c0_i32_0 : i32, i32
  }
  func.func @transform_6(%arg0: i32) -> (i32, i32) {
    %c0_i32 = arith.constant 0 : i32
    %c0_i32_0 = arith.constant 0 : i32
    %c0_i32_1 = arith.constant 0 : i32
    return %c0_i32, %c0_i32_0 : i32, i32
  }
  func.func @transform_7(%arg0: i32) -> (i32, i32) {
    %c0_i32 = arith.constant 0 : i32
    %c0_i32_0 = arith.constant 0 : i32
    %c0_i32_1 = arith.constant 0 : i32
    return %c0_i32, %c0_i32_0 : i32, i32
  }
  func.func @transform_8(%arg0: i32) -> (i32, i32) {
    %c0_i32 = arith.constant 0 : i32
    %c0_i32_0 = arith.constant 0 : i32
    %c0_i32_1 = arith.constant 0 : i32
    return %c0_i32, %c0_i32_0 : i32, i32
  }
  func.func @transform_9(%arg0: i32) -> (i32, i32) {
    %c0_i32 = arith.constant 0 : i32
    %c0_i32_0 = arith.constant 0 : i32
    %c0_i32_1 = arith.constant 0 : i32
    return %c0_i32, %c0_i32_0 : i32, i32
  }
  func.func @transform_10(%arg0: i32) -> (i32, i32, i32, i32) {
    %c0_i32 = arith.constant 0 : i32
    %c0_i32_0 = arith.constant 0 : i32
    %c0_i32_1 = arith.constant 0 : i32
    %c0_i32_2 = arith.constant 0 : i32
    return %arg0, %c0_i32, %c0_i32_0, %c0_i32_1 : i32, i32, i32, i32
  }
  func.func @transform_11(%arg0: i32) -> (i32, i32, i32) {
    %c0_i32 = arith.constant 0 : i32
    %c0_i32_0 = arith.constant 0 : i32
    %c0_i32_1 = arith.constant 0 : i32
    return %arg0, %c0_i32, %c0_i32_0 : i32, i32, i32
  }
}

</mosaic_0001>

<llo_original>
// kernel: encoder_decoder_forward.1
$region0: #{encoder_decoder_forward.1}
  #allocation0 [shape = 'u32[]', space=smem, size = 0x4, offset = 0x4, fixed_abs, tag = 'smem constant byte address 0x4 - core index']
  #allocation1 [shape = 'u32[72,128]{1,0:T(1,128)}', space=vmem, size = 0x9000, scoped, tag = 'internal scratch']
  #allocation2 [shape = 'f32[1,18,18,34]{3,2,1,0:T(8,128)}', space=vmem, size = 0x36000, scoped, tag = 'scratch operand']
  #allocation3 [shape = 'f32[1,18,18,32]{3,2,1,0:T(8,128)}', space=vmem, size = 0x36000, scoped, tag = 'scratch operand']
  #allocation4 [shape = 'f32[1,18,18,4]{3,2,1,0:T(8,128)}', space=vmem, size = 0x36000, scoped, tag = 'scratch operand']
  %s0 = inlined_call_operand.vmem [shape: f32[2,16,16,4], index: 0, kind: input, shape index: {}]
  %s1 = inlined_call_operand.vmem [shape: f32[2,1,30], index: 1, kind: input, shape index: {}]
  %s2 = inlined_call_operand.vmem [shape: bf16[306,32], index: 2, kind: input, shape index: {}]
  %s3 = inlined_call_operand.vmem [shape: f32[1,32], index: 3, kind: input, shape index: {}]
  %s4 = inlined_call_operand.vmem [shape: bf16[288,4], index: 4, kind: input, shape index: {}]
  %s5 = inlined_call_operand.vmem [shape: f32[1,4], index: 5, kind: input, shape index: {}]
  %s6 = inlined_call_operand.vmem [shape: bf16[36,32], index: 6, kind: input, shape index: {}]
  %s7 = inlined_call_operand.vmem [shape: f32[1,32], index: 7, kind: input, shape index: {}]
  %s8 = inlined_call_operand.vmem [shape: f32[32,128], index: 8, kind: input, shape index: {}]
  %s9 = inlined_call_operand.vmem [shape: f32[1,128], index: 9, kind: input, shape index: {}]
  %s10 = inlined_call_operand.vmem [shape: f32[2,16,16,4], index: 10, kind: output, shape index: {0}]
  %s11 = inlined_call_operand.hbm [shape: f32[2,1,128], index: 11, kind: output, shape index: {1}]
  %12 = xla_tuple %s10, %s11
  %s13 = sld [smem:[#allocation0]]
  $region81: #{encoder_decoder_forward.1} parent=0
    _
  %s15 = ssub.s32 1, %s13
  %s16 = scalar_select 0, %s15, %s13
  $region1: #{encoder_decoder_forward.1} parent=0
    #allocation5 [shape = 'u8[1024]{0}', space=vmem, size = 0x400, scoped, tag = 'output window, operand 1']
    #allocation6 [shape = 's32[2]{0}', space=sflag, size = 0x8, scoped, tag = 'scoped memory for encoder_decoder_forward.1']
    %17 = vsyncpa [#allocation6], 0
    %s18 = scalar_lea.sflag [#allocation6], 1
    %19 = vsyncpa %s18, 0
    loop: start=0, step=1, limit=4
    $region2: #{encoder_decoder_forward.1} parent=1 // loop_pre_header
      _
    $region3: #{encoder_decoder_forward.1} parent=1 // loop_header
      %s21 = sphi 0, %s25
      %p22 = scmp.ge.s32.totalorder %s21, 4
      %s31 = sphi 0, %s33
      %s34 = sphi 0, %s31
      %s35 = sphi 0, %s34
      %s51 = sphi 0, %s35
      %s57 = sphi 0, %s59
      %s60 = sphi 0, %s57
      %s61 = sphi 0, %s60
      %s77 = sphi 0, %s61
      %s81 = sphi 0, %s81
      %s83 = sphi 0, %s81
      %s84 = sphi 0, %s83
      %s98 = sphi 0, %s84
      %s102 = sphi 0, %s102
      %s104 = sphi 0, %s102
      %s105 = sphi 0, %s104
      %s119 = sphi 0, %s105
      %s123 = sphi 0, %s123
      %s125 = sphi 0, %s123
      %s126 = sphi 0, %s125
      %s140 = sphi 0, %s126
      %s144 = sphi 0, %s144
      %s146 = sphi 0, %s144
      %s147 = sphi 0, %s146
      %s161 = sphi 0, %s147
      %s165 = sphi 0, %s165
      %s167 = sphi 0, %s165
      %s168 = sphi 0, %s167
      %s182 = sphi 0, %s168
      %s186 = sphi 0, %s186
      %s188 = sphi 0, %s186
      %s189 = sphi 0, %s188
      %s203 = sphi 0, %s189
      %s207 = sphi 0, %s207
      %s209 = sphi 0, %s207
      %s210 = sphi 0, %s209
      %s224 = sphi 0, %s210
      %s228 = sphi 0, %s228
      %s230 = sphi 0, %s228
      %s231 = sphi 0, %s230
      %s245 = sphi 0, %s231
      %s251 = sphi 0, %s253
      %s254 = sphi 0, %s251
      %s255 = sphi 0, %s254
      %s271 = sphi 0, %s255
      %s277 = sphi 0, %s279
      %s280 = sphi 0, %s277
      %s281 = sphi 0, %s280
      %s297 = sphi 0, %s281
    $region4: #{encoder_decoder_forward.1} parent=1 // loop_header_branch
      %24 = sbr.rel (%p22) target = $region8
    $region5: #{encoder_decoder_forward.1} parent=1 // loop_body
      %s26 = ssub.s32 %s21, 1
      %s27 = ssub.s32 %s21, 2
      %s28 = sadd.s32 %s21, 1
      %s29 = ssub.s32 %s21, %s28
      %p30 = scmp.eq.s32.totalorder %s29, 0
      %s32 = sadd.s32 %s31, 1
      %s33 = scalar_select %p30, %s31, %s32
      %p36 = pneg %p30
      %p37 = scmp.eq.s32.totalorder %s21, 1
      %p38 = por %p36, %p37
      %p39 = scmp.ne.s32.totalorder %s31, %s34
      %p40 = scmp.eq.s32.totalorder %s21, 0
      %p41 = por %p39, %p40
      %p42 = scmp.ne.s32.totalorder %s31, %s34
      %p43 = scmp.eq.s32.totalorder %s26, 1
      %p44 = por %p42, %p43
      %p45 = scmp.ne.s32.totalorder %s34, %s35
      %p46 = scmp.eq.s32.totalorder %s26, 0
      %p47 = por %p45, %p46
      %p48 = scmp.ne.s32.totalorder %s34, %s35
      %p49 = scmp.eq.s32.totalorder %s27, 1
      %p50 = por %p48, %p49
      %p52 = scmp.ne.s32.totalorder %s35, %s51
      %p53 = scmp.eq.s32.totalorder %s27, 0
      %p54 = por %p52, %p53
      %s55 = ssub.s32 %s21, %s28
      %p56 = scmp.eq.s32.totalorder %s55, 0
      %s58 = sadd.s32 %s57, 1
      %s59 = scalar_select %p56, %s57, %s58
      %p62 = pneg %p56
      %p63 = scmp.eq.s32.totalorder %s21, 1
      %p64 = por %p62, %p63
      %p65 = scmp.ne.s32.totalorder %s57, %s60
      %p66 = scmp.eq.s32.totalorder %s21, 0
      %p67 = por %p65, %p66
      %p68 = scmp.ne.s32.totalorder %s57, %s60
      %p69 = scmp.eq.s32.totalorder %s26, 1
      %p70 = por %p68, %p69
      %p71 = scmp.ne.s32.totalorder %s60, %s61
      %p72 = scmp.eq.s32.totalorder %s26, 0
      %p73 = por %p71, %p72
      %p74 = scmp.ne.s32.totalorder %s60, %s61
      %p75 = scmp.eq.s32.totalorder %s27, 1
      %p76 = por %p74, %p75
      %p78 = scmp.ne.s32.totalorder %s61, %s77
      %p79 = scmp.eq.s32.totalorder %s27, 0
      %p80 = por %p78, %p79
      %s82 = sadd.s32 %s81, 1
      %p85 = scmp.eq.s32.totalorder %s21, 1
      %p86 = scmp.ne.s32.totalorder %s81, %s83
      %p87 = scmp.eq.s32.totalorder %s21, 0
      %p88 = por %p86, %p87
      %p89 = scmp.ne.s32.totalorder %s81, %s83
      %p90 = scmp.eq.s32.totalorder %s26, 1
      %p91 = por %p89, %p90
      %p92 = scmp.ne.s32.totalorder %s83, %s84
      %p93 = scmp.eq.s32.totalorder %s26, 0
      %p94 = por %p92, %p93
      %p95 = scmp.ne.s32.totalorder %s83, %s84
      %p96 = scmp.eq.s32.totalorder %s27, 1
      %p97 = por %p95, %p96
      %p99 = scmp.ne.s32.totalorder %s84, %s98
      %p100 = scmp.eq.s32.totalorder %s27, 0
      %p101 = por %p99, %p100
      %s103 = sadd.s32 %s102, 1
      %p106 = scmp.eq.s32.totalorder %s21, 1
      %p107 = scmp.ne.s32.totalorder %s102, %s104
      %p108 = scmp.eq.s32.totalorder %s21, 0
      %p109 = por %p107, %p108
      %p110 = scmp.ne.s32.totalorder %s102, %s104
      %p111 = scmp.eq.s32.totalorder %s26, 1
      %p112 = por %p110, %p111
      %p113 = scmp.ne.s32.totalorder %s104, %s105
      %p114 = scmp.eq.s32.totalorder %s26, 0
      %p115 = por %p113, %p114
      %p116 = scmp.ne.s32.totalorder %s104, %s105
      %p117 = scmp.eq.s32.totalorder %s27, 1
      %p118 = por %p116, %p117
      %p120 = scmp.ne.s32.totalorder %s105, %s119
      %p121 = scmp.eq.s32.totalorder %s27, 0
      %p122 = por %p120, %p121
      %s124 = sadd.s32 %s123, 1
      %p127 = scmp.eq.s32.totalorder %s21, 1
      %p128 = scmp.ne.s32.totalorder %s123, %s125
      %p129 = scmp.eq.s32.totalorder %s21, 0
      %p130 = por %p128, %p129
      %p131 = scmp.ne.s32.totalorder %s123, %s125
      %p132 = scmp.eq.s32.totalorder %s26, 1
      %p133 = por %p131, %p132
      %p134 = scmp.ne.s32.totalorder %s125, %s126
      %p135 = scmp.eq.s32.totalorder %s26, 0
      %p136 = por %p134, %p135
      %p137 = scmp.ne.s32.totalorder %s125, %s126
      %p138 = scmp.eq.s32.totalorder %s27, 1
      %p139 = por %p137, %p138
      %p141 = scmp.ne.s32.totalorder %s126, %s140
      %p142 = scmp.eq.s32.totalorder %s27, 0
      %p143 = por %p141, %p142
      %s145 = sadd.s32 %s144, 1
      %p148 = scmp.eq.s32.totalorder %s21, 1
      %p149 = scmp.ne.s32.totalorder %s144, %s146
      %p150 = scmp.eq.s32.totalorder %s21, 0
      %p151 = por %p149, %p150
      %p152 = scmp.ne.s32.totalorder %s144, %s146
      %p153 = scmp.eq.s32.totalorder %s26, 1
      %p154 = por %p152, %p153
      %p155 = scmp.ne.s32.totalorder %s146, %s147
      %p156 = scmp.eq.s32.totalorder %s26, 0
      %p157 = por %p155, %p156
      %p158 = scmp.ne.s32.totalorder %s146, %s147
      %p159 = scmp.eq.s32.totalorder %s27, 1
      %p160 = por %p158, %p159
      %p162 = scmp.ne.s32.totalorder %s147, %s161
      %p163 = scmp.eq.s32.totalorder %s27, 0
      %p164 = por %p162, %p163
      %s166 = sadd.s32 %s165, 1
      %p169 = scmp.eq.s32.totalorder %s21, 1
      %p170 = scmp.ne.s32.totalorder %s165, %s167
      %p171 = scmp.eq.s32.totalorder %s21, 0
      %p172 = por %p170, %p171
      %p173 = scmp.ne.s32.totalorder %s165, %s167
      %p174 = scmp.eq.s32.totalorder %s26, 1
      %p175 = por %p173, %p174
      %p176 = scmp.ne.s32.totalorder %s167, %s168
      %p177 = scmp.eq.s32.totalorder %s26, 0
      %p178 = por %p176, %p177
      %p179 = scmp.ne.s32.totalorder %s167, %s168
      %p180 = scmp.eq.s32.totalorder %s27, 1
      %p181 = por %p179, %p180
      %p183 = scmp.ne.s32.totalorder %s168, %s182
      %p184 = scmp.eq.s32.totalorder %s27, 0
      %p185 = por %p183, %p184
      %s187 = sadd.s32 %s186, 1
      %p190 = scmp.eq.s32.totalorder %s21, 1
      %p191 = scmp.ne.s32.totalorder %s186, %s188
      %p192 = scmp.eq.s32.totalorder %s21, 0
      %p193 = por %p191, %p192
      %p194 = scmp.ne.s32.totalorder %s186, %s188
      %p195 = scmp.eq.s32.totalorder %s26, 1
      %p196 = por %p194, %p195
      %p197 = scmp.ne.s32.totalorder %s188, %s189
      %p198 = scmp.eq.s32.totalorder %s26, 0
      %p199 = por %p197, %p198
      %p200 = scmp.ne.s32.totalorder %s188, %s189
      %p201 = scmp.eq.s32.totalorder %s27, 1
      %p202 = por %p200, %p201
      %p204 = scmp.ne.s32.totalorder %s189, %s203
      %p205 = scmp.eq.s32.totalorder %s27, 0
      %p206 = por %p204, %p205
      %s208 = sadd.s32 %s207, 1
      %p211 = scmp.eq.s32.totalorder %s21, 1
      %p212 = scmp.ne.s32.totalorder %s207, %s209
      %p213 = scmp.eq.s32.totalorder %s21, 0
      %p214 = por %p212, %p213
      %p215 = scmp.ne.s32.totalorder %s207, %s209
      %p216 = scmp.eq.s32.totalorder %s26, 1
      %p217 = por %p215, %p216
      %p218 = scmp.ne.s32.totalorder %s209, %s210
      %p219 = scmp.eq.s32.totalorder %s26, 0
      %p220 = por %p218, %p219
      %p221 = scmp.ne.s32.totalorder %s209, %s210
      %p222 = scmp.eq.s32.totalorder %s27, 1
      %p223 = por %p221, %p222
      %p225 = scmp.ne.s32.totalorder %s210, %s224
      %p226 = scmp.eq.s32.totalorder %s27, 0
      %p227 = por %p225, %p226
      %s229 = sadd.s32 %s228, 1
      %p232 = scmp.eq.s32.totalorder %s21, 1
      %p233 = scmp.ne.s32.totalorder %s228, %s230
      %p234 = scmp.eq.s32.totalorder %s21, 0
      %p235 = por %p233, %p234
      %p236 = scmp.ne.s32.totalorder %s228, %s230
      %p237 = scmp.eq.s32.totalorder %s26, 1
      %p238 = por %p236, %p237
      %p239 = scmp.ne.s32.totalorder %s230, %s231
      %p240 = scmp.eq.s32.totalorder %s26, 0
      %p241 = por %p239, %p240
      %p242 = scmp.ne.s32.totalorder %s230, %s231
      %p243 = scmp.eq.s32.totalorder %s27, 1
      %p244 = por %p242, %p243
      %p246 = scmp.ne.s32.totalorder %s231, %s245
      %p247 = scmp.eq.s32.totalorder %s27, 0
      %p248 = por %p246, %p247
      %s249 = ssub.s32 %s21, %s28
      %p250 = scmp.eq.s32.totalorder %s249, 0
      %s252 = sadd.s32 %s251, 1
      %s253 = scalar_select %p250, %s251, %s252
      %p256 = pneg %p250
      %p257 = scmp.eq.s32.totalorder %s21, 1
      %p258 = por %p256, %p257
      %p259 = scmp.ne.s32.totalorder %s251, %s254
      %p260 = scmp.eq.s32.totalorder %s21, 0
      %p261 = por %p259, %p260
      %p262 = scmp.ne.s32.totalorder %s251, %s254
      %p263 = scmp.eq.s32.totalorder %s26, 1
      %p264 = por %p262, %p263
      %p265 = scmp.ne.s32.totalorder %s254, %s255
      %p266 = scmp.eq.s32.totalorder %s26, 0
      %p267 = por %p265, %p266
      %p268 = scmp.ne.s32.totalorder %s254, %s255
      %p269 = scmp.eq.s32.totalorder %s27, 1
      %p270 = por %p268, %p269
      %p272 = scmp.ne.s32.totalorder %s255, %s271
      %p273 = scmp.eq.s32.totalorder %s27, 0
      %p274 = por %p272, %p273
      %s275 = ssub.s32 %s21, %s28
      %p276 = scmp.eq.s32.totalorder %s275, 0
      %s278 = sadd.s32 %s277, 1
      %s279 = scalar_select %p276, %s277, %s278
      %p282 = pneg %p276
      %p283 = scmp.eq.s32.totalorder %s21, 1
      %p284 = por %p282, %p283
      %p285 = scmp.ne.s32.totalorder %s277, %s280
      %p286 = scmp.eq.s32.totalorder %s21, 0
      %p287 = por %p285, %p286
      %p288 = scmp.ne.s32.totalorder %s277, %s280
      %p289 = scmp.eq.s32.totalorder %s26, 1
      %p290 = por %p288, %p289
      %p291 = scmp.ne.s32.totalorder %s280, %s281
      %p292 = scmp.eq.s32.totalorder %s26, 0
      %p293 = por %p291, %p292
      %p294 = scmp.ne.s32.totalorder %s280, %s281
      %p295 = scmp.eq.s32.totalorder %s27, 1
      %p296 = por %p294, %p295
      %p298 = scmp.ne.s32.totalorder %s281, %s297
      %p299 = scmp.eq.s32.totalorder %s27, 0
      %p300 = por %p298, %p299
      %p301 = scmp.le.s32.totalorder 1, %s21
      %p302 = scmp.lt.s32.totalorder %s21, 3
      %p303 = pnand %p301, %p302
      %p304 = pneg %p303
      // Predicated region
      $region9: #{encoder_decoder_forward.1} parent=5 // pred_check
        _
      $region10: #{encoder_decoder_forward.1} parent=5 // pred_check_branch
        %306 = sbr.rel (%p303) target = $region12
      $region11: #{encoder_decoder_forward.1} parent=5 // pred_region
        %s307 = ssub.s32 %s21, 1
        // Predicated region
        $region13: #{encoder_decoder_forward.1} parent=11 // pred_check
          %p308 = pneg %p94
        $region14: #{encoder_decoder_forward.1} parent=11 // pred_check_branch
          %310 = sbr.rel (%p308) target = $region16
        $region15: #{encoder_decoder_forward.1} parent=11 // pred_region
          _
        $region16: #{encoder_decoder_forward.1} parent=11 // pred_fallthru
          _
        // Predicated region
        $region17: #{encoder_decoder_forward.1} parent=11 // pred_check
          %p311 = pneg %p115
        $region18: #{encoder_decoder_forward.1} parent=11 // pred_check_branch
          %313 = sbr.rel (%p311) target = $region20
        $region19: #{encoder_decoder_forward.1} parent=11 // pred_region
          _
        $region20: #{encoder_decoder_forward.1} parent=11 // pred_fallthru
          _
        // Predicated region
        $region21: #{encoder_decoder_forward.1} parent=11 // pred_check
          %p314 = pneg %p136
        $region22: #{encoder_decoder_forward.1} parent=11 // pred_check_branch
          %316 = sbr.rel (%p314) target = $region24
        $region23: #{encoder_decoder_forward.1} parent=11 // pred_region
          _
        $region24: #{encoder_decoder_forward.1} parent=11 // pred_fallthru
          _
        // Predicated region
        $region25: #{encoder_decoder_forward.1} parent=11 // pred_check
          %p317 = pneg %p157
        $region26: #{encoder_decoder_forward.1} parent=11 // pred_check_branch
          %319 = sbr.rel (%p317) target = $region28
        $region27: #{encoder_decoder_forward.1} parent=11 // pred_region
          _
        $region28: #{encoder_decoder_forward.1} parent=11 // pred_fallthru
          _
        // Predicated region
        $region29: #{encoder_decoder_forward.1} parent=11 // pred_check
          %p320 = pneg %p178
        $region30: #{encoder_decoder_forward.1} parent=11 // pred_check_branch
          %322 = sbr.rel (%p320) target = $region32
        $region31: #{encoder_decoder_forward.1} parent=11 // pred_region
          _
        $region32: #{encoder_decoder_forward.1} parent=11 // pred_fallthru
          _
        // Predicated region
        $region33: #{encoder_decoder_forward.1} parent=11 // pred_check
          %p323 = pneg %p199
        $region34: #{encoder_decoder_forward.1} parent=11 // pred_check_branch
          %325 = sbr.rel (%p323) target = $region36
        $region35: #{encoder_decoder_forward.1} parent=11 // pred_region
          _
        $region36: #{encoder_decoder_forward.1} parent=11 // pred_fallthru
          _
        // Predicated region
        $region37: #{encoder_decoder_forward.1} parent=11 // pred_check
          %p326 = pneg %p220
        $region38: #{encoder_decoder_forward.1} parent=11 // pred_check_branch
          %328 = sbr.rel (%p326) target = $region40
        $region39: #{encoder_decoder_forward.1} parent=11 // pred_region
          _
        $region40: #{encoder_decoder_forward.1} parent=11 // pred_fallthru
          _
        // Predicated region
        $region41: #{encoder_decoder_forward.1} parent=11 // pred_check
          %p329 = pneg %p241
        $region42: #{encoder_decoder_forward.1} parent=11 // pred_check_branch
          %331 = sbr.rel (%p329) target = $region44
        $region43: #{encoder_decoder_forward.1} parent=11 // pred_region
          _
        $region44: #{encoder_decoder_forward.1} parent=11 // pred_fallthru
          _
      $region12: #{encoder_decoder_forward.1} parent=5 // pred_fallthru
        _
      %p332 = scmp.lt.s32.totalorder %s21, 2
      // Predicated region
      $region45: #{encoder_decoder_forward.1} parent=5 // pred_check
        %p333 = pneg %p332
      $region46: #{encoder_decoder_forward.1} parent=5 // pred_check_branch
        %335 = sbr.rel (%p333) target = $region48
      $region47: #{encoder_decoder_forward.1} parent=5 // pred_region
        // Predicated region
        $region49: #{encoder_decoder_forward.1} parent=47 // pred_check
          %p336 = pneg %p41
        $region50: #{encoder_decoder_forward.1} parent=47 // pred_check_branch
          %338 = sbr.rel (%p336) target = $region52
        $region51: #{encoder_decoder_forward.1} parent=47 // pred_region
          %p339 = scmp.lt.s32.totalorder %s21, 1
          %s340 = scalar_select %p339, %s21, 1
          %s341 = smul.addr %s340, 32
          %s342 = smul.addr %s341, 8
          %s343 = scalar_lea.vmem %s0, %s342
        $region52: #{encoder_decoder_forward.1} parent=47 // pred_fallthru
          _
        // Predicated region
        $region53: #{encoder_decoder_forward.1} parent=47 // pred_check
          %p344 = pneg %p67
        $region54: #{encoder_decoder_forward.1} parent=47 // pred_check_branch
          %346 = sbr.rel (%p344) target = $region56
        $region55: #{encoder_decoder_forward.1} parent=47 // pred_region
          %p347 = scmp.lt.s32.totalorder %s21, 1
          %s348 = scalar_select %p347, %s21, 1
          %s349 = scalar_lea.vmem %s1, %s348
        $region56: #{encoder_decoder_forward.1} parent=47 // pred_fallthru
          _
      $region48: #{encoder_decoder_forward.1} parent=5 // pred_fallthru
        _
      %p350 = scmp.le.s32.totalorder 1, %s21
      %p351 = scmp.lt.s32.totalorder %s21, 3
      %p352 = pnand %p350, %p351
      %p353 = pneg %p352
      // Predicated region
      $region57: #{encoder_decoder_forward.1} parent=5 // pred_check
        _
      $region58: #{encoder_decoder_forward.1} parent=5 // pred_check_branch
        %355 = sbr.rel (%p352) target = $region60
      $region59: #{encoder_decoder_forward.1} parent=5 // pred_region
        %s356 = ssub.s32 %s21, 1
        %p357 = scmp.lt.s32.totalorder %s26, 1
        %s358 = scalar_select %p357, %s26, 1
        %s359 = smul.addr %s358, 32
        %s360 = smul.addr %s359, 8
        %s361 = scalar_lea.vmem %s0, %s360
        %p362 = pneg %p47
        %p363 = pneg %p44
        %p364 = scmp.lt.s32.totalorder %s26, 1
        %s365 = scalar_select %p364, %s26, 1
        %s366 = scalar_lea.vmem %s1, %s365
        %p367 = pneg %p73
        %p368 = pneg %p70
        %p369 = pneg %p94
        %p370 = pneg %p91
        %p371 = pneg %p115
        %p372 = pneg %p112
        %p373 = pneg %p136
        %p374 = pneg %p133
        %p375 = pneg %p157
        %p376 = pneg %p154
        %p377 = pneg %p178
        %p378 = pneg %p175
        %p379 = pneg %p199
        %p380 = pneg %p196
        %p381 = pneg %p220
        %p382 = pneg %p217
        %p383 = pneg %p241
        %p384 = pneg %p238
        %p385 = pneg %p267
        %p386 = pneg %p264
        %p387 = scmp.lt.s32.totalorder %s26, 1
        %s388 = scalar_select %p387, %s26, 1
        %s389 = smul.addr %s388, 32
        %s390 = smul.addr %s389, 8
        %s391 = scalar_lea.vmem %s10, %s390
        %p392 = pneg %p293
        %p393 = pneg %p290
        %s394 = sand.u32 %s280, 1
        %s395 = scalar_lea.sflag [#allocation6], %s394
        %s396 = sand.u32 %s280, 1
        %s397 = scalar_lea.vmem [#allocation5], %s396
        %p398 = scmp.lt.s32.totalorder %s26, 1
        %s399 = scalar_select %p398, %s26, 1
        %s400 = smul.addr %s399, 32
        %s401 = smul.addr %s400, 8
        %s402 = scalar_lea.vmem %s0, %s401
        %p403 = scmp.lt.s32.totalorder %s26, 1
        %s404 = scalar_select %p403, %s26, 1
        %s405 = scalar_lea.vmem %s1, %s404
        %p406 = scmp.lt.s32.totalorder %s26, 1
        %s407 = scalar_select %p406, %s26, 1
        %s408 = smul.addr %s407, 32
        %s409 = smul.addr %s408, 8
        %s410 = scalar_lea.vmem %s10, %s409
        %vm412 = vcmask 277504
        %413 = vst.msk [vmem:[#allocation2] sm:$0xff] %vm412, 0.0
        %414 = vst.msk [vmem:[#allocation2 + $0x8] sm:$0xff] %vm412, 0.0
        %vm415 = vcmask 271360
        %416 = vst.msk [vmem:[#allocation2 + $0x10] sm:$0x3] %vm415, 0.0
        %s417 = scalar_lea.vmem [#allocation2], 408
        %418 = vst.msk [vmem:[%s417] sm:$0xff] %vm412, 0.0
        %419 = vst.msk [vmem:[%s417 + $0x8] sm:$0xff] %vm412, 0.0
        %420 = vst.msk [vmem:[%s417 + $0x10] sm:$0x3] %vm415, 0.0
        %vm421 = vcmask 270336
        %422 = vst.msk [vmem:[#allocation2] sm:$0x1] %vm421, 0.0
        %423 = vst.msk [vmem:[#allocation2 + $0x18] sm:$0x1] %vm421, 0.0
        %424 = vst.msk [vmem:[#allocation2 + $0x30] sm:$0x1] %vm421, 0.0
        %425 = vst.msk [vmem:[#allocation2 + $0x48] sm:$0x1] %vm421, 0.0
        %426 = vst.msk [vmem:[#allocation2 + $0x60] sm:$0x1] %vm421, 0.0
        %427 = vst.msk [vmem:[#allocation2 + $0x78] sm:$0x1] %vm421, 0.0
        %428 = vst.msk [vmem:[#allocation2 + $0x90] sm:$0x1] %vm421, 0.0
        %429 = vst.msk [vmem:[#allocation2 + $0xa8] sm:$0x1] %vm421, 0.0
        %430 = vst.msk [vmem:[#allocation2 + $0xc0] sm:$0x1] %vm421, 0.0
        %431 = vst.msk [vmem:[#allocation2 + $0xd8] sm:$0x1] %vm421, 0.0
        %432 = vst.msk [vmem:[#allocation2 + $0xf0] sm:$0x1] %vm421, 0.0
        %433 = vst.msk [vmem:[#allocation2 + $0x108] sm:$0x1] %vm421, 0.0
        %434 = vst.msk [vmem:[#allocation2 + $0x120] sm:$0x1] %vm421, 0.0
        %435 = vst.msk [vmem:[#allocation2 + $0x138] sm:$0x1] %vm421, 0.0
        %436 = vst.msk [vmem:[#allocation2 + $0x150] sm:$0x1] %vm421, 0.0
        %437 = vst.msk [vmem:[#allocation2 + $0x168] sm:$0x1] %vm421, 0.0
        %438 = vst.msk [vmem:[#allocation2 + $0x180] sm:$0x1] %vm421, 0.0
        %439 = vst.msk [vmem:[#allocation2 + $0x198] sm:$0x1] %vm421, 0.0
        %440 = vst.msk [vmem:[#allocation2 + $0x11] sm:$0x1] %vm421, 0.0
        %441 = vst.msk [vmem:[#allocation2 + $0x29] sm:$0x1] %vm421, 0.0
        %442 = vst.msk [vmem:[#allocation2 + $0x41] sm:$0x1] %vm421, 0.0
        %443 = vst.msk [vmem:[#allocation2 + $0x59] sm:$0x1] %vm421, 0.0
        %444 = vst.msk [vmem:[#allocation2 + $0x71] sm:$0x1] %vm421, 0.0
        %445 = vst.msk [vmem:[#allocation2 + $0x89] sm:$0x1] %vm421, 0.0
        %446 = vst.msk [vmem:[#allocation2 + $0xa1] sm:$0x1] %vm421, 0.0
        %447 = vst.msk [vmem:[#allocation2 + $0xb9] sm:$0x1] %vm421, 0.0
        %448 = vst.msk [vmem:[#allocation2 + $0xd1] sm:$0x1] %vm421, 0.0
        %449 = vst.msk [vmem:[#allocation2 + $0xe9] sm:$0x1] %vm421, 0.0
        %450 = vst.msk [vmem:[#allocation2 + $0x101] sm:$0x1] %vm421, 0.0
        %451 = vst.msk [vmem:[#allocation2 + $0x119] sm:$0x1] %vm421, 0.0
        %452 = vst.msk [vmem:[#allocation2 + $0x131] sm:$0x1] %vm421, 0.0
        %453 = vst.msk [vmem:[#allocation2 + $0x149] sm:$0x1] %vm421, 0.0
        %454 = vst.msk [vmem:[#allocation2 + $0x161] sm:$0x1] %vm421, 0.0
        %455 = vst.msk [vmem:[#allocation2 + $0x179] sm:$0x1] %vm421, 0.0
        %456 = vst.msk [vmem:[#allocation2 + $0x191] sm:$0x1] %vm421, 0.0
        %457 = vst.msk [vmem:[#allocation2 + $0x1a9] sm:$0x1] %vm421, 0.0
        %v458 = vld [vmem:[%s405] sm:$0x1]
        %v460 = vperm.slane %v458, 0
        %v461 = vld [vmem:[%s402] sm:$0xff]
        %v462 = vld [vmem:[%s402 + $0x8] sm:$0xff]
        %v463 = vld [vmem:[%s402 + $0x10] sm:$0xff]
        %v464 = vld [vmem:[%s402 + $0x18] sm:$0xff]
        %v465 = vld [vmem:[%s402 + $0x20] sm:$0xff]
        %v466 = vld [vmem:[%s402 + $0x28] sm:$0xff]
        %v467 = vld [vmem:[%s402 + $0x30] sm:$0xff]
        %v468 = vld [vmem:[%s402 + $0x38] sm:$0xff]
        %v469 = vld [vmem:[%s402 + $0x40] sm:$0xff]
        %v470 = vld [vmem:[%s402 + $0x48] sm:$0xff]
        %v471 = vld [vmem:[%s402 + $0x50] sm:$0xff]
        %v472 = vld [vmem:[%s402 + $0x58] sm:$0xff]
        %v473 = vld [vmem:[%s402 + $0x60] sm:$0xff]
        %v474 = vld [vmem:[%s402 + $0x68] sm:$0xff]
        %v475 = vld [vmem:[%s402 + $0x70] sm:$0xff]
        %v476 = vld [vmem:[%s402 + $0x78] sm:$0xff]
        %v477 = vld [vmem:[%s402 + $0x80] sm:$0xff]
        %v478 = vld [vmem:[%s402 + $0x88] sm:$0xff]
        %v479 = vld [vmem:[%s402 + $0x90] sm:$0xff]
        %v480 = vld [vmem:[%s402 + $0x98] sm:$0xff]
        %v481 = vld [vmem:[%s402 + $0xa0] sm:$0xff]
        %v482 = vld [vmem:[%s402 + $0xa8] sm:$0xff]
        %v483 = vld [vmem:[%s402 + $0xb0] sm:$0xff]
        %v484 = vld [vmem:[%s402 + $0xb8] sm:$0xff]
        %v485 = vld [vmem:[%s402 + $0xc0] sm:$0xff]
        %v486 = vld [vmem:[%s402 + $0xc8] sm:$0xff]
        %v487 = vld [vmem:[%s402 + $0xd0] sm:$0xff]
        %v488 = vld [vmem:[%s402 + $0xd8] sm:$0xff]
        %v489 = vld [vmem:[%s402 + $0xe0] sm:$0xff]
        %v490 = vld [vmem:[%s402 + $0xe8] sm:$0xff]
        %v491 = vld [vmem:[%s402 + $0xf0] sm:$0xff]
        %v492 = vld [vmem:[%s402 + $0xf8] sm:$0xff]
        %493 = vrot.lane.b32.xlu0 %v460, 4
        %v494 = vpop.permute.xlu0 %493
        %vm496 = vcmask 31744
        %v497 = vsel %vm496, %v461, %v494
        %v498 = vsel %vm496, %v462, %v494
        %v499 = vsel %vm496, %v463, %v494
        %v500 = vsel %vm496, %v464, %v494
        %v501 = vsel %vm496, %v465, %v494
        %v502 = vsel %vm496, %v466, %v494
        %v503 = vsel %vm496, %v467, %v494
        %v504 = vsel %vm496, %v468, %v494
        %v505 = vsel %vm496, %v469, %v494
        %v506 = vsel %vm496, %v470, %v494
        %v507 = vsel %vm496, %v471, %v494
        %v508 = vsel %vm496, %v472, %v494
        %v509 = vsel %vm496, %v473, %v494
        %v510 = vsel %vm496, %v474, %v494
        %v511 = vsel %vm496, %v475, %v494
        %v512 = vsel %vm496, %v476, %v494
        %v513 = vsel %vm496, %v477, %v494
        %v514 = vsel %vm496, %v478, %v494
        %v515 = vsel %vm496, %v479, %v494
        %v516 = vsel %vm496, %v480, %v494
        %v517 = vsel %vm496, %v481, %v494
        %v518 = vsel %vm496, %v482, %v494
        %v519 = vsel %vm496, %v483, %v494
        %v520 = vsel %vm496, %v484, %v494
        %v521 = vsel %vm496, %v485, %v494
        %v522 = vsel %vm496, %v486, %v494
        %v523 = vsel %vm496, %v487, %v494
        %v524 = vsel %vm496, %v488, %v494
        %v525 = vsel %vm496, %v489, %v494
        %v526 = vsel %vm496, %v490, %v494
        %v527 = vsel %vm496, %v491, %v494
        %v528 = vsel %vm496, %v492, %v494
        %s529 = scalar_lea.vmem [#allocation2], 24
        %530 = vst.msk [vmem:[%s529 + $0x1] sm:$0xff] %vm412, %v497
        %531 = vst.msk [vmem:[%s529 + $0x9] sm:$0xff] %vm412, %v498
        %532 = vst.msk [vmem:[%s529 + $0x19] sm:$0xff] %vm412, %v499
        %533 = vst.msk [vmem:[%s529 + $0x21] sm:$0xff] %vm412, %v500
        %534 = vst.msk [vmem:[%s529 + $0x31] sm:$0xff] %vm412, %v501
        %535 = vst.msk [vmem:[%s529 + $0x39] sm:$0xff] %vm412, %v502
        %536 = vst.msk [vmem:[%s529 + $0x49] sm:$0xff] %vm412, %v503
        %537 = vst.msk [vmem:[%s529 + $0x51] sm:$0xff] %vm412, %v504
        %538 = vst.msk [vmem:[%s529 + $0x61] sm:$0xff] %vm412, %v505
        %539 = vst.msk [vmem:[%s529 + $0x69] sm:$0xff] %vm412, %v506
        %540 = vst.msk [vmem:[%s529 + $0x79] sm:$0xff] %vm412, %v507
        %541 = vst.msk [vmem:[%s529 + $0x81] sm:$0xff] %vm412, %v508
        %542 = vst.msk [vmem:[%s529 + $0x91] sm:$0xff] %vm412, %v509
        %543 = vst.msk [vmem:[%s529 + $0x99] sm:$0xff] %vm412, %v510
        %544 = vst.msk [vmem:[%s529 + $0xa9] sm:$0xff] %vm412, %v511
        %545 = vst.msk [vmem:[%s529 + $0xb1] sm:$0xff] %vm412, %v512
        %546 = vst.msk [vmem:[%s529 + $0xc1] sm:$0xff] %vm412, %v513
        %547 = vst.msk [vmem:[%s529 + $0xc9] sm:$0xff] %vm412, %v514
        %548 = vst.msk [vmem:[%s529 + $0xd9] sm:$0xff] %vm412, %v515
        %549 = vst.msk [vmem:[%s529 + $0xe1] sm:$0xff] %vm412, %v516
        %550 = vst.msk [vmem:[%s529 + $0xf1] sm:$0xff] %vm412, %v517
        %551 = vst.msk [vmem:[%s529 + $0xf9] sm:$0xff] %vm412, %v518
        %552 = vst.msk [vmem:[%s529 + $0x109] sm:$0xff] %vm412, %v519
        %553 = vst.msk [vmem:[%s529 + $0x111] sm:$0xff] %vm412, %v520
        %554 = vst.msk [vmem:[%s529 + $0x121] sm:$0xff] %vm412, %v521
        %555 = vst.msk [vmem:[%s529 + $0x129] sm:$0xff] %vm412, %v522
        %556 = vst.msk [vmem:[%s529 + $0x139] sm:$0xff] %vm412, %v523
        %557 = vst.msk [vmem:[%s529 + $0x141] sm:$0xff] %vm412, %v524
        %558 = vst.msk [vmem:[%s529 + $0x151] sm:$0xff] %vm412, %v525
        %559 = vst.msk [vmem:[%s529 + $0x159] sm:$0xff] %vm412, %v526
        %560 = vst.msk [vmem:[%s529 + $0x169] sm:$0xff] %vm412, %v527
        %561 = vst.msk [vmem:[%s529 + $0x171] sm:$0xff] %vm412, %v528
        %v562 = vld [vmem:[#allocation2] sm:$0xff]
        %v563 = vld [vmem:[#allocation2 + $0x8] sm:$0xff]
        %v564 = vld [vmem:[#allocation2 + $0x18] sm:$0xff]
        %v565 = vld [vmem:[#allocation2 + $0x20] sm:$0xff]
        %v566 = vld [vmem:[#allocation2 + $0x30] sm:$0xff]
        %v567 = vld [vmem:[#allocation2 + $0x38] sm:$0xff]
        %v568 = vld [vmem:[#allocation2 + $0x48] sm:$0xff]
        %v569 = vld [vmem:[#allocation2 + $0x50] sm:$0xff]
        %v570 = vld [vmem:[#allocation2 + $0x60] sm:$0xff]
        %v571 = vld [vmem:[#allocation2 + $0x68] sm:$0xff]
        %v572 = vld [vmem:[#allocation2 + $0x78] sm:$0xff]
        %v573 = vld [vmem:[#allocation2 + $0x80] sm:$0xff]
        %v574 = vld [vmem:[#allocation2 + $0x90] sm:$0xff]
        %v575 = vld [vmem:[#allocation2 + $0x98] sm:$0xff]
        %v576 = vld [vmem:[#allocation2 + $0xa8] sm:$0xff]
        %v577 = vld [vmem:[#allocation2 + $0xb0] sm:$0xff]
        %v578 = vld [vmem:[#allocation2 + $0xc0] sm:$0xff]
        %v579 = vld [vmem:[#allocation2 + $0xc8] sm:$0xff]
        %v580 = vld [vmem:[#allocation2 + $0xd8] sm:$0xff]
        %v581 = vld [vmem:[#allocation2 + $0xe0] sm:$0xff]
        %v582 = vld [vmem:[#allocation2 + $0xf0] sm:$0xff]
        %v583 = vld [vmem:[#allocation2 + $0xf8] sm:$0xff]
        %v584 = vld [vmem:[#allocation2 + $0x108] sm:$0xff]
        %v585 = vld [vmem:[#allocation2 + $0x110] sm:$0xff]
        %v586 = vld [vmem:[#allocation2 + $0x120] sm:$0xff]
        %v587 = vld [vmem:[#allocation2 + $0x128] sm:$0xff]
        %v588 = vld [vmem:[#allocation2 + $0x138] sm:$0xff]
        %v589 = vld [vmem:[#allocation2 + $0x140] sm:$0xff]
        %v590 = vld [vmem:[#allocation2 + $0x150] sm:$0xff]
        %v591 = vld [vmem:[#allocation2 + $0x158] sm:$0xff]
        %v592 = vld [vmem:[#allocation2 + $0x168] sm:$0xff]
        %v593 = vld [vmem:[#allocation2 + $0x170] sm:$0xff]
        %v594 = vld [vmem:[#allocation2 + $0x1] sm:$0xff]
        %v595 = vld [vmem:[#allocation2 + $0x9] sm:$0xff]
        %v596 = vld [vmem:[#allocation2 + $0x19] sm:$0xff]
        %v597 = vld [vmem:[#allocation2 + $0x21] sm:$0xff]
        %v598 = vld [vmem:[#allocation2 + $0x31] sm:$0xff]
        %v599 = vld [vmem:[#allocation2 + $0x39] sm:$0xff]
        %v600 = vld [vmem:[#allocation2 + $0x49] sm:$0xff]
        %v601 = vld [vmem:[#allocation2 + $0x51] sm:$0xff]
        %v602 = vld [vmem:[#allocation2 + $0x61] sm:$0xff]
        %v603 = vld [vmem:[#allocation2 + $0x69] sm:$0xff]
        %v604 = vld [vmem:[#allocation2 + $0x79] sm:$0xff]
        %v605 = vld [vmem:[#allocation2 + $0x81] sm:$0xff]
        %v606 = vld [vmem:[#allocation2 + $0x91] sm:$0xff]
        %v607 = vld [vmem:[#allocation2 + $0x99] sm:$0xff]
        %v608 = vld [vmem:[#allocation2 + $0xa9] sm:$0xff]
        %v609 = vld [vmem:[#allocation2 + $0xb1] sm:$0xff]
        %v610 = vld [vmem:[#allocation2 + $0xc1] sm:$0xff]
        %v611 = vld [vmem:[#allocation2 + $0xc9] sm:$0xff]
        %v612 = vld [vmem:[#allocation2 + $0xd9] sm:$0xff]
        %v613 = vld [vmem:[#allocation2 + $0xe1] sm:$0xff]
        %v614 = vld [vmem:[#allocation2 + $0xf1] sm:$0xff]
        %v615 = vld [vmem:[#allocation2 + $0xf9] sm:$0xff]
        %v616 = vld [vmem:[#allocation2 + $0x109] sm:$0xff]
        %v617 = vld [vmem:[#allocation2 + $0x111] sm:$0xff]
        %v618 = vld [vmem:[#allocation2 + $0x121] sm:$0xff]
        %v619 = vld [vmem:[#allocation2 + $0x129] sm:$0xff]
        %v620 = vld [vmem:[#allocation2 + $0x139] sm:$0xff]
        %v621 = vld [vmem:[#allocation2 + $0x141] sm:$0xff]
        %v622 = vld [vmem:[#allocation2 + $0x151] sm:$0xff]
        %v623 = vld [vmem:[#allocation2 + $0x159] sm:$0xff]
        %v624 = vld [vmem:[#allocation2 + $0x169] sm:$0xff]
        %v625 = vld [vmem:[#allocation2 + $0x171] sm:$0xff]
        %v626 = vld [vmem:[#allocation2 + $0x2] sm:$0xff]
        %v627 = vld [vmem:[#allocation2 + $0xa] sm:$0xff]
        %v628 = vld [vmem:[#allocation2 + $0x1a] sm:$0xff]
        %v629 = vld [vmem:[#allocation2 + $0x22] sm:$0xff]
        %v630 = vld [vmem:[#allocation2 + $0x32] sm:$0xff]
        %v631 = vld [vmem:[#allocation2 + $0x3a] sm:$0xff]
        %v632 = vld [vmem:[#allocation2 + $0x4a] sm:$0xff]
        %v633 = vld [vmem:[#allocation2 + $0x52] sm:$0xff]
        %v634 = vld [vmem:[#allocation2 + $0x62] sm:$0xff]
        %v635 = vld [vmem:[#allocation2 + $0x6a] sm:$0xff]
        %v636 = vld [vmem:[#allocation2 + $0x7a] sm:$0xff]
        %v637 = vld [vmem:[#allocation2 + $0x82] sm:$0xff]
        %v638 = vld [vmem:[#allocation2 + $0x92] sm:$0xff]
        %v639 = vld [vmem:[#allocation2 + $0x9a] sm:$0xff]
        %v640 = vld [vmem:[#allocation2 + $0xaa] sm:$0xff]
        %v641 = vld [vmem:[#allocation2 + $0xb2] sm:$0xff]
        %v642 = vld [vmem:[#allocation2 + $0xc2] sm:$0xff]
        %v643 = vld [vmem:[#allocation2 + $0xca] sm:$0xff]
        %v644 = vld [vmem:[#allocation2 + $0xda] sm:$0xff]
        %v645 = vld [vmem:[#allocation2 + $0xe2] sm:$0xff]
        %v646 = vld [vmem:[#allocation2 + $0xf2] sm:$0xff]
        %v647 = vld [vmem:[#allocation2 + $0xfa] sm:$0xff]
        %v648 = vld [vmem:[#allocation2 + $0x10a] sm:$0xff]
        %v649 = vld [vmem:[#allocation2 + $0x112] sm:$0xff]
        %v650 = vld [vmem:[#allocation2 + $0x122] sm:$0xff]
        %v651 = vld [vmem:[#allocation2 + $0x12a] sm:$0xff]
        %v652 = vld [vmem:[#allocation2 + $0x13a] sm:$0xff]
        %v653 = vld [vmem:[#allocation2 + $0x142] sm:$0xff]
        %v654 = vld [vmem:[#allocation2 + $0x152] sm:$0xff]
        %v655 = vld [vmem:[#allocation2 + $0x15a] sm:$0xff]
        %v656 = vld [vmem:[#allocation2 + $0x16a] sm:$0xff]
        %v657 = vld [vmem:[#allocation2 + $0x172] sm:$0xff]
        %v658 = vld [vmem:[%s529] sm:$0xff]
        %v659 = vld [vmem:[%s529 + $0x8] sm:$0xff]
        %v660 = vld [vmem:[%s529 + $0x18] sm:$0xff]
        %v661 = vld [vmem:[%s529 + $0x20] sm:$0xff]
        %v662 = vld [vmem:[%s529 + $0x30] sm:$0xff]
        %v663 = vld [vmem:[%s529 + $0x38] sm:$0xff]
        %v664 = vld [vmem:[%s529 + $0x48] sm:$0xff]
        %v665 = vld [vmem:[%s529 + $0x50] sm:$0xff]
        %v666 = vld [vmem:[%s529 + $0x60] sm:$0xff]
        %v667 = vld [vmem:[%s529 + $0x68] sm:$0xff]
        %v668 = vld [vmem:[%s529 + $0x78] sm:$0xff]
        %v669 = vld [vmem:[%s529 + $0x80] sm:$0xff]
        %v670 = vld [vmem:[%s529 + $0x90] sm:$0xff]
        %v671 = vld [vmem:[%s529 + $0x98] sm:$0xff]
        %v672 = vld [vmem:[%s529 + $0xa8] sm:$0xff]
        %v673 = vld [vmem:[%s529 + $0xb0] sm:$0xff]
        %v674 = vld [vmem:[%s529 + $0xc0] sm:$0xff]
        %v675 = vld [vmem:[%s529 + $0xc8] sm:$0xff]
        %v676 = vld [vmem:[%s529 + $0xd8] sm:$0xff]
        %v677 = vld [vmem:[%s529 + $0xe0] sm:$0xff]
        %v678 = vld [vmem:[%s529 + $0xf0] sm:$0xff]
        %v679 = vld [vmem:[%s529 + $0xf8] sm:$0xff]
        %v680 = vld [vmem:[%s529 + $0x108] sm:$0xff]
        %v681 = vld [vmem:[%s529 + $0x110] sm:$0xff]
        %v682 = vld [vmem:[%s529 + $0x120] sm:$0xff]
        %v683 = vld [vmem:[%s529 + $0x128] sm:$0xff]
        %v684 = vld [vmem:[%s529 + $0x138] sm:$0xff]
        %v685 = vld [vmem:[%s529 + $0x140] sm:$0xff]
        %v686 = vld [vmem:[%s529 + $0x150] sm:$0xff]
        %v687 = vld [vmem:[%s529 + $0x158] sm:$0xff]
        %v688 = vld [vmem:[%s529 + $0x168] sm:$0xff]
        %v689 = vld [vmem:[%s529 + $0x170] sm:$0xff]
        %v690 = vld [vmem:[%s529 + $0x1] sm:$0xff]
        %v691 = vld [vmem:[%s529 + $0x9] sm:$0xff]
        %v692 = vld [vmem:[%s529 + $0x19] sm:$0xff]
        %v693 = vld [vmem:[%s529 + $0x21] sm:$0xff]
        %v694 = vld [vmem:[%s529 + $0x31] sm:$0xff]
        %v695 = vld [vmem:[%s529 + $0x39] sm:$0xff]
        %v696 = vld [vmem:[%s529 + $0x49] sm:$0xff]
        %v697 = vld [vmem:[%s529 + $0x51] sm:$0xff]
        %v698 = vld [vmem:[%s529 + $0x61] sm:$0xff]
        %v699 = vld [vmem:[%s529 + $0x69] sm:$0xff]
        %v700 = vld [vmem:[%s529 + $0x79] sm:$0xff]
        %v701 = vld [vmem:[%s529 + $0x81] sm:$0xff]
        %v702 = vld [vmem:[%s529 + $0x91] sm:$0xff]
        %v703 = vld [vmem:[%s529 + $0x99] sm:$0xff]
        %v704 = vld [vmem:[%s529 + $0xa9] sm:$0xff]
        %v705 = vld [vmem:[%s529 + $0xb1] sm:$0xff]
        %v706 = vld [vmem:[%s529 + $0xc1] sm:$0xff]
        %v707 = vld [vmem:[%s529 + $0xc9] sm:$0xff]
        %v708 = vld [vmem:[%s529 + $0xd9] sm:$0xff]
        %v709 = vld [vmem:[%s529 + $0xe1] sm:$0xff]
        %v710 = vld [vmem:[%s529 + $0xf1] sm:$0xff]
        %v711 = vld [vmem:[%s529 + $0xf9] sm:$0xff]
        %v712 = vld [vmem:[%s529 + $0x109] sm:$0xff]
        %v713 = vld [vmem:[%s529 + $0x111] sm:$0xff]
        %v714 = vld [vmem:[%s529 + $0x121] sm:$0xff]
        %v715 = vld [vmem:[%s529 + $0x129] sm:$0xff]
        %v716 = vld [vmem:[%s529 + $0x139] sm:$0xff]
        %v717 = vld [vmem:[%s529 + $0x141] sm:$0xff]
        %v718 = vld [vmem:[%s529 + $0x151] sm:$0xff]
        %v719 = vld [vmem:[%s529 + $0x159] sm:$0xff]
        %v720 = vld [vmem:[%s529 + $0x169] sm:$0xff]
        %v721 = vld [vmem:[%s529 + $0x171] sm:$0xff]
        %v722 = vld [vmem:[%s529 + $0x2] sm:$0xff]
        %v723 = vld [vmem:[%s529 + $0xa] sm:$0xff]
        %v724 = vld [vmem:[%s529 + $0x1a] sm:$0xff]
        %v725 = vld [vmem:[%s529 + $0x22] sm:$0xff]
        %v726 = vld [vmem:[%s529 + $0x32] sm:$0xff]
        %v727 = vld [vmem:[%s529 + $0x3a] sm:$0xff]
        %v728 = vld [vmem:[%s529 + $0x4a] sm:$0xff]
        %v729 = vld [vmem:[%s529 + $0x52] sm:$0xff]
        %v730 = vld [vmem:[%s529 + $0x62] sm:$0xff]
        %v731 = vld [vmem:[%s529 + $0x6a] sm:$0xff]
        %v732 = vld [vmem:[%s529 + $0x7a] sm:$0xff]
        %v733 = vld [vmem:[%s529 + $0x82] sm:$0xff]
        %v734 = vld [vmem:[%s529 + $0x92] sm:$0xff]
        %v735 = vld [vmem:[%s529 + $0x9a] sm:$0xff]
        %v736 = vld [vmem:[%s529 + $0xaa] sm:$0xff]
        %v737 = vld [vmem:[%s529 + $0xb2] sm:$0xff]
        %v738 = vld [vmem:[%s529 + $0xc2] sm:$0xff]
        %v739 = vld [vmem:[%s529 + $0xca] sm:$0xff]
        %v740 = vld [vmem:[%s529 + $0xda] sm:$0xff]
        %v741 = vld [vmem:[%s529 + $0xe2] sm:$0xff]
        %v742 = vld [vmem:[%s529 + $0xf2] sm:$0xff]
        %v743 = vld [vmem:[%s529 + $0xfa] sm:$0xff]
        %v744 = vld [vmem:[%s529 + $0x10a] sm:$0xff]
        %v745 = vld [vmem:[%s529 + $0x112] sm:$0xff]
        %v746 = vld [vmem:[%s529 + $0x122] sm:$0xff]
        %v747 = vld [vmem:[%s529 + $0x12a] sm:$0xff]
        %v748 = vld [vmem:[%s529 + $0x13a] sm:$0xff]
        %v749 = vld [vmem:[%s529 + $0x142] sm:$0xff]
        %v750 = vld [vmem:[%s529 + $0x152] sm:$0xff]
        %v751 = vld [vmem:[%s529 + $0x15a] sm:$0xff]
        %v752 = vld [vmem:[%s529 + $0x16a] sm:$0xff]
        %v753 = vld [vmem:[%s529 + $0x172] sm:$0xff]
        %s754 = scalar_lea.vmem [#allocation2], 48
        %v755 = vld [vmem:[%s754] sm:$0xff]
        %v756 = vld [vmem:[%s754 + $0x8] sm:$0xff]
        %v757 = vld [vmem:[%s754 + $0x18] sm:$0xff]
        %v758 = vld [vmem:[%s754 + $0x20] sm:$0xff]
        %v759 = vld [vmem:[%s754 + $0x30] sm:$0xff]
        %v760 = vld [vmem:[%s754 + $0x38] sm:$0xff]
        %v761 = vld [vmem:[%s754 + $0x48] sm:$0xff]
        %v762 = vld [vmem:[%s754 + $0x50] sm:$0xff]
        %v763 = vld [vmem:[%s754 + $0x60] sm:$0xff]
        %v764 = vld [vmem:[%s754 + $0x68] sm:$0xff]
        %v765 = vld [vmem:[%s754 + $0x78] sm:$0xff]
        %v766 = vld [vmem:[%s754 + $0x80] sm:$0xff]
        %v767 = vld [vmem:[%s754 + $0x90] sm:$0xff]
        %v768 = vld [vmem:[%s754 + $0x98] sm:$0xff]
        %v769 = vld [vmem:[%s754 + $0xa8] sm:$0xff]
        %v770 = vld [vmem:[%s754 + $0xb0] sm:$0xff]
        %v771 = vld [vmem:[%s754 + $0xc0] sm:$0xff]
        %v772 = vld [vmem:[%s754 + $0xc8] sm:$0xff]
        %v773 = vld [vmem:[%s754 + $0xd8] sm:$0xff]
        %v774 = vld [vmem:[%s754 + $0xe0] sm:$0xff]
        %v775 = vld [vmem:[%s754 + $0xf0] sm:$0xff]
        %v776 = vld [vmem:[%s754 + $0xf8] sm:$0xff]
        %v777 = vld [vmem:[%s754 + $0x108] sm:$0xff]
        %v778 = vld [vmem:[%s754 + $0x110] sm:$0xff]
        %v779 = vld [vmem:[%s754 + $0x120] sm:$0xff]
        %v780 = vld [vmem:[%s754 + $0x128] sm:$0xff]
        %v781 = vld [vmem:[%s754 + $0x138] sm:$0xff]
        %v782 = vld [vmem:[%s754 + $0x140] sm:$0xff]
        %v783 = vld [vmem:[%s754 + $0x150] sm:$0xff]
        %v784 = vld [vmem:[%s754 + $0x158] sm:$0xff]
        %v785 = vld [vmem:[%s754 + $0x168] sm:$0xff]
        %v786 = vld [vmem:[%s754 + $0x170] sm:$0xff]
        %v787 = vld [vmem:[%s754 + $0x1] sm:$0xff]
        %v788 = vld [vmem:[%s754 + $0x9] sm:$0xff]
        %v789 = vld [vmem:[%s754 + $0x19] sm:$0xff]
        %v790 = vld [vmem:[%s754 + $0x21] sm:$0xff]
        %v791 = vld [vmem:[%s754 + $0x31] sm:$0xff]
        %v792 = vld [vmem:[%s754 + $0x39] sm:$0xff]
        %v793 = vld [vmem:[%s754 + $0x49] sm:$0xff]
        %v794 = vld [vmem:[%s754 + $0x51] sm:$0xff]
        %v795 = vld [vmem:[%s754 + $0x61] sm:$0xff]
        %v796 = vld [vmem:[%s754 + $0x69] sm:$0xff]
        %v797 = vld [vmem:[%s754 + $0x79] sm:$0xff]
        %v798 = vld [vmem:[%s754 + $0x81] sm:$0xff]
        %v799 = vld [vmem:[%s754 + $0x91] sm:$0xff]
        %v800 = vld [vmem:[%s754 + $0x99] sm:$0xff]
        %v801 = vld [vmem:[%s754 + $0xa9] sm:$0xff]
        %v802 = vld [vmem:[%s754 + $0xb1] sm:$0xff]
        %v803 = vld [vmem:[%s754 + $0xc1] sm:$0xff]
        %v804 = vld [vmem:[%s754 + $0xc9] sm:$0xff]
        %v805 = vld [vmem:[%s754 + $0xd9] sm:$0xff]
        %v806 = vld [vmem:[%s754 + $0xe1] sm:$0xff]
        %v807 = vld [vmem:[%s754 + $0xf1] sm:$0xff]
        %v808 = vld [vmem:[%s754 + $0xf9] sm:$0xff]
        %v809 = vld [vmem:[%s754 + $0x109] sm:$0xff]
        %v810 = vld [vmem:[%s754 + $0x111] sm:$0xff]
        %v811 = vld [vmem:[%s754 + $0x121] sm:$0xff]
        %v812 = vld [vmem:[%s754 + $0x129] sm:$0xff]
        %v813 = vld [vmem:[%s754 + $0x139] sm:$0xff]
        %v814 = vld [vmem:[%s754 + $0x141] sm:$0xff]
        %v815 = vld [vmem:[%s754 + $0x151] sm:$0xff]
        %v816 = vld [vmem:[%s754 + $0x159] sm:$0xff]
        %v817 = vld [vmem:[%s754 + $0x169] sm:$0xff]
        %v818 = vld [vmem:[%s754 + $0x171] sm:$0xff]
        %v819 = vld [vmem:[%s754 + $0x2] sm:$0xff]
        %v820 = vld [vmem:[%s754 + $0xa] sm:$0xff]
        %v821 = vld [vmem:[%s754 + $0x1a] sm:$0xff]
        %v822 = vld [vmem:[%s754 + $0x22] sm:$0xff]
        %v823 = vld [vmem:[%s754 + $0x32] sm:$0xff]
        %v824 = vld [vmem:[%s754 + $0x3a] sm:$0xff]
        %v825 = vld [vmem:[%s754 + $0x4a] sm:$0xff]
        %v826 = vld [vmem:[%s754 + $0x52] sm:$0xff]
        %v827 = vld [vmem:[%s754 + $0x62] sm:$0xff]
        %v828 = vld [vmem:[%s754 + $0x6a] sm:$0xff]
        %v829 = vld [vmem:[%s754 + $0x7a] sm:$0xff]
        %v830 = vld [vmem:[%s754 + $0x82] sm:$0xff]
        %v831 = vld [vmem:[%s754 + $0x92] sm:$0xff]
        %v832 = vld [vmem:[%s754 + $0x9a] sm:$0xff]
        %v833 = vld [vmem:[%s754 + $0xaa] sm:$0xff]
        %v834 = vld [vmem:[%s754 + $0xb2] sm:$0xff]
        %v835 = vld [vmem:[%s754 + $0xc2] sm:$0xff]
        %v836 = vld [vmem:[%s754 + $0xca] sm:$0xff]
        %v837 = vld [vmem:[%s754 + $0xda] sm:$0xff]
        %v838 = vld [vmem:[%s754 + $0xe2] sm:$0xff]
        %v839 = vld [vmem:[%s754 + $0xf2] sm:$0xff]
        %v840 = vld [vmem:[%s754 + $0xfa] sm:$0xff]
        %v841 = vld [vmem:[%s754 + $0x10a] sm:$0xff]
        %v842 = vld [vmem:[%s754 + $0x112] sm:$0xff]
        %v843 = vld [vmem:[%s754 + $0x122] sm:$0xff]
        %v844 = vld [vmem:[%s754 + $0x12a] sm:$0xff]
        %v845 = vld [vmem:[%s754 + $0x13a] sm:$0xff]
        %v846 = vld [vmem:[%s754 + $0x142] sm:$0xff]
        %v847 = vld [vmem:[%s754 + $0x152] sm:$0xff]
        %v848 = vld [vmem:[%s754 + $0x15a] sm:$0xff]
        %v849 = vld [vmem:[%s754 + $0x16a] sm:$0xff]
        %v850 = vld [vmem:[%s754 + $0x172] sm:$0xff]
        %883 = vrot.lane.b32.xlu0 %v594, 34
        %v884 = vpop.permute.xlu0 %883
        %885 = vrot.lane.b32.xlu0 %v595, 34
        %v886 = vpop.permute.xlu0 %885
        %887 = vrot.lane.b32.xlu0 %v596, 34
        %v888 = vpop.permute.xlu0 %887
        %889 = vrot.lane.b32.xlu0 %v597, 34
        %v890 = vpop.permute.xlu0 %889
        %891 = vrot.lane.b32.xlu0 %v598, 34
        %v892 = vpop.permute.xlu0 %891
        %893 = vrot.lane.b32.xlu0 %v599, 34
        %v894 = vpop.permute.xlu0 %893
        %895 = vrot.lane.b32.xlu0 %v600, 34
        %v896 = vpop.permute.xlu0 %895
        %897 = vrot.lane.b32.xlu0 %v601, 34
        %v898 = vpop.permute.xlu0 %897
        %899 = vrot.lane.b32.xlu0 %v602, 34
        %v900 = vpop.permute.xlu0 %899
        %901 = vrot.lane.b32.xlu0 %v603, 34
        %v902 = vpop.permute.xlu0 %901
        %903 = vrot.lane.b32.xlu0 %v604, 34
        %v904 = vpop.permute.xlu0 %903
        %905 = vrot.lane.b32.xlu0 %v605, 34
        %v906 = vpop.permute.xlu0 %905
        %907 = vrot.lane.b32.xlu0 %v606, 34
        %v908 = vpop.permute.xlu0 %907
        %909 = vrot.lane.b32.xlu0 %v607, 34
        %v910 = vpop.permute.xlu0 %909
        %911 = vrot.lane.b32.xlu0 %v608, 34
        %v912 = vpop.permute.xlu0 %911
        %913 = vrot.lane.b32.xlu0 %v609, 34
        %v914 = vpop.permute.xlu0 %913
        %915 = vrot.lane.b32.xlu0 %v610, 34
        %v916 = vpop.permute.xlu0 %915
        %917 = vrot.lane.b32.xlu0 %v611, 34
        %v918 = vpop.permute.xlu0 %917
        %919 = vrot.lane.b32.xlu0 %v612, 34
        %v920 = vpop.permute.xlu0 %919
        %921 = vrot.lane.b32.xlu0 %v613, 34
        %v922 = vpop.permute.xlu0 %921
        %923 = vrot.lane.b32.xlu0 %v614, 34
        %v924 = vpop.permute.xlu0 %923
        %925 = vrot.lane.b32.xlu0 %v615, 34
        %v926 = vpop.permute.xlu0 %925
        %927 = vrot.lane.b32.xlu0 %v616, 34
        %v928 = vpop.permute.xlu0 %927
        %929 = vrot.lane.b32.xlu0 %v617, 34
        %v930 = vpop.permute.xlu0 %929
        %931 = vrot.lane.b32.xlu0 %v618, 34
        %v932 = vpop.permute.xlu0 %931
        %933 = vrot.lane.b32.xlu0 %v619, 34
        %v934 = vpop.permute.xlu0 %933
        %935 = vrot.lane.b32.xlu0 %v620, 34
        %v936 = vpop.permute.xlu0 %935
        %937 = vrot.lane.b32.xlu0 %v621, 34
        %v938 = vpop.permute.xlu0 %937
        %939 = vrot.lane.b32.xlu0 %v622, 34
        %v940 = vpop.permute.xlu0 %939
        %941 = vrot.lane.b32.xlu0 %v623, 34
        %v942 = vpop.permute.xlu0 %941
        %943 = vrot.lane.b32.xlu0 %v624, 34
        %v944 = vpop.permute.xlu0 %943
        %945 = vrot.lane.b32.xlu0 %v625, 34
        %v946 = vpop.permute.xlu0 %945
        %1011 = vrot.lane.b32.xlu0 %v626, 68
        %v1012 = vpop.permute.xlu0 %1011
        %1013 = vrot.lane.b32.xlu0 %v627, 68
        %v1014 = vpop.permute.xlu0 %1013
        %1015 = vrot.lane.b32.xlu0 %v628, 68
        %v1016 = vpop.permute.xlu0 %1015
        %1017 = vrot.lane.b32.xlu0 %v629, 68
        %v1018 = vpop.permute.xlu0 %1017
        %1019 = vrot.lane.b32.xlu0 %v630, 68
        %v1020 = vpop.permute.xlu0 %1019
        %1021 = vrot.lane.b32.xlu0 %v631, 68
        %v1022 = vpop.permute.xlu0 %1021
        %1023 = vrot.lane.b32.xlu0 %v632, 68
        %v1024 = vpop.permute.xlu0 %1023
        %1025 = vrot.lane.b32.xlu0 %v633, 68
        %v1026 = vpop.permute.xlu0 %1025
        %1027 = vrot.lane.b32.xlu0 %v634, 68
        %v1028 = vpop.permute.xlu0 %1027
        %1029 = vrot.lane.b32.xlu0 %v635, 68
        %v1030 = vpop.permute.xlu0 %1029
        %1031 = vrot.lane.b32.xlu0 %v636, 68
        %v1032 = vpop.permute.xlu0 %1031
        %1033 = vrot.lane.b32.xlu0 %v637, 68
        %v1034 = vpop.permute.xlu0 %1033
        %1035 = vrot.lane.b32.xlu0 %v638, 68
        %v1036 = vpop.permute.xlu0 %1035
        %1037 = vrot.lane.b32.xlu0 %v639, 68
        %v1038 = vpop.permute.xlu0 %1037
        %1039 = vrot.lane.b32.xlu0 %v640, 68
        %v1040 = vpop.permute.xlu0 %1039
        %1041 = vrot.lane.b32.xlu0 %v641, 68
        %v1042 = vpop.permute.xlu0 %1041
        %1043 = vrot.lane.b32.xlu0 %v642, 68
        %v1044 = vpop.permute.xlu0 %1043
        %1045 = vrot.lane.b32.xlu0 %v643, 68
        %v1046 = vpop.permute.xlu0 %1045
        %1047 = vrot.lane.b32.xlu0 %v644, 68
        %v1048 = vpop.permute.xlu0 %1047
        %1049 = vrot.lane.b32.xlu0 %v645, 68
        %v1050 = vpop.permute.xlu0 %1049
        %1051 = vrot.lane.b32.xlu0 %v646, 68
        %v1052 = vpop.permute.xlu0 %1051
        %1053 = vrot.lane.b32.xlu0 %v647, 68
        %v1054 = vpop.permute.xlu0 %1053
        %1055 = vrot.lane.b32.xlu0 %v648, 68
        %v1056 = vpop.permute.xlu0 %1055
        %1057 = vrot.lane.b32.xlu0 %v649, 68
        %v1058 = vpop.permute.xlu0 %1057
        %1059 = vrot.lane.b32.xlu0 %v650, 68
        %v1060 = vpop.permute.xlu0 %1059
        %1061 = vrot.lane.b32.xlu0 %v651, 68
        %v1062 = vpop.permute.xlu0 %1061
        %1063 = vrot.lane.b32.xlu0 %v652, 68
        %v1064 = vpop.permute.xlu0 %1063
        %1065 = vrot.lane.b32.xlu0 %v653, 68
        %v1066 = vpop.permute.xlu0 %1065
        %1067 = vrot.lane.b32.xlu0 %v654, 68
        %v1068 = vpop.permute.xlu0 %1067
        %1069 = vrot.lane.b32.xlu0 %v655, 68
        %v1070 = vpop.permute.xlu0 %1069
        %1071 = vrot.lane.b32.xlu0 %v656, 68
        %v1072 = vpop.permute.xlu0 %1071
        %1073 = vrot.lane.b32.xlu0 %v657, 68
        %v1074 = vpop.permute.xlu0 %1073
        %1139 = vrot.lane.b32.xlu0 %v658, 102
        %v1140 = vpop.permute.xlu0 %1139
        %1141 = vrot.lane.b32.xlu0 %v659, 102
        %v1142 = vpop.permute.xlu0 %1141
        %1143 = vrot.lane.b32.xlu0 %v660, 102
        %v1144 = vpop.permute.xlu0 %1143
        %1145 = vrot.lane.b32.xlu0 %v661, 102
        %v1146 = vpop.permute.xlu0 %1145
        %1147 = vrot.lane.b32.xlu0 %v662, 102
        %v1148 = vpop.permute.xlu0 %1147
        %1149 = vrot.lane.b32.xlu0 %v663, 102
        %v1150 = vpop.permute.xlu0 %1149
        %1151 = vrot.lane.b32.xlu0 %v664, 102
        %v1152 = vpop.permute.xlu0 %1151
        %1153 = vrot.lane.b32.xlu0 %v665, 102
        %v1154 = vpop.permute.xlu0 %1153
        %1155 = vrot.lane.b32.xlu0 %v666, 102
        %v1156 = vpop.permute.xlu0 %1155
        %1157 = vrot.lane.b32.xlu0 %v667, 102
        %v1158 = vpop.permute.xlu0 %1157
        %1159 = vrot.lane.b32.xlu0 %v668, 102
        %v1160 = vpop.permute.xlu0 %1159
        %1161 = vrot.lane.b32.xlu0 %v669, 102
        %v1162 = vpop.permute.xlu0 %1161
        %1163 = vrot.lane.b32.xlu0 %v670, 102
        %v1164 = vpop.permute.xlu0 %1163
        %1165 = vrot.lane.b32.xlu0 %v671, 102
        %v1166 = vpop.permute.xlu0 %1165
        %1167 = vrot.lane.b32.xlu0 %v672, 102
        %v1168 = vpop.permute.xlu0 %1167
        %1169 = vrot.lane.b32.xlu0 %v673, 102
        %v1170 = vpop.permute.xlu0 %1169
        %1171 = vrot.lane.b32.xlu0 %v674, 102
        %v1172 = vpop.permute.xlu0 %1171
        %1173 = vrot.lane.b32.xlu0 %v675, 102
        %v1174 = vpop.permute.xlu0 %1173
        %1175 = vrot.lane.b32.xlu0 %v676, 102
        %v1176 = vpop.permute.xlu0 %1175
        %1177 = vrot.lane.b32.xlu0 %v677, 102
        %v1178 = vpop.permute.xlu0 %1177
        %1179 = vrot.lane.b32.xlu0 %v678, 102
        %v1180 = vpop.permute.xlu0 %1179
        %1181 = vrot.lane.b32.xlu0 %v679, 102
        %v1182 = vpop.permute.xlu0 %1181
        %1183 = vrot.lane.b32.xlu0 %v680, 102
        %v1184 = vpop.permute.xlu0 %1183
        %1185 = vrot.lane.b32.xlu0 %v681, 102
        %v1186 = vpop.permute.xlu0 %1185
        %1187 = vrot.lane.b32.xlu0 %v682, 102
        %v1188 = vpop.permute.xlu0 %1187
        %1189 = vrot.lane.b32.xlu0 %v683, 102
        %v1190 = vpop.permute.xlu0 %1189
        %1191 = vrot.lane.b32.xlu0 %v684, 102
        %v1192 = vpop.permute.xlu0 %1191
        %1193 = vrot.lane.b32.xlu0 %v685, 102
        %v1194 = vpop.permute.xlu0 %1193
        %1195 = vrot.lane.b32.xlu0 %v686, 102
        %v1196 = vpop.permute.xlu0 %1195
        %1197 = vrot.lane.b32.xlu0 %v687, 102
        %v1198 = vpop.permute.xlu0 %1197
        %1199 = vrot.lane.b32.xlu0 %v688, 102
        %v1200 = vpop.permute.xlu0 %1199
        %1201 = vrot.lane.b32.xlu0 %v689, 102
        %v1202 = vpop.permute.xlu0 %1201
        %1267 = vrot.lane.b32.xlu0 %v690, 8
        %v1268 = vpop.permute.xlu0 %1267
        %1269 = vrot.lane.b32.xlu0 %v691, 8
        %v1270 = vpop.permute.xlu0 %1269
        %1271 = vrot.lane.b32.xlu0 %v692, 8
        %v1272 = vpop.permute.xlu0 %1271
        %1273 = vrot.lane.b32.xlu0 %v693, 8
        %v1274 = vpop.permute.xlu0 %1273
        %1275 = vrot.lane.b32.xlu0 %v694, 8
        %v1276 = vpop.permute.xlu0 %1275
        %1277 = vrot.lane.b32.xlu0 %v695, 8
        %v1278 = vpop.permute.xlu0 %1277
        %1279 = vrot.lane.b32.xlu0 %v696, 8
        %v1280 = vpop.permute.xlu0 %1279
        %1281 = vrot.lane.b32.xlu0 %v697, 8
        %v1282 = vpop.permute.xlu0 %1281
        %1283 = vrot.lane.b32.xlu0 %v698, 8
        %v1284 = vpop.permute.xlu0 %1283
        %1285 = vrot.lane.b32.xlu0 %v699, 8
        %v1286 = vpop.permute.xlu0 %1285
        %1287 = vrot.lane.b32.xlu0 %v700, 8
        %v1288 = vpop.permute.xlu0 %1287
        %1289 = vrot.lane.b32.xlu0 %v701, 8
        %v1290 = vpop.permute.xlu0 %1289
        %1291 = vrot.lane.b32.xlu0 %v702, 8
        %v1292 = vpop.permute.xlu0 %1291
        %1293 = vrot.lane.b32.xlu0 %v703, 8
        %v1294 = vpop.permute.xlu0 %1293
        %1295 = vrot.lane.b32.xlu0 %v704, 8
        %v1296 = vpop.permute.xlu0 %1295
        %1297 = vrot.lane.b32.xlu0 %v705, 8
        %v1298 = vpop.permute.xlu0 %1297
        %1299 = vrot.lane.b32.xlu0 %v706, 8
        %v1300 = vpop.permute.xlu0 %1299
        %1301 = vrot.lane.b32.xlu0 %v707, 8
        %v1302 = vpop.permute.xlu0 %1301
        %1303 = vrot.lane.b32.xlu0 %v708, 8
        %v1304 = vpop.permute.xlu0 %1303
        %1305 = vrot.lane.b32.xlu0 %v709, 8
        %v1306 = vpop.permute.xlu0 %1305
        %1307 = vrot.lane.b32.xlu0 %v710, 8
        %v1308 = vpop.permute.xlu0 %1307
        %1309 = vrot.lane.b32.xlu0 %v711, 8
        %v1310 = vpop.permute.xlu0 %1309
        %1311 = vrot.lane.b32.xlu0 %v712, 8
        %v1312 = vpop.permute.xlu0 %1311
        %1313 = vrot.lane.b32.xlu0 %v713, 8
        %v1314 = vpop.permute.xlu0 %1313
        %1315 = vrot.lane.b32.xlu0 %v714, 8
        %v1316 = vpop.permute.xlu0 %1315
        %1317 = vrot.lane.b32.xlu0 %v715, 8
        %v1318 = vpop.permute.xlu0 %1317
        %1319 = vrot.lane.b32.xlu0 %v716, 8
        %v1320 = vpop.permute.xlu0 %1319
        %1321 = vrot.lane.b32.xlu0 %v717, 8
        %v1322 = vpop.permute.xlu0 %1321
        %1323 = vrot.lane.b32.xlu0 %v718, 8
        %v1324 = vpop.permute.xlu0 %1323
        %1325 = vrot.lane.b32.xlu0 %v719, 8
        %v1326 = vpop.permute.xlu0 %1325
        %1327 = vrot.lane.b32.xlu0 %v720, 8
        %v1328 = vpop.permute.xlu0 %1327
        %1329 = vrot.lane.b32.xlu0 %v721, 8
        %v1330 = vpop.permute.xlu0 %1329
        %1395 = vrot.lane.b32.xlu0 %v722, 42
        %v1396 = vpop.permute.xlu0 %1395
        %1397 = vrot.lane.b32.xlu0 %v723, 42
        %v1398 = vpop.permute.xlu0 %1397
        %1399 = vrot.lane.b32.xlu0 %v724, 42
        %v1400 = vpop.permute.xlu0 %1399
        %1401 = vrot.lane.b32.xlu0 %v725, 42
        %v1402 = vpop.permute.xlu0 %1401
        %1403 = vrot.lane.b32.xlu0 %v726, 42
        %v1404 = vpop.permute.xlu0 %1403
        %1405 = vrot.lane.b32.xlu0 %v727, 42
        %v1406 = vpop.permute.xlu0 %1405
        %1407 = vrot.lane.b32.xlu0 %v728, 42
        %v1408 = vpop.permute.xlu0 %1407
        %1409 = vrot.lane.b32.xlu0 %v729, 42
        %v1410 = vpop.permute.xlu0 %1409
        %1411 = vrot.lane.b32.xlu0 %v730, 42
        %v1412 = vpop.permute.xlu0 %1411
        %1413 = vrot.lane.b32.xlu0 %v731, 42
        %v1414 = vpop.permute.xlu0 %1413
        %1415 = vrot.lane.b32.xlu0 %v732, 42
        %v1416 = vpop.permute.xlu0 %1415
        %1417 = vrot.lane.b32.xlu0 %v733, 42
        %v1418 = vpop.permute.xlu0 %1417
        %1419 = vrot.lane.b32.xlu0 %v734, 42
        %v1420 = vpop.permute.xlu0 %1419
        %1421 = vrot.lane.b32.xlu0 %v735, 42
        %v1422 = vpop.permute.xlu0 %1421
        %1423 = vrot.lane.b32.xlu0 %v736, 42
        %v1424 = vpop.permute.xlu0 %1423
        %1425 = vrot.lane.b32.xlu0 %v737, 42
        %v1426 = vpop.permute.xlu0 %1425
        %1427 = vrot.lane.b32.xlu0 %v738, 42
        %v1428 = vpop.permute.xlu0 %1427
        %1429 = vrot.lane.b32.xlu0 %v739, 42
        %v1430 = vpop.permute.xlu0 %1429
        %1431 = vrot.lane.b32.xlu0 %v740, 42
        %v1432 = vpop.permute.xlu0 %1431
        %1433 = vrot.lane.b32.xlu0 %v741, 42
        %v1434 = vpop.permute.xlu0 %1433
        %1435 = vrot.lane.b32.xlu0 %v742, 42
        %v1436 = vpop.permute.xlu0 %1435
        %1437 = vrot.lane.b32.xlu0 %v743, 42
        %v1438 = vpop.permute.xlu0 %1437
        %1439 = vrot.lane.b32.xlu0 %v744, 42
        %v1440 = vpop.permute.xlu0 %1439
        %1441 = vrot.lane.b32.xlu0 %v745, 42
        %v1442 = vpop.permute.xlu0 %1441
        %1443 = vrot.lane.b32.xlu0 %v746, 42
        %v1444 = vpop.permute.xlu0 %1443
        %1445 = vrot.lane.b32.xlu0 %v747, 42
        %v1446 = vpop.permute.xlu0 %1445
        %1447 = vrot.lane.b32.xlu0 %v748, 42
        %v1448 = vpop.permute.xlu0 %1447
        %1449 = vrot.lane.b32.xlu0 %v749, 42
        %v1450 = vpop.permute.xlu0 %1449
        %1451 = vrot.lane.b32.xlu0 %v750, 42
        %v1452 = vpop.permute.xlu0 %1451
        %1453 = vrot.lane.b32.xlu0 %v751, 42
        %v1454 = vpop.permute.xlu0 %1453
        %1455 = vrot.lane.b32.xlu0 %v752, 42
        %v1456 = vpop.permute.xlu0 %1455
        %1457 = vrot.lane.b32.xlu0 %v753, 42
        %v1458 = vpop.permute.xlu0 %1457
        %1523 = vrot.lane.b32.xlu0 %v755, 76
        %v1524 = vpop.permute.xlu0 %1523
        %1525 = vrot.lane.b32.xlu0 %v756, 76
        %v1526 = vpop.permute.xlu0 %1525
        %1527 = vrot.lane.b32.xlu0 %v757, 76
        %v1528 = vpop.permute.xlu0 %1527
        %1529 = vrot.lane.b32.xlu0 %v758, 76
        %v1530 = vpop.permute.xlu0 %1529
        %1531 = vrot.lane.b32.xlu0 %v759, 76
        %v1532 = vpop.permute.xlu0 %1531
        %1533 = vrot.lane.b32.xlu0 %v760, 76
        %v1534 = vpop.permute.xlu0 %1533
        %1535 = vrot.lane.b32.xlu0 %v761, 76
        %v1536 = vpop.permute.xlu0 %1535
        %1537 = vrot.lane.b32.xlu0 %v762, 76
        %v1538 = vpop.permute.xlu0 %1537
        %1539 = vrot.lane.b32.xlu0 %v763, 76
        %v1540 = vpop.permute.xlu0 %1539
        %1541 = vrot.lane.b32.xlu0 %v764, 76
        %v1542 = vpop.permute.xlu0 %1541
        %1543 = vrot.lane.b32.xlu0 %v765, 76
        %v1544 = vpop.permute.xlu0 %1543
        %1545 = vrot.lane.b32.xlu0 %v766, 76
        %v1546 = vpop.permute.xlu0 %1545
        %1547 = vrot.lane.b32.xlu0 %v767, 76
        %v1548 = vpop.permute.xlu0 %1547
        %1549 = vrot.lane.b32.xlu0 %v768, 76
        %v1550 = vpop.permute.xlu0 %1549
        %1551 = vrot.lane.b32.xlu0 %v769, 76
        %v1552 = vpop.permute.xlu0 %1551
        %1553 = vrot.lane.b32.xlu0 %v770, 76
        %v1554 = vpop.permute.xlu0 %1553
        %1555 = vrot.lane.b32.xlu0 %v771, 76
        %v1556 = vpop.permute.xlu0 %1555
        %1557 = vrot.lane.b32.xlu0 %v772, 76
        %v1558 = vpop.permute.xlu0 %1557
        %1559 = vrot.lane.b32.xlu0 %v773, 76
        %v1560 = vpop.permute.xlu0 %1559
        %1561 = vrot.lane.b32.xlu0 %v774, 76
        %v1562 = vpop.permute.xlu0 %1561
        %1563 = vrot.lane.b32.xlu0 %v775, 76
        %v1564 = vpop.permute.xlu0 %1563
        %1565 = vrot.lane.b32.xlu0 %v776, 76
        %v1566 = vpop.permute.xlu0 %1565
        %1567 = vrot.lane.b32.xlu0 %v777, 76
        %v1568 = vpop.permute.xlu0 %1567
        %1569 = vrot.lane.b32.xlu0 %v778, 76
        %v1570 = vpop.permute.xlu0 %1569
        %1571 = vrot.lane.b32.xlu0 %v779, 76
        %v1572 = vpop.permute.xlu0 %1571
        %1573 = vrot.lane.b32.xlu0 %v780, 76
        %v1574 = vpop.permute.xlu0 %1573
        %1575 = vrot.lane.b32.xlu0 %v781, 76
        %v1576 = vpop.permute.xlu0 %1575
        %1577 = vrot.lane.b32.xlu0 %v782, 76
        %v1578 = vpop.permute.xlu0 %1577
        %1579 = vrot.lane.b32.xlu0 %v783, 76
        %v1580 = vpop.permute.xlu0 %1579
        %1581 = vrot.lane.b32.xlu0 %v784, 76
        %v1582 = vpop.permute.xlu0 %1581
        %1583 = vrot.lane.b32.xlu0 %v785, 76
        %v1584 = vpop.permute.xlu0 %1583
        %1585 = vrot.lane.b32.xlu0 %v786, 76
        %v1586 = vpop.permute.xlu0 %1585
        %1651 = vrot.lane.b32.xlu0 %v787, 110
        %v1652 = vpop.permute.xlu0 %1651
        %1653 = vrot.lane.b32.xlu0 %v788, 110
        %v1654 = vpop.permute.xlu0 %1653
        %1655 = vrot.lane.b32.xlu0 %v789, 110
        %v1656 = vpop.permute.xlu0 %1655
        %1657 = vrot.lane.b32.xlu0 %v790, 110
        %v1658 = vpop.permute.xlu0 %1657
        %1659 = vrot.lane.b32.xlu0 %v791, 110
        %v1660 = vpop.permute.xlu0 %1659
        %1661 = vrot.lane.b32.xlu0 %v792, 110
        %v1662 = vpop.permute.xlu0 %1661
        %1663 = vrot.lane.b32.xlu0 %v793, 110
        %v1664 = vpop.permute.xlu0 %1663
        %1665 = vrot.lane.b32.xlu0 %v794, 110
        %v1666 = vpop.permute.xlu0 %1665
        %1667 = vrot.lane.b32.xlu0 %v795, 110
        %v1668 = vpop.permute.xlu0 %1667
        %1669 = vrot.lane.b32.xlu0 %v796, 110
        %v1670 = vpop.permute.xlu0 %1669
        %1671 = vrot.lane.b32.xlu0 %v797, 110
        %v1672 = vpop.permute.xlu0 %1671
        %1673 = vrot.lane.b32.xlu0 %v798, 110
        %v1674 = vpop.permute.xlu0 %1673
        %1675 = vrot.lane.b32.xlu0 %v799, 110
        %v1676 = vpop.permute.xlu0 %1675
        %1677 = vrot.lane.b32.xlu0 %v800, 110
        %v1678 = vpop.permute.xlu0 %1677
        %1679 = vrot.lane.b32.xlu0 %v801, 110
        %v1680 = vpop.permute.xlu0 %1679
        %1681 = vrot.lane.b32.xlu0 %v802, 110
        %v1682 = vpop.permute.xlu0 %1681
        %1683 = vrot.lane.b32.xlu0 %v803, 110
        %v1684 = vpop.permute.xlu0 %1683
        %1685 = vrot.lane.b32.xlu0 %v804, 110
        %v1686 = vpop.permute.xlu0 %1685
        %1687 = vrot.lane.b32.xlu0 %v805, 110
        %v1688 = vpop.permute.xlu0 %1687
        %1689 = vrot.lane.b32.xlu0 %v806, 110
        %v1690 = vpop.permute.xlu0 %1689
        %1691 = vrot.lane.b32.xlu0 %v807, 110
        %v1692 = vpop.permute.xlu0 %1691
        %1693 = vrot.lane.b32.xlu0 %v808, 110
        %v1694 = vpop.permute.xlu0 %1693
        %1695 = vrot.lane.b32.xlu0 %v809, 110
        %v1696 = vpop.permute.xlu0 %1695
        %1697 = vrot.lane.b32.xlu0 %v810, 110
        %v1698 = vpop.permute.xlu0 %1697
        %1699 = vrot.lane.b32.xlu0 %v811, 110
        %v1700 = vpop.permute.xlu0 %1699
        %1701 = vrot.lane.b32.xlu0 %v812, 110
        %v1702 = vpop.permute.xlu0 %1701
        %1703 = vrot.lane.b32.xlu0 %v813, 110
        %v1704 = vpop.permute.xlu0 %1703
        %1705 = vrot.lane.b32.xlu0 %v814, 110
        %v1706 = vpop.permute.xlu0 %1705
        %1707 = vrot.lane.b32.xlu0 %v815, 110
        %v1708 = vpop.permute.xlu0 %1707
        %1709 = vrot.lane.b32.xlu0 %v816, 110
        %v1710 = vpop.permute.xlu0 %1709
        %1711 = vrot.lane.b32.xlu0 %v817, 110
        %v1712 = vpop.permute.xlu0 %1711
        %1713 = vrot.lane.b32.xlu0 %v818, 110
        %v1714 = vpop.permute.xlu0 %1713
        %1779 = vrot.lane.b32.xlu0 %v819, 16
        %v1780 = vpop.permute.xlu0 %1779
        %1781 = vrot.lane.b32.xlu0 %v820, 16
        %v1782 = vpop.permute.xlu0 %1781
        %1783 = vrot.lane.b32.xlu0 %v821, 16
        %v1784 = vpop.permute.xlu0 %1783
        %1785 = vrot.lane.b32.xlu0 %v822, 16
        %v1786 = vpop.permute.xlu0 %1785
        %1787 = vrot.lane.b32.xlu0 %v823, 16
        %v1788 = vpop.permute.xlu0 %1787
        %1789 = vrot.lane.b32.xlu0 %v824, 16
        %v1790 = vpop.permute.xlu0 %1789
        %1791 = vrot.lane.b32.xlu0 %v825, 16
        %v1792 = vpop.permute.xlu0 %1791
        %1793 = vrot.lane.b32.xlu0 %v826, 16
        %v1794 = vpop.permute.xlu0 %1793
        %1795 = vrot.lane.b32.xlu0 %v827, 16
        %v1796 = vpop.permute.xlu0 %1795
        %1797 = vrot.lane.b32.xlu0 %v828, 16
        %v1798 = vpop.permute.xlu0 %1797
        %1799 = vrot.lane.b32.xlu0 %v829, 16
        %v1800 = vpop.permute.xlu0 %1799
        %1801 = vrot.lane.b32.xlu0 %v830, 16
        %v1802 = vpop.permute.xlu0 %1801
        %1803 = vrot.lane.b32.xlu0 %v831, 16
        %v1804 = vpop.permute.xlu0 %1803
        %1805 = vrot.lane.b32.xlu0 %v832, 16
        %v1806 = vpop.permute.xlu0 %1805
        %1807 = vrot.lane.b32.xlu0 %v833, 16
        %v1808 = vpop.permute.xlu0 %1807
        %1809 = vrot.lane.b32.xlu0 %v834, 16
        %v1810 = vpop.permute.xlu0 %1809
        %1811 = vrot.lane.b32.xlu0 %v835, 16
        %v1812 = vpop.permute.xlu0 %1811
        %1813 = vrot.lane.b32.xlu0 %v836, 16
        %v1814 = vpop.permute.xlu0 %1813
        %1815 = vrot.lane.b32.xlu0 %v837, 16
        %v1816 = vpop.permute.xlu0 %1815
        %1817 = vrot.lane.b32.xlu0 %v838, 16
        %v1818 = vpop.permute.xlu0 %1817
        %1819 = vrot.lane.b32.xlu0 %v839, 16
        %v1820 = vpop.permute.xlu0 %1819
        %1821 = vrot.lane.b32.xlu0 %v840, 16
        %v1822 = vpop.permute.xlu0 %1821
        %1823 = vrot.lane.b32.xlu0 %v841, 16
        %v1824 = vpop.permute.xlu0 %1823
        %1825 = vrot.lane.b32.xlu0 %v842, 16
        %v1826 = vpop.permute.xlu0 %1825
        %1827 = vrot.lane.b32.xlu0 %v843, 16
        %v1828 = vpop.permute.xlu0 %1827
        %1829 = vrot.lane.b32.xlu0 %v844, 16
        %v1830 = vpop.permute.xlu0 %1829
        %1831 = vrot.lane.b32.xlu0 %v845, 16
        %v1832 = vpop.permute.xlu0 %1831
        %1833 = vrot.lane.b32.xlu0 %v846, 16
        %v1834 = vpop.permute.xlu0 %1833
        %1835 = vrot.lane.b32.xlu0 %v847, 16
        %v1836 = vpop.permute.xlu0 %1835
        %1837 = vrot.lane.b32.xlu0 %v848, 16
        %v1838 = vpop.permute.xlu0 %1837
        %1839 = vrot.lane.b32.xlu0 %v849, 16
        %v1840 = vpop.permute.xlu0 %1839
        %1841 = vrot.lane.b32.xlu0 %v850, 16
        %v1842 = vpop.permute.xlu0 %1841
        %v1875 = vsel %vm412, %v562, %v884
        %v1876 = vsel %vm412, %v563, %v886
        %v1877 = vsel %vm412, %v564, %v888
        %v1878 = vsel %vm412, %v565, %v890
        %v1879 = vsel %vm412, %v566, %v892
        %v1880 = vsel %vm412, %v567, %v894
        %v1881 = vsel %vm412, %v568, %v896
        %v1882 = vsel %vm412, %v569, %v898
        %v1883 = vsel %vm412, %v570, %v900
        %v1884 = vsel %vm412, %v571, %v902
        %v1885 = vsel %vm412, %v572, %v904
        %v1886 = vsel %vm412, %v573, %v906
        %v1887 = vsel %vm412, %v574, %v908
        %v1888 = vsel %vm412, %v575, %v910
        %v1889 = vsel %vm412, %v576, %v912
        %v1890 = vsel %vm412, %v577, %v914
        %v1891 = vsel %vm412, %v578, %v916
        %v1892 = vsel %vm412, %v579, %v918
        %v1893 = vsel %vm412, %v580, %v920
        %v1894 = vsel %vm412, %v581, %v922
        %v1895 = vsel %vm412, %v582, %v924
        %v1896 = vsel %vm412, %v583, %v926
        %v1897 = vsel %vm412, %v584, %v928
        %v1898 = vsel %vm412, %v585, %v930
        %v1899 = vsel %vm412, %v586, %v932
        %v1900 = vsel %vm412, %v587, %v934
        %v1901 = vsel %vm412, %v588, %v936
        %v1902 = vsel %vm412, %v589, %v938
        %v1903 = vsel %vm412, %v590, %v940
        %v1904 = vsel %vm412, %v591, %v942
        %v1905 = vsel %vm412, %v592, %v944
        %v1906 = vsel %vm412, %v593, %v946
        %vm1907 = vcmask 556032
        %v1908 = vsel %vm1907, %v1875, %v1012
        %v1909 = vsel %vm1907, %v1876, %v1014
        %v1910 = vsel %vm1907, %v1877, %v1016
        %v1911 = vsel %vm1907, %v1878, %v1018
        %v1912 = vsel %vm1907, %v1879, %v1020
        %v1913 = vsel %vm1907, %v1880, %v1022
        %v1914 = vsel %vm1907, %v1881, %v1024
        %v1915 = vsel %vm1907, %v1882, %v1026
        %v1916 = vsel %vm1907, %v1883, %v1028
        %v1917 = vsel %vm1907, %v1884, %v1030
        %v1918 = vsel %vm1907, %v1885, %v1032
        %v1919 = vsel %vm1907, %v1886, %v1034
        %v1920 = vsel %vm1907, %v1887, %v1036
        %v1921 = vsel %vm1907, %v1888, %v1038
        %v1922 = vsel %vm1907, %v1889, %v1040
        %v1923 = vsel %vm1907, %v1890, %v1042
        %v1924 = vsel %vm1907, %v1891, %v1044
        %v1925 = vsel %vm1907, %v1892, %v1046
        %v1926 = vsel %vm1907, %v1893, %v1048
        %v1927 = vsel %vm1907, %v1894, %v1050
        %v1928 = vsel %vm1907, %v1895, %v1052
        %v1929 = vsel %vm1907, %v1896, %v1054
        %v1930 = vsel %vm1907, %v1897, %v1056
        %v1931 = vsel %vm1907, %v1898, %v1058
        %v1932 = vsel %vm1907, %v1899, %v1060
        %v1933 = vsel %vm1907, %v1900, %v1062
        %v1934 = vsel %vm1907, %v1901, %v1064
        %v1935 = vsel %vm1907, %v1902, %v1066
        %v1936 = vsel %vm1907, %v1903, %v1068
        %v1937 = vsel %vm1907, %v1904, %v1070
        %v1938 = vsel %vm1907, %v1905, %v1072
        %v1939 = vsel %vm1907, %v1906, %v1074
        %vm1940 = vcmask 834560
        %v1941 = vsel %vm1940, %v1908, %v1140
        %v1942 = vsel %vm1940, %v1909, %v1142
        %v1943 = vsel %vm1940, %v1910, %v1144
        %v1944 = vsel %vm1940, %v1911, %v1146
        %v1945 = vsel %vm1940, %v1912, %v1148
        %v1946 = vsel %vm1940, %v1913, %v1150
        %v1947 = vsel %vm1940, %v1914, %v1152
        %v1948 = vsel %vm1940, %v1915, %v1154
        %v1949 = vsel %vm1940, %v1916, %v1156
        %v1950 = vsel %vm1940, %v1917, %v1158
        %v1951 = vsel %vm1940, %v1918, %v1160
        %v1952 = vsel %vm1940, %v1919, %v1162
        %v1953 = vsel %vm1940, %v1920, %v1164
        %v1954 = vsel %vm1940, %v1921, %v1166
        %v1955 = vsel %vm1940, %v1922, %v1168
        %v1956 = vsel %vm1940, %v1923, %v1170
        %v1957 = vsel %vm1940, %v1924, %v1172
        %v1958 = vsel %vm1940, %v1925, %v1174
        %v1959 = vsel %vm1940, %v1926, %v1176
        %v1960 = vsel %vm1940, %v1927, %v1178
        %v1961 = vsel %vm1940, %v1928, %v1180
        %v1962 = vsel %vm1940, %v1929, %v1182
        %v1963 = vsel %vm1940, %v1930, %v1184
        %v1964 = vsel %vm1940, %v1931, %v1186
        %v1965 = vsel %vm1940, %v1932, %v1188
        %v1966 = vsel %vm1940, %v1933, %v1190
        %v1967 = vsel %vm1940, %v1934, %v1192
        %v1968 = vsel %vm1940, %v1935, %v1194
        %v1969 = vsel %vm1940, %v1936, %v1196
        %v1970 = vsel %vm1940, %v1937, %v1198
        %v1971 = vsel %vm1940, %v1938, %v1200
        %v1972 = vsel %vm1940, %v1939, %v1202
        %vm1973 = vcmask 64512
        %v1974 = vsel %vm1973, %v1140, %v1268
        %v1975 = vsel %vm1973, %v1142, %v1270
        %v1976 = vsel %vm1973, %v1144, %v1272
        %v1977 = vsel %vm1973, %v1146, %v1274
        %v1978 = vsel %vm1973, %v1148, %v1276
        %v1979 = vsel %vm1973, %v1150, %v1278
        %v1980 = vsel %vm1973, %v1152, %v1280
        %v1981 = vsel %vm1973, %v1154, %v1282
        %v1982 = vsel %vm1973, %v1156, %v1284
        %v1983 = vsel %vm1973, %v1158, %v1286
        %v1984 = vsel %vm1973, %v1160, %v1288
        %v1985 = vsel %vm1973, %v1162, %v1290
        %v1986 = vsel %vm1973, %v1164, %v1292
        %v1987 = vsel %vm1973, %v1166, %v1294
        %v1988 = vsel %vm1973, %v1168, %v1296
        %v1989 = vsel %vm1973, %v1170, %v1298
        %v1990 = vsel %vm1973, %v1172, %v1300
        %v1991 = vsel %vm1973, %v1174, %v1302
        %v1992 = vsel %vm1973, %v1176, %v1304
        %v1993 = vsel %vm1973, %v1178, %v1306
        %v1994 = vsel %vm1973, %v1180, %v1308
        %v1995 = vsel %vm1973, %v1182, %v1310
        %v1996 = vsel %vm1973, %v1184, %v1312
        %v1997 = vsel %vm1973, %v1186, %v1314
        %v1998 = vsel %vm1973, %v1188, %v1316
        %v1999 = vsel %vm1973, %v1190, %v1318
        %v2000 = vsel %vm1973, %v1192, %v1320
        %v2001 = vsel %vm1973, %v1194, %v1322
        %v2002 = vsel %vm1973, %v1196, %v1324
        %v2003 = vsel %vm1973, %v1198, %v1326
        %v2004 = vsel %vm1973, %v1200, %v1328
        %v2005 = vsel %vm1973, %v1202, %v1330
        %vm2006 = vcmask 343040
        %v2007 = vsel %vm2006, %v1974, %v1396
        %v2008 = vsel %vm2006, %v1975, %v1398
        %v2009 = vsel %vm2006, %v1976, %v1400
        %v2010 = vsel %vm2006, %v1977, %v1402
        %v2011 = vsel %vm2006, %v1978, %v1404
        %v2012 = vsel %vm2006, %v1979, %v1406
        %v2013 = vsel %vm2006, %v1980, %v1408
        %v2014 = vsel %vm2006, %v1981, %v1410
        %v2015 = vsel %vm2006, %v1982, %v1412
        %v2016 = vsel %vm2006, %v1983, %v1414
        %v2017 = vsel %vm2006, %v1984, %v1416
        %v2018 = vsel %vm2006, %v1985, %v1418
        %v2019 = vsel %vm2006, %v1986, %v1420
        %v2020 = vsel %vm2006, %v1987, %v1422
        %v2021 = vsel %vm2006, %v1988, %v1424
        %v2022 = vsel %vm2006, %v1989, %v1426
        %v2023 = vsel %vm2006, %v1990, %v1428
        %v2024 = vsel %vm2006, %v1991, %v1430
        %v2025 = vsel %vm2006, %v1992, %v1432
        %v2026 = vsel %vm2006, %v1993, %v1434
        %v2027 = vsel %vm2006, %v1994, %v1436
        %v2028 = vsel %vm2006, %v1995, %v1438
        %v2029 = vsel %vm2006, %v1996, %v1440
        %v2030 = vsel %vm2006, %v1997, %v1442
        %v2031 = vsel %vm2006, %v1998, %v1444
        %v2032 = vsel %vm2006, %v1999, %v1446
        %v2033 = vsel %vm2006, %v2000, %v1448
        %v2034 = vsel %vm2006, %v2001, %v1450
        %v2035 = vsel %vm2006, %v2002, %v1452
        %v2036 = vsel %vm2006, %v2003, %v1454
        %v2037 = vsel %vm2006, %v2004, %v1456
        %v2038 = vsel %vm2006, %v2005, %v1458
        %vm2039 = vcmask 621568
        %v2040 = vsel %vm2039, %v2007, %v1524
        %v2041 = vsel %vm2039, %v2008, %v1526
        %v2042 = vsel %vm2039, %v2009, %v1528
        %v2043 = vsel %vm2039, %v2010, %v1530
        %v2044 = vsel %vm2039, %v2011, %v1532
        %v2045 = vsel %vm2039, %v2012, %v1534
        %v2046 = vsel %vm2039, %v2013, %v1536
        %v2047 = vsel %vm2039, %v2014, %v1538
        %v2048 = vsel %vm2039, %v2015, %v1540
        %v2049 = vsel %vm2039, %v2016, %v1542
        %v2050 = vsel %vm2039, %v2017, %v1544
        %v2051 = vsel %vm2039, %v2018, %v1546
        %v2052 = vsel %vm2039, %v2019, %v1548
        %v2053 = vsel %vm2039, %v2020, %v1550
        %v2054 = vsel %vm2039, %v2021, %v1552
        %v2055 = vsel %vm2039, %v2022, %v1554
        %v2056 = vsel %vm2039, %v2023, %v1556
        %v2057 = vsel %vm2039, %v2024, %v1558
        %v2058 = vsel %vm2039, %v2025, %v1560
        %v2059 = vsel %vm2039, %v2026, %v1562
        %v2060 = vsel %vm2039, %v2027, %v1564
        %v2061 = vsel %vm2039, %v2028, %v1566
        %v2062 = vsel %vm2039, %v2029, %v1568
        %v2063 = vsel %vm2039, %v2030, %v1570
        %v2064 = vsel %vm2039, %v2031, %v1572
        %v2065 = vsel %vm2039, %v2032, %v1574
        %v2066 = vsel %vm2039, %v2033, %v1576
        %v2067 = vsel %vm2039, %v2034, %v1578
        %v2068 = vsel %vm2039, %v2035, %v1580
        %v2069 = vsel %vm2039, %v2036, %v1582
        %v2070 = vsel %vm2039, %v2037, %v1584
        %v2071 = vsel %vm2039, %v2038, %v1586
        %vm2072 = vcmask 900096
        %v2073 = vsel %vm2072, %v2040, %v1652
        %v2074 = vsel %vm2072, %v2041, %v1654
        %v2075 = vsel %vm2072, %v2042, %v1656
        %v2076 = vsel %vm2072, %v2043, %v1658
        %v2077 = vsel %vm2072, %v2044, %v1660
        %v2078 = vsel %vm2072, %v2045, %v1662
        %v2079 = vsel %vm2072, %v2046, %v1664
        %v2080 = vsel %vm2072, %v2047, %v1666
        %v2081 = vsel %vm2072, %v2048, %v1668
        %v2082 = vsel %vm2072, %v2049, %v1670
        %v2083 = vsel %vm2072, %v2050, %v1672
        %v2084 = vsel %vm2072, %v2051, %v1674
        %v2085 = vsel %vm2072, %v2052, %v1676
        %v2086 = vsel %vm2072, %v2053, %v1678
        %v2087 = vsel %vm2072, %v2054, %v1680
        %v2088 = vsel %vm2072, %v2055, %v1682
        %v2089 = vsel %vm2072, %v2056, %v1684
        %v2090 = vsel %vm2072, %v2057, %v1686
        %v2091 = vsel %vm2072, %v2058, %v1688
        %v2092 = vsel %vm2072, %v2059, %v1690
        %v2093 = vsel %vm2072, %v2060, %v1692
        %v2094 = vsel %vm2072, %v2061, %v1694
        %v2095 = vsel %vm2072, %v2062, %v1696
        %v2096 = vsel %vm2072, %v2063, %v1698
        %v2097 = vsel %vm2072, %v2064, %v1700
        %v2098 = vsel %vm2072, %v2065, %v1702
        %v2099 = vsel %vm2072, %v2066, %v1704
        %v2100 = vsel %vm2072, %v2067, %v1706
        %v2101 = vsel %vm2072, %v2068, %v1708
        %v2102 = vsel %vm2072, %v2069, %v1710
        %v2103 = vsel %vm2072, %v2070, %v1712
        %v2104 = vsel %vm2072, %v2071, %v1714
        %vm2105 = vcmask 130048
        %v2106 = vsel %vm2105, %v1652, %v1780
        %v2107 = vsel %vm2105, %v1654, %v1782
        %v2108 = vsel %vm2105, %v1656, %v1784
        %v2109 = vsel %vm2105, %v1658, %v1786
        %v2110 = vsel %vm2105, %v1660, %v1788
        %v2111 = vsel %vm2105, %v1662, %v1790
        %v2112 = vsel %vm2105, %v1664, %v1792
        %v2113 = vsel %vm2105, %v1666, %v1794
        %v2114 = vsel %vm2105, %v1668, %v1796
        %v2115 = vsel %vm2105, %v1670, %v1798
        %v2116 = vsel %vm2105, %v1672, %v1800
        %v2117 = vsel %vm2105, %v1674, %v1802
        %v2118 = vsel %vm2105, %v1676, %v1804
        %v2119 = vsel %vm2105, %v1678, %v1806
        %v2120 = vsel %vm2105, %v1680, %v1808
        %v2121 = vsel %vm2105, %v1682, %v1810
        %v2122 = vsel %vm2105, %v1684, %v1812
        %v2123 = vsel %vm2105, %v1686, %v1814
        %v2124 = vsel %vm2105, %v1688, %v1816
        %v2125 = vsel %vm2105, %v1690, %v1818
        %v2126 = vsel %vm2105, %v1692, %v1820
        %v2127 = vsel %vm2105, %v1694, %v1822
        %v2128 = vsel %vm2105, %v1696, %v1824
        %v2129 = vsel %vm2105, %v1698, %v1826
        %v2130 = vsel %vm2105, %v1700, %v1828
        %v2131 = vsel %vm2105, %v1702, %v1830
        %v2132 = vsel %vm2105, %v1704, %v1832
        %v2133 = vsel %vm2105, %v1706, %v1834
        %v2134 = vsel %vm2105, %v1708, %v1836
        %v2135 = vsel %vm2105, %v1710, %v1838
        %v2136 = vsel %vm2105, %v1712, %v1840
        %v2137 = vsel %vm2105, %v1714, %v1842
        %v2138 = vpack.c.bf16 %v1942, %v1941
        %v2139 = vpack.c.bf16 %v2074, %v2073
        %v2140 = vpack.c.bf16 %v2107, %v2106
        %v2141 = vpack.c.bf16 %v1944, %v1943
        %v2142 = vpack.c.bf16 %v2076, %v2075
        %v2143 = vpack.c.bf16 %v2109, %v2108
        %v2144 = vpack.c.bf16 %v1946, %v1945
        %v2145 = vpack.c.bf16 %v2078, %v2077
        %v2146 = vpack.c.bf16 %v2111, %v2110
        %v2147 = vpack.c.bf16 %v1948, %v1947
        %v2148 = vpack.c.bf16 %v2080, %v2079
        %v2149 = vpack.c.bf16 %v2113, %v2112
        %v2150 = vpack.c.bf16 %v1950, %v1949
        %v2151 = vpack.c.bf16 %v2082, %v2081
        %v2152 = vpack.c.bf16 %v2115, %v2114
        %v2153 = vpack.c.bf16 %v1952, %v1951
        %v2154 = vpack.c.bf16 %v2084, %v2083
        %v2155 = vpack.c.bf16 %v2117, %v2116
        %v2156 = vpack.c.bf16 %v1954, %v1953
        %v2157 = vpack.c.bf16 %v2086, %v2085
        %v2158 = vpack.c.bf16 %v2119, %v2118
        %v2159 = vpack.c.bf16 %v1956, %v1955
        %v2160 = vpack.c.bf16 %v2088, %v2087
        %v2161 = vpack.c.bf16 %v2121, %v2120
        %v2162 = vpack.c.bf16 %v1958, %v1957
        %v2163 = vpack.c.bf16 %v2090, %v2089
        %v2164 = vpack.c.bf16 %v2123, %v2122
        %v2165 = vpack.c.bf16 %v1960, %v1959
        %v2166 = vpack.c.bf16 %v2092, %v2091
        %v2167 = vpack.c.bf16 %v2125, %v2124
        %v2168 = vpack.c.bf16 %v1962, %v1961
        %v2169 = vpack.c.bf16 %v2094, %v2093
        %v2170 = vpack.c.bf16 %v2127, %v2126
        %v2171 = vpack.c.bf16 %v1964, %v1963
        %v2172 = vpack.c.bf16 %v2096, %v2095
        %v2173 = vpack.c.bf16 %v2129, %v2128
        %v2174 = vpack.c.bf16 %v1966, %v1965
        %v2175 = vpack.c.bf16 %v2098, %v2097
        %v2176 = vpack.c.bf16 %v2131, %v2130
        %v2177 = vpack.c.bf16 %v1968, %v1967
        %v2178 = vpack.c.bf16 %v2100, %v2099
        %v2179 = vpack.c.bf16 %v2133, %v2132
        %v2180 = vpack.c.bf16 %v1970, %v1969
        %v2181 = vpack.c.bf16 %v2102, %v2101
        %v2182 = vpack.c.bf16 %v2135, %v2134
        %v2183 = vpack.c.bf16 %v1972, %v1971
        %v2184 = vpack.c.bf16 %v2104, %v2103
        %v2185 = vpack.c.bf16 %v2137, %v2136
        %v2186 = vld [vmem:[%s2] sm:$0xf]
        %v2187 = vld [vmem:[%s2 + $0x4] sm:$0xf]
        %v2188 = vld [vmem:[%s2 + $0x8] sm:$0xf]
        %v2189 = vld [vmem:[%s2 + $0xc] sm:$0xf]
        %v2190 = vld [vmem:[%s2 + $0x10] sm:$0xf]
        %v2191 = vld [vmem:[%s2 + $0x14] sm:$0xf]
        %v2192 = vld [vmem:[%s2 + $0x18] sm:$0xf]
        %v2193 = vld [vmem:[%s2 + $0x1c] sm:$0xf]
        %v2194 = vld [vmem:[%s2 + $0x20] sm:$0xf]
        %v2195 = vld [vmem:[%s2 + $0x24] sm:$0xf]
        %v2196 = vld [vmem:[%s2 + $0x28] sm:$0xf]
        %v2197 = vld [vmem:[%s2 + $0x2c] sm:$0xf]
        %v2198 = vld [vmem:[%s2 + $0x30] sm:$0xf]
        %v2199 = vld [vmem:[%s2 + $0x34] sm:$0xf]
        %v2200 = vld [vmem:[%s2 + $0x38] sm:$0xf]
        %v2201 = vld [vmem:[%s2 + $0x3c] sm:$0xf]
        %v2202 = vld [vmem:[%s2 + $0x40] sm:$0xf]
        %v2203 = vld [vmem:[%s2 + $0x44] sm:$0xf]
        %v2204 = vld [vmem:[%s2 + $0x48] sm:$0xf]
        %v2205 = vld [vmem:[%s2 + $0x4c] sm:$0xf]
        %v2206 = vld [vmem:[%s2 + $0x50] sm:$0xf]
        %v2207 = vld [vmem:[%s2 + $0x54] sm:$0xf]
        %v2208 = vld [vmem:[%s2 + $0x58] sm:$0xf]
        %v2209 = vld [vmem:[%s2 + $0x5c] sm:$0xf]
        %v2210 = vld [vmem:[%s2 + $0x60] sm:$0xf]
        %v2211 = vld [vmem:[%s2 + $0x64] sm:$0xf]
        %v2212 = vld [vmem:[%s2 + $0x68] sm:$0xf]
        %v2213 = vld [vmem:[%s2 + $0x6c] sm:$0xf]
        %v2214 = vld [vmem:[%s2 + $0x70] sm:$0xf]
        %v2215 = vld [vmem:[%s2 + $0x74] sm:$0xf]
        %v2216 = vld [vmem:[%s2 + $0x78] sm:$0xf]
        %v2217 = vld [vmem:[%s2 + $0x7c] sm:$0xf]
        %v2218 = vld [vmem:[%s2 + $0x80] sm:$0xf]
        %v2219 = vld [vmem:[%s2 + $0x84] sm:$0xf]
        %v2220 = vld [vmem:[%s2 + $0x88] sm:$0xf]
        %v2221 = vld [vmem:[%s2 + $0x8c] sm:$0xf]
        %v2222 = vld [vmem:[%s2 + $0x90] sm:$0xf]
        %v2223 = vld [vmem:[%s2 + $0x94] sm:$0xf]
        %v2224 = vld [vmem:[%s2 + $0x98] sm:$0x1]
        %v2225 = vld [vmem:[%s3] sm:$0x1]
        %v2227 = vperm.slane %v2225, 0
        %v2268 = vunpack.c.l.b16 %v2186
        %v2269 = vunpack.c.l.b16 %v2187
        %v2270 = vunpack.c.l.b16 %v2188
        %v2271 = vunpack.c.l.b16 %v2189
        %v2272 = vunpack.c.l.b16 %v2190
        %v2273 = vunpack.c.l.b16 %v2191
        %v2274 = vunpack.c.l.b16 %v2192
        %v2275 = vunpack.c.l.b16 %v2193
        %v2276 = vunpack.c.l.b16 %v2194
        %v2277 = vunpack.c.l.b16 %v2195
        %v2278 = vunpack.c.l.b16 %v2196
        %v2279 = vunpack.c.l.b16 %v2197
        %v2280 = vunpack.c.l.b16 %v2198
        %v2281 = vunpack.c.l.b16 %v2199
        %v2282 = vunpack.c.l.b16 %v2200
        %v2283 = vunpack.c.l.b16 %v2201
        %v2284 = vunpack.c.l.b16 %v2202
        %v2285 = vunpack.c.l.b16 %v2203
        %v2286 = vunpack.c.l.b16 %v2204
        %v2287 = vunpack.c.l.b16 %v2205
        %v2288 = vunpack.c.l.b16 %v2206
        %v2289 = vunpack.c.l.b16 %v2207
        %v2290 = vunpack.c.l.b16 %v2208
        %v2291 = vunpack.c.l.b16 %v2209
        %v2292 = vunpack.c.l.b16 %v2210
        %v2293 = vunpack.c.l.b16 %v2211
        %v2294 = vunpack.c.l.b16 %v2212
        %v2295 = vunpack.c.l.b16 %v2213
        %v2296 = vunpack.c.l.b16 %v2214
        %v2297 = vunpack.c.l.b16 %v2215
        %v2298 = vunpack.c.l.b16 %v2216
        %v2299 = vunpack.c.l.b16 %v2217
        %v2300 = vunpack.c.l.b16 %v2218
        %v2301 = vunpack.c.l.b16 %v2219
        %v2302 = vunpack.c.l.b16 %v2220
        %v2303 = vunpack.c.l.b16 %v2221
        %v2304 = vunpack.c.l.b16 %v2222
        %v2305 = vunpack.c.l.b16 %v2223
        %v2306 = vunpack.c.l.b16 %v2224
        %v2307 = vpack.c.b16 %v2269, %v2268
        %v2308 = vpack.c.b16 %v2271, %v2270
        %v2309 = vpack.c.b16 %v2273, %v2272
        %v2310 = vpack.c.b16 %v2275, %v2274
        %v2311 = vpack.c.b16 %v2277, %v2276
        %v2312 = vpack.c.b16 %v2279, %v2278
        %v2313 = vpack.c.b16 %v2281, %v2280
        %v2314 = vpack.c.b16 %v2283, %v2282
        %v2315 = vpack.c.b16 %v2285, %v2284
        %v2316 = vpack.c.b16 %v2287, %v2286
        %v2317 = vpack.c.b16 %v2289, %v2288
        %v2318 = vpack.c.b16 %v2291, %v2290
        %v2319 = vpack.c.b16 %v2293, %v2292
        %v2320 = vpack.c.b16 %v2295, %v2294
        %v2321 = vpack.c.b16 %v2297, %v2296
        %v2322 = vpack.c.b16 %v2299, %v2298
        %v2323 = vpack.c.b16 %v2301, %v2300
        %v2324 = vpack.c.b16 %v2303, %v2302
        %v2325 = vpack.c.b16 %v2305, %v2304
        %v2326 = vpack.c.b16 %v2306, %v2306
        %vm2346 = vcmask 408576
        %v2348 = vsel %vm2346, %v2140, 0
        %v2351 = vsel %vm2346, %v2143, 0
        %v2354 = vsel %vm2346, %v2146, 0
        %v2357 = vsel %vm2346, %v2149, 0
        %v2360 = vsel %vm2346, %v2152, 0
        %v2363 = vsel %vm2346, %v2155, 0
        %v2366 = vsel %vm2346, %v2158, 0
        %v2369 = vsel %vm2346, %v2161, 0
        %v2372 = vsel %vm2346, %v2164, 0
        %v2375 = vsel %vm2346, %v2167, 0
        %v2378 = vsel %vm2346, %v2170, 0
        %v2381 = vsel %vm2346, %v2173, 0
        %v2384 = vsel %vm2346, %v2176, 0
        %v2387 = vsel %vm2346, %v2179, 0
        %v2390 = vsel %vm2346, %v2182, 0
        %v2393 = vsel %vm2346, %v2185, 0
        %vm2395 = vcmask 1040384
        %v2397 = vsel %vm2395, %v2326, 0
        %2399 = vmatpush.bf16.msra.mxu0 %v2314
        %2400 = vmatpush.bf16.msra.mxu0 %v2313
        %2401 = vmatpush.bf16.msra.mxu0 %v2312
        %2402 = vmatpush.bf16.msra.mxu0 %v2311
        %2403 = vmatpush.bf16.msra.mxu0 %v2310
        %2404 = vmatpush.bf16.msra.mxu0 %v2309
        %2405 = vmatpush.bf16.msra.mxu0 %v2308
        %2406 = vmatpush.bf16.msra.mxu0 %v2307
        %2407 = vmatmul.bf16.gmra.mxu0 %v2138
        %v2408 = vpop.f32.mrf.mxu0
        %v2409 = vadd.f32 %v2227, %v2408
        %v2410 = vpop.f32.mrf.mxu0
        %v2411 = vadd.f32 %v2227, %v2410
        %2412 = vmatmul.bf16.gmra.mxu0 %v2141
        %v2413 = vpop.f32.mrf.mxu0
        %v2414 = vadd.f32 %v2227, %v2413
        %v2415 = vpop.f32.mrf.mxu0
        %v2416 = vadd.f32 %v2227, %v2415
        %2417 = vmatmul.bf16.gmra.mxu0 %v2144
        %v2418 = vpop.f32.mrf.mxu0
        %v2419 = vadd.f32 %v2227, %v2418
        %v2420 = vpop.f32.mrf.mxu0
        %v2421 = vadd.f32 %v2227, %v2420
        %2422 = vmatmul.bf16.gmra.mxu0 %v2147
        %v2423 = vpop.f32.mrf.mxu0
        %v2424 = vadd.f32 %v2227, %v2423
        %v2425 = vpop.f32.mrf.mxu0
        %v2426 = vadd.f32 %v2227, %v2425
        %2427 = vmatmul.bf16.gmra.mxu0 %v2150
        %v2428 = vpop.f32.mrf.mxu0
        %v2429 = vadd.f32 %v2227, %v2428
        %v2430 = vpop.f32.mrf.mxu0
        %v2431 = vadd.f32 %v2227, %v2430
        %2432 = vmatmul.bf16.gmra.mxu0 %v2153
        %v2433 = vpop.f32.mrf.mxu0
        %v2434 = vadd.f32 %v2227, %v2433
        %v2435 = vpop.f32.mrf.mxu0
        %v2436 = vadd.f32 %v2227, %v2435
        %2437 = vmatmul.bf16.gmra.mxu0 %v2156
        %v2438 = vpop.f32.mrf.mxu0
        %v2439 = vadd.f32 %v2227, %v2438
        %v2440 = vpop.f32.mrf.mxu0
        %v2441 = vadd.f32 %v2227, %v2440
        %2442 = vmatmul.bf16.gmra.mxu0 %v2159
        %v2443 = vpop.f32.mrf.mxu0
        %v2444 = vadd.f32 %v2227, %v2443
        %v2445 = vpop.f32.mrf.mxu0
        %v2446 = vadd.f32 %v2227, %v2445
        %2447 = vmatmul.bf16.gmra.mxu0 %v2162
        %v2448 = vpop.f32.mrf.mxu0
        %v2449 = vadd.f32 %v2227, %v2448
        %v2450 = vpop.f32.mrf.mxu0
        %v2451 = vadd.f32 %v2227, %v2450
        %2452 = vmatmul.bf16.gmra.mxu0 %v2165
        %v2453 = vpop.f32.mrf.mxu0
        %v2454 = vadd.f32 %v2227, %v2453
        %v2455 = vpop.f32.mrf.mxu0
        %v2456 = vadd.f32 %v2227, %v2455
        %2457 = vmatmul.bf16.gmra.mxu0 %v2168
        %v2458 = vpop.f32.mrf.mxu0
        %v2459 = vadd.f32 %v2227, %v2458
        %v2460 = vpop.f32.mrf.mxu0
        %v2461 = vadd.f32 %v2227, %v2460
        %2462 = vmatmul.bf16.gmra.mxu0 %v2171
        %v2463 = vpop.f32.mrf.mxu0
        %v2464 = vadd.f32 %v2227, %v2463
        %v2465 = vpop.f32.mrf.mxu0
        %v2466 = vadd.f32 %v2227, %v2465
        %2467 = vmatmul.bf16.gmra.mxu0 %v2174
        %v2468 = vpop.f32.mrf.mxu0
        %v2469 = vadd.f32 %v2227, %v2468
        %v2470 = vpop.f32.mrf.mxu0
        %v2471 = vadd.f32 %v2227, %v2470
        %2472 = vmatmul.bf16.gmra.mxu0 %v2177
        %v2473 = vpop.f32.mrf.mxu0
        %v2474 = vadd.f32 %v2227, %v2473
        %v2475 = vpop.f32.mrf.mxu0
        %v2476 = vadd.f32 %v2227, %v2475
        %2477 = vmatmul.bf16.gmra.mxu0 %v2180
        %v2478 = vpop.f32.mrf.mxu0
        %v2479 = vadd.f32 %v2227, %v2478
        %v2480 = vpop.f32.mrf.mxu0
        %v2481 = vadd.f32 %v2227, %v2480
        %2482 = vmatmul.bf16.gmra.mxu0 %v2183
        %v2483 = vpop.f32.mrf.mxu0
        %v2484 = vadd.f32 %v2227, %v2483
        %v2485 = vpop.f32.mrf.mxu0
        %v2486 = vadd.f32 %v2227, %v2485
        %2487 = vdwg.mxu0
        %2488 = vmatpush.bf16.msra.mxu0 %v2322
        %2489 = vmatpush.bf16.msra.mxu0 %v2321
        %2490 = vmatpush.bf16.msra.mxu0 %v2320
        %2491 = vmatpush.bf16.msra.mxu0 %v2319
        %2492 = vmatpush.bf16.msra.mxu0 %v2318
        %2493 = vmatpush.bf16.msra.mxu0 %v2317
        %2494 = vmatpush.bf16.msra.mxu0 %v2316
        %2495 = vmatpush.bf16.msra.mxu0 %v2315
        %2496 = vmatmul.bf16.gmra.mxu0 %v2139
        %v2497 = vpop.f32.mrf.mxu0
        %v2498 = vadd.f32 %v2409, %v2497
        %v2499 = vpop.f32.mrf.mxu0
        %v2500 = vadd.f32 %v2411, %v2499
        %2501 = vmatmul.bf16.gmra.mxu0 %v2142
        %v2502 = vpop.f32.mrf.mxu0
        %v2503 = vadd.f32 %v2414, %v2502
        %v2504 = vpop.f32.mrf.mxu0
        %v2505 = vadd.f32 %v2416, %v2504
        %2506 = vmatmul.bf16.gmra.mxu0 %v2145
        %v2507 = vpop.f32.mrf.mxu0
        %v2508 = vadd.f32 %v2419, %v2507
        %v2509 = vpop.f32.mrf.mxu0
        %v2510 = vadd.f32 %v2421, %v2509
        %2511 = vmatmul.bf16.gmra.mxu0 %v2148
        %v2512 = vpop.f32.mrf.mxu0
        %v2513 = vadd.f32 %v2424, %v2512
        %v2514 = vpop.f32.mrf.mxu0
        %v2515 = vadd.f32 %v2426, %v2514
        %2516 = vmatmul.bf16.gmra.mxu0 %v2151
        %v2517 = vpop.f32.mrf.mxu0
        %v2518 = vadd.f32 %v2429, %v2517
        %v2519 = vpop.f32.mrf.mxu0
        %v2520 = vadd.f32 %v2431, %v2519
        %2521 = vmatmul.bf16.gmra.mxu0 %v2154
        %v2522 = vpop.f32.mrf.mxu0
        %v2523 = vadd.f32 %v2434, %v2522
        %v2524 = vpop.f32.mrf.mxu0
        %v2525 = vadd.f32 %v2436, %v2524
        %2526 = vmatmul.bf16.gmra.mxu0 %v2157
        %v2527 = vpop.f32.mrf.mxu0
        %v2528 = vadd.f32 %v2439, %v2527
        %v2529 = vpop.f32.mrf.mxu0
        %v2530 = vadd.f32 %v2441, %v2529
        %2531 = vmatmul.bf16.gmra.mxu0 %v2160
        %v2532 = vpop.f32.mrf.mxu0
        %v2533 = vadd.f32 %v2444, %v2532
        %v2534 = vpop.f32.mrf.mxu0
        %v2535 = vadd.f32 %v2446, %v2534
        %2536 = vmatmul.bf16.gmra.mxu0 %v2163
        %v2537 = vpop.f32.mrf.mxu0
        %v2538 = vadd.f32 %v2449, %v2537
        %v2539 = vpop.f32.mrf.mxu0
        %v2540 = vadd.f32 %v2451, %v2539
        %2541 = vmatmul.bf16.gmra.mxu0 %v2166
        %v2542 = vpop.f32.mrf.mxu0
        %v2543 = vadd.f32 %v2454, %v2542
        %v2544 = vpop.f32.mrf.mxu0
        %v2545 = vadd.f32 %v2456, %v2544
        %2546 = vmatmul.bf16.gmra.mxu0 %v2169
        %v2547 = vpop.f32.mrf.mxu0
        %v2548 = vadd.f32 %v2459, %v2547
        %v2549 = vpop.f32.mrf.mxu0
        %v2550 = vadd.f32 %v2461, %v2549
        %2551 = vmatmul.bf16.gmra.mxu0 %v2172
        %v2552 = vpop.f32.mrf.mxu0
        %v2553 = vadd.f32 %v2464, %v2552
        %v2554 = vpop.f32.mrf.mxu0
        %v2555 = vadd.f32 %v2466, %v2554
        %2556 = vmatmul.bf16.gmra.mxu0 %v2175
        %v2557 = vpop.f32.mrf.mxu0
        %v2558 = vadd.f32 %v2469, %v2557
        %v2559 = vpop.f32.mrf.mxu0
        %v2560 = vadd.f32 %v2471, %v2559
        %2561 = vmatmul.bf16.gmra.mxu0 %v2178
        %v2562 = vpop.f32.mrf.mxu0
        %v2563 = vadd.f32 %v2474, %v2562
        %v2564 = vpop.f32.mrf.mxu0
        %v2565 = vadd.f32 %v2476, %v2564
        %2566 = vmatmul.bf16.gmra.mxu0 %v2181
        %v2567 = vpop.f32.mrf.mxu0
        %v2568 = vadd.f32 %v2479, %v2567
        %v2569 = vpop.f32.mrf.mxu0
        %v2570 = vadd.f32 %v2481, %v2569
        %2571 = vmatmul.bf16.gmra.mxu0 %v2184
        %v2572 = vpop.f32.mrf.mxu0
        %v2573 = vadd.f32 %v2484, %v2572
        %v2574 = vpop.f32.mrf.mxu0
        %v2575 = vadd.f32 %v2486, %v2574
        %2576 = vdwg.mxu0
        %2577 = vmatpush.bf16.msra.mxu0 0
        %2578 = vmatpush.bf16.msra.mxu0 0
        %2579 = vmatpush.bf16.msra.mxu0 0
        %2580 = vmatpush.bf16.msra.mxu0 0
        %2581 = vmatpush.bf16.msra.mxu0 %v2397
        %2582 = vmatpush.bf16.msra.mxu0 %v2325
        %2583 = vmatpush.bf16.msra.mxu0 %v2324
        %2584 = vmatpush.bf16.msra.mxu0 %v2323
        %2585 = vmatmul.bf16.gmra.mxu0 %v2348
        %v2586 = vpop.f32.mrf.mxu0
        %v2587 = vadd.f32 %v2498, %v2586
        %v2588 = vpop.f32.mrf.mxu0
        %v2589 = vadd.f32 %v2500, %v2588
        %2590 = vmatmul.bf16.gmra.mxu0 %v2351
        %v2591 = vpop.f32.mrf.mxu0
        %v2592 = vadd.f32 %v2503, %v2591
        %v2593 = vpop.f32.mrf.mxu0
        %v2594 = vadd.f32 %v2505, %v2593
        %2595 = vmatmul.bf16.gmra.mxu0 %v2354
        %v2596 = vpop.f32.mrf.mxu0
        %v2597 = vadd.f32 %v2508, %v2596
        %v2598 = vpop.f32.mrf.mxu0
        %v2599 = vadd.f32 %v2510, %v2598
        %2600 = vmatmul.bf16.gmra.mxu0 %v2357
        %v2601 = vpop.f32.mrf.mxu0
        %v2602 = vadd.f32 %v2513, %v2601
        %v2603 = vpop.f32.mrf.mxu0
        %v2604 = vadd.f32 %v2515, %v2603
        %2605 = vmatmul.bf16.gmra.mxu0 %v2360
        %v2606 = vpop.f32.mrf.mxu0
        %v2607 = vadd.f32 %v2518, %v2606
        %v2608 = vpop.f32.mrf.mxu0
        %v2609 = vadd.f32 %v2520, %v2608
        %2610 = vmatmul.bf16.gmra.mxu0 %v2363
        %v2611 = vpop.f32.mrf.mxu0
        %v2612 = vadd.f32 %v2523, %v2611
        %v2613 = vpop.f32.mrf.mxu0
        %v2614 = vadd.f32 %v2525, %v2613
        %2615 = vmatmul.bf16.gmra.mxu0 %v2366
        %v2616 = vpop.f32.mrf.mxu0
        %v2617 = vadd.f32 %v2528, %v2616
        %v2618 = vpop.f32.mrf.mxu0
        %v2619 = vadd.f32 %v2530, %v2618
        %2620 = vmatmul.bf16.gmra.mxu0 %v2369
        %v2621 = vpop.f32.mrf.mxu0
        %v2622 = vadd.f32 %v2533, %v2621
        %v2623 = vpop.f32.mrf.mxu0
        %v2624 = vadd.f32 %v2535, %v2623
        %2625 = vmatmul.bf16.gmra.mxu0 %v2372
        %v2626 = vpop.f32.mrf.mxu0
        %v2627 = vadd.f32 %v2538, %v2626
        %v2628 = vpop.f32.mrf.mxu0
        %v2629 = vadd.f32 %v2540, %v2628
        %2630 = vmatmul.bf16.gmra.mxu0 %v2375
        %v2631 = vpop.f32.mrf.mxu0
        %v2632 = vadd.f32 %v2543, %v2631
        %v2633 = vpop.f32.mrf.mxu0
        %v2634 = vadd.f32 %v2545, %v2633
        %2635 = vmatmul.bf16.gmra.mxu0 %v2378
        %v2636 = vpop.f32.mrf.mxu0
        %v2637 = vadd.f32 %v2548, %v2636
        %v2638 = vpop.f32.mrf.mxu0
        %v2639 = vadd.f32 %v2550, %v2638
        %2640 = vmatmul.bf16.gmra.mxu0 %v2381
        %v2641 = vpop.f32.mrf.mxu0
        %v2642 = vadd.f32 %v2553, %v2641
        %v2643 = vpop.f32.mrf.mxu0
        %v2644 = vadd.f32 %v2555, %v2643
        %2645 = vmatmul.bf16.gmra.mxu0 %v2384
        %v2646 = vpop.f32.mrf.mxu0
        %v2647 = vadd.f32 %v2558, %v2646
        %v2648 = vpop.f32.mrf.mxu0
        %v2649 = vadd.f32 %v2560, %v2648
        %2650 = vmatmul.bf16.gmra.mxu0 %v2387
        %v2651 = vpop.f32.mrf.mxu0
        %v2652 = vadd.f32 %v2563, %v2651
        %v2653 = vpop.f32.mrf.mxu0
        %v2654 = vadd.f32 %v2565, %v2653
        %2655 = vmatmul.bf16.gmra.mxu0 %v2390
        %v2656 = vpop.f32.mrf.mxu0
        %v2657 = vadd.f32 %v2568, %v2656
        %v2658 = vpop.f32.mrf.mxu0
        %v2659 = vadd.f32 %v2570, %v2658
        %2660 = vmatmul.bf16.gmra.mxu0 %v2393
        %v2661 = vpop.f32.mrf.mxu0
        %v2662 = vadd.f32 %v2573, %v2661
        %v2663 = vpop.f32.mrf.mxu0
        %v2664 = vadd.f32 %v2575, %v2663
        %2665 = vdwg.mxu0
        %v2666 = vmax.f32 %v2587, 0.0
        %v2667 = vmax.f32 %v2589, 0.0
        %v2668 = vmax.f32 %v2592, 0.0
        %v2669 = vmax.f32 %v2594, 0.0
        %v2670 = vmax.f32 %v2597, 0.0
        %v2671 = vmax.f32 %v2599, 0.0
        %v2672 = vmax.f32 %v2602, 0.0
        %v2673 = vmax.f32 %v2604, 0.0
        %v2674 = vmax.f32 %v2607, 0.0
        %v2675 = vmax.f32 %v2609, 0.0
        %v2676 = vmax.f32 %v2612, 0.0
        %v2677 = vmax.f32 %v2614, 0.0
        %v2678 = vmax.f32 %v2617, 0.0
        %v2679 = vmax.f32 %v2619, 0.0
        %v2680 = vmax.f32 %v2622, 0.0
        %v2681 = vmax.f32 %v2624, 0.0
        %v2682 = vmax.f32 %v2627, 0.0
        %v2683 = vmax.f32 %v2629, 0.0
        %v2684 = vmax.f32 %v2632, 0.0
        %v2685 = vmax.f32 %v2634, 0.0
        %v2686 = vmax.f32 %v2637, 0.0
        %v2687 = vmax.f32 %v2639, 0.0
        %v2688 = vmax.f32 %v2642, 0.0
        %v2689 = vmax.f32 %v2644, 0.0
        %v2690 = vmax.f32 %v2647, 0.0
        %v2691 = vmax.f32 %v2649, 0.0
        %v2692 = vmax.f32 %v2652, 0.0
        %v2693 = vmax.f32 %v2654, 0.0
        %v2694 = vmax.f32 %v2657, 0.0
        %v2695 = vmax.f32 %v2659, 0.0
        %v2696 = vmax.f32 %v2662, 0.0
        %v2697 = vmax.f32 %v2664, 0.0
        %vm2698 = vcmask 261120
        %2699 = vst.msk [vmem:[#allocation3] sm:$0xff] %vm2698, 0.0
        %2700 = vst.msk [vmem:[#allocation3 + $0x8] sm:$0xff] %vm2698, 0.0
        %vm2701 = vcmask 254976
        %2702 = vst.msk [vmem:[#allocation3 + $0x10] sm:$0x3] %vm2701, 0.0
        %s2703 = scalar_lea.vmem [#allocation3], 408
        %2704 = vst.msk [vmem:[%s2703] sm:$0xff] %vm2698, 0.0
        %2705 = vst.msk [vmem:[%s2703 + $0x8] sm:$0xff] %vm2698, 0.0
        %2706 = vst.msk [vmem:[%s2703 + $0x10] sm:$0x3] %vm2701, 0.0
        %vm2707 = vcmask 253952
        %2708 = vst.msk [vmem:[#allocation3] sm:$0x1] %vm2707, 0.0
        %2709 = vst.msk [vmem:[#allocation3 + $0x18] sm:$0x1] %vm2707, 0.0
        %2710 = vst.msk [vmem:[#allocation3 + $0x30] sm:$0x1] %vm2707, 0.0
        %2711 = vst.msk [vmem:[#allocation3 + $0x48] sm:$0x1] %vm2707, 0.0
        %2712 = vst.msk [vmem:[#allocation3 + $0x60] sm:$0x1] %vm2707, 0.0
        %2713 = vst.msk [vmem:[#allocation3 + $0x78] sm:$0x1] %vm2707, 0.0
        %2714 = vst.msk [vmem:[#allocation3 + $0x90] sm:$0x1] %vm2707, 0.0
        %2715 = vst.msk [vmem:[#allocation3 + $0xa8] sm:$0x1] %vm2707, 0.0
        %2716 = vst.msk [vmem:[#allocation3 + $0xc0] sm:$0x1] %vm2707, 0.0
        %2717 = vst.msk [vmem:[#allocation3 + $0xd8] sm:$0x1] %vm2707, 0.0
        %2718 = vst.msk [vmem:[#allocation3 + $0xf0] sm:$0x1] %vm2707, 0.0
        %2719 = vst.msk [vmem:[#allocation3 + $0x108] sm:$0x1] %vm2707, 0.0
        %2720 = vst.msk [vmem:[#allocation3 + $0x120] sm:$0x1] %vm2707, 0.0
        %2721 = vst.msk [vmem:[#allocation3 + $0x138] sm:$0x1] %vm2707, 0.0
        %2722 = vst.msk [vmem:[#allocation3 + $0x150] sm:$0x1] %vm2707, 0.0
        %2723 = vst.msk [vmem:[#allocation3 + $0x168] sm:$0x1] %vm2707, 0.0
        %2724 = vst.msk [vmem:[#allocation3 + $0x180] sm:$0x1] %vm2707, 0.0
        %2725 = vst.msk [vmem:[#allocation3 + $0x198] sm:$0x1] %vm2707, 0.0
        %2726 = vst.msk [vmem:[#allocation3 + $0x11] sm:$0x1] %vm2707, 0.0
        %2727 = vst.msk [vmem:[#allocation3 + $0x29] sm:$0x1] %vm2707, 0.0
        %2728 = vst.msk [vmem:[#allocation3 + $0x41] sm:$0x1] %vm2707, 0.0
        %2729 = vst.msk [vmem:[#allocation3 + $0x59] sm:$0x1] %vm2707, 0.0
        %2730 = vst.msk [vmem:[#allocation3 + $0x71] sm:$0x1] %vm2707, 0.0
        %2731 = vst.msk [vmem:[#allocation3 + $0x89] sm:$0x1] %vm2707, 0.0
        %2732 = vst.msk [vmem:[#allocation3 + $0xa1] sm:$0x1] %vm2707, 0.0
        %2733 = vst.msk [vmem:[#allocation3 + $0xb9] sm:$0x1] %vm2707, 0.0
        %2734 = vst.msk [vmem:[#allocation3 + $0xd1] sm:$0x1] %vm2707, 0.0
        %2735 = vst.msk [vmem:[#allocation3 + $0xe9] sm:$0x1] %vm2707, 0.0
        %2736 = vst.msk [vmem:[#allocation3 + $0x101] sm:$0x1] %vm2707, 0.0
        %2737 = vst.msk [vmem:[#allocation3 + $0x119] sm:$0x1] %vm2707, 0.0
        %2738 = vst.msk [vmem:[#allocation3 + $0x131] sm:$0x1] %vm2707, 0.0
        %2739 = vst.msk [vmem:[#allocation3 + $0x149] sm:$0x1] %vm2707, 0.0
        %2740 = vst.msk [vmem:[#allocation3 + $0x161] sm:$0x1] %vm2707, 0.0
        %2741 = vst.msk [vmem:[#allocation3 + $0x179] sm:$0x1] %vm2707, 0.0
        %2742 = vst.msk [vmem:[#allocation3 + $0x191] sm:$0x1] %vm2707, 0.0
        %2743 = vst.msk [vmem:[#allocation3 + $0x1a9] sm:$0x1] %vm2707, 0.0
        %s2744 = scalar_lea.vmem [#allocation3], 24
        %2745 = vst.msk [vmem:[%s2744 + $0x1] sm:$0xff] %vm2698, %v2666
        %2746 = vst.msk [vmem:[%s2744 + $0x9] sm:$0xff] %vm2698, %v2667
        %2747 = vst.msk [vmem:[%s2744 + $0x19] sm:$0xff] %vm2698, %v2668
        %2748 = vst.msk [vmem:[%s2744 + $0x21] sm:$0xff] %vm2698, %v2669
        %2749 = vst.msk [vmem:[%s2744 + $0x31] sm:$0xff] %vm2698, %v2670
        %2750 = vst.msk [vmem:[%s2744 + $0x39] sm:$0xff] %vm2698, %v2671
        %2751 = vst.msk [vmem:[%s2744 + $0x49] sm:$0xff] %vm2698, %v2672
        %2752 = vst.msk [vmem:[%s2744 + $0x51] sm:$0xff] %vm2698, %v2673
        %2753 = vst.msk [vmem:[%s2744 + $0x61] sm:$0xff] %vm2698, %v2674
        %2754 = vst.msk [vmem:[%s2744 + $0x69] sm:$0xff] %vm2698, %v2675
        %2755 = vst.msk [vmem:[%s2744 + $0x79] sm:$0xff] %vm2698, %v2676
        %2756 = vst.msk [vmem:[%s2744 + $0x81] sm:$0xff] %vm2698, %v2677
        %2757 = vst.msk [vmem:[%s2744 + $0x91] sm:$0xff] %vm2698, %v2678
        %2758 = vst.msk [vmem:[%s2744 + $0x99] sm:$0xff] %vm2698, %v2679
        %2759 = vst.msk [vmem:[%s2744 + $0xa9] sm:$0xff] %vm2698, %v2680
        %2760 = vst.msk [vmem:[%s2744 + $0xb1] sm:$0xff] %vm2698, %v2681
        %2761 = vst.msk [vmem:[%s2744 + $0xc1] sm:$0xff] %vm2698, %v2682
        %2762 = vst.msk [vmem:[%s2744 + $0xc9] sm:$0xff] %vm2698, %v2683
        %2763 = vst.msk [vmem:[%s2744 + $0xd9] sm:$0xff] %vm2698, %v2684
        %2764 = vst.msk [vmem:[%s2744 + $0xe1] sm:$0xff] %vm2698, %v2685
        %2765 = vst.msk [vmem:[%s2744 + $0xf1] sm:$0xff] %vm2698, %v2686
        %2766 = vst.msk [vmem:[%s2744 + $0xf9] sm:$0xff] %vm2698, %v2687
        %2767 = vst.msk [vmem:[%s2744 + $0x109] sm:$0xff] %vm2698, %v2688
        %2768 = vst.msk [vmem:[%s2744 + $0x111] sm:$0xff] %vm2698, %v2689
        %2769 = vst.msk [vmem:[%s2744 + $0x121] sm:$0xff] %vm2698, %v2690
        %2770 = vst.msk [vmem:[%s2744 + $0x129] sm:$0xff] %vm2698, %v2691
        %2771 = vst.msk [vmem:[%s2744 + $0x139] sm:$0xff] %vm2698, %v2692
        %2772 = vst.msk [vmem:[%s2744 + $0x141] sm:$0xff] %vm2698, %v2693
        %2773 = vst.msk [vmem:[%s2744 + $0x151] sm:$0xff] %vm2698, %v2694
        %2774 = vst.msk [vmem:[%s2744 + $0x159] sm:$0xff] %vm2698, %v2695
        %2775 = vst.msk [vmem:[%s2744 + $0x169] sm:$0xff] %vm2698, %v2696
        %2776 = vst.msk [vmem:[%s2744 + $0x171] sm:$0xff] %vm2698, %v2697
        %v2777 = vld [vmem:[#allocation3] sm:$0xff]
        %v2778 = vld [vmem:[#allocation3 + $0x8] sm:$0xff]
        %v2779 = vld [vmem:[#allocation3 + $0x18] sm:$0xff]
        %v2780 = vld [vmem:[#allocation3 + $0x20] sm:$0xff]
        %v2781 = vld [vmem:[#allocation3 + $0x30] sm:$0xff]
        %v2782 = vld [vmem:[#allocation3 + $0x38] sm:$0xff]
        %v2783 = vld [vmem:[#allocation3 + $0x48] sm:$0xff]
        %v2784 = vld [vmem:[#allocation3 + $0x50] sm:$0xff]
        %v2785 = vld [vmem:[#allocation3 + $0x60] sm:$0xff]
        %v2786 = vld [vmem:[#allocation3 + $0x68] sm:$0xff]
        %v2787 = vld [vmem:[#allocation3 + $0x78] sm:$0xff]
        %v2788 = vld [vmem:[#allocation3 + $0x80] sm:$0xff]
        %v2789 = vld [vmem:[#allocation3 + $0x90] sm:$0xff]
        %v2790 = vld [vmem:[#allocation3 + $0x98] sm:$0xff]
        %v2791 = vld [vmem:[#allocation3 + $0xa8] sm:$0xff]
        %v2792 = vld [vmem:[#allocation3 + $0xb0] sm:$0xff]
        %v2793 = vld [vmem:[#allocation3 + $0xc0] sm:$0xff]
        %v2794 = vld [vmem:[#allocation3 + $0xc8] sm:$0xff]
        %v2795 = vld [vmem:[#allocation3 + $0xd8] sm:$0xff]
        %v2796 = vld [vmem:[#allocation3 + $0xe0] sm:$0xff]
        %v2797 = vld [vmem:[#allocation3 + $0xf0] sm:$0xff]
        %v2798 = vld [vmem:[#allocation3 + $0xf8] sm:$0xff]
        %v2799 = vld [vmem:[#allocation3 + $0x108] sm:$0xff]
        %v2800 = vld [vmem:[#allocation3 + $0x110] sm:$0xff]
        %v2801 = vld [vmem:[#allocation3 + $0x120] sm:$0xff]
        %v2802 = vld [vmem:[#allocation3 + $0x128] sm:$0xff]
        %v2803 = vld [vmem:[#allocation3 + $0x138] sm:$0xff]
        %v2804 = vld [vmem:[#allocation3 + $0x140] sm:$0xff]
        %v2805 = vld [vmem:[#allocation3 + $0x150] sm:$0xff]
        %v2806 = vld [vmem:[#allocation3 + $0x158] sm:$0xff]
        %v2807 = vld [vmem:[#allocation3 + $0x168] sm:$0xff]
        %v2808 = vld [vmem:[#allocation3 + $0x170] sm:$0xff]
        %v2809 = vld [vmem:[#allocation3 + $0x1] sm:$0xff]
        %v2810 = vld [vmem:[#allocation3 + $0x9] sm:$0xff]
        %v2811 = vld [vmem:[#allocation3 + $0x19] sm:$0xff]
        %v2812 = vld [vmem:[#allocation3 + $0x21] sm:$0xff]
        %v2813 = vld [vmem:[#allocation3 + $0x31] sm:$0xff]
        %v2814 = vld [vmem:[#allocation3 + $0x39] sm:$0xff]
        %v2815 = vld [vmem:[#allocation3 + $0x49] sm:$0xff]
        %v2816 = vld [vmem:[#allocation3 + $0x51] sm:$0xff]
        %v2817 = vld [vmem:[#allocation3 + $0x61] sm:$0xff]
        %v2818 = vld [vmem:[#allocation3 + $0x69] sm:$0xff]
        %v2819 = vld [vmem:[#allocation3 + $0x79] sm:$0xff]
        %v2820 = vld [vmem:[#allocation3 + $0x81] sm:$0xff]
        %v2821 = vld [vmem:[#allocation3 + $0x91] sm:$0xff]
        %v2822 = vld [vmem:[#allocation3 + $0x99] sm:$0xff]
        %v2823 = vld [vmem:[#allocation3 + $0xa9] sm:$0xff]
        %v2824 = vld [vmem:[#allocation3 + $0xb1] sm:$0xff]
        %v2825 = vld [vmem:[#allocation3 + $0xc1] sm:$0xff]
        %v2826 = vld [vmem:[#allocation3 + $0xc9] sm:$0xff]
        %v2827 = vld [vmem:[#allocation3 + $0xd9] sm:$0xff]
        %v2828 = vld [vmem:[#allocation3 + $0xe1] sm:$0xff]
        %v2829 = vld [vmem:[#allocation3 + $0xf1] sm:$0xff]
        %v2830 = vld [vmem:[#allocation3 + $0xf9] sm:$0xff]
        %v2831 = vld [vmem:[#allocation3 + $0x109] sm:$0xff]
        %v2832 = vld [vmem:[#allocation3 + $0x111] sm:$0xff]
        %v2833 = vld [vmem:[#allocation3 + $0x121] sm:$0xff]
        %v2834 = vld [vmem:[#allocation3 + $0x129] sm:$0xff]
        %v2835 = vld [vmem:[#allocation3 + $0x139] sm:$0xff]
        %v2836 = vld [vmem:[#allocation3 + $0x141] sm:$0xff]
        %v2837 = vld [vmem:[#allocation3 + $0x151] sm:$0xff]
        %v2838 = vld [vmem:[#allocation3 + $0x159] sm:$0xff]
        %v2839 = vld [vmem:[#allocation3 + $0x169] sm:$0xff]
        %v2840 = vld [vmem:[#allocation3 + $0x171] sm:$0xff]
        %v2841 = vld [vmem:[#allocation3 + $0x2] sm:$0xff]
        %v2842 = vld [vmem:[#allocation3 + $0xa] sm:$0xff]
        %v2843 = vld [vmem:[#allocation3 + $0x1a] sm:$0xff]
        %v2844 = vld [vmem:[#allocation3 + $0x22] sm:$0xff]
        %v2845 = vld [vmem:[#allocation3 + $0x32] sm:$0xff]
        %v2846 = vld [vmem:[#allocation3 + $0x3a] sm:$0xff]
        %v2847 = vld [vmem:[#allocation3 + $0x4a] sm:$0xff]
        %v2848 = vld [vmem:[#allocation3 + $0x52] sm:$0xff]
        %v2849 = vld [vmem:[#allocation3 + $0x62] sm:$0xff]
        %v2850 = vld [vmem:[#allocation3 + $0x6a] sm:$0xff]
        %v2851 = vld [vmem:[#allocation3 + $0x7a] sm:$0xff]
        %v2852 = vld [vmem:[#allocation3 + $0x82] sm:$0xff]
        %v2853 = vld [vmem:[#allocation3 + $0x92] sm:$0xff]
        %v2854 = vld [vmem:[#allocation3 + $0x9a] sm:$0xff]
        %v2855 = vld [vmem:[#allocation3 + $0xaa] sm:$0xff]
        %v2856 = vld [vmem:[#allocation3 + $0xb2] sm:$0xff]
        %v2857 = vld [vmem:[#allocation3 + $0xc2] sm:$0xff]
        %v2858 = vld [vmem:[#allocation3 + $0xca] sm:$0xff]
        %v2859 = vld [vmem:[#allocation3 + $0xda] sm:$0xff]
        %v2860 = vld [vmem:[#allocation3 + $0xe2] sm:$0xff]
        %v2861 = vld [vmem:[#allocation3 + $0xf2] sm:$0xff]
        %v2862 = vld [vmem:[#allocation3 + $0xfa] sm:$0xff]
        %v2863 = vld [vmem:[#allocation3 + $0x10a] sm:$0xff]
        %v2864 = vld [vmem:[#allocation3 + $0x112] sm:$0xff]
        %v2865 = vld [vmem:[#allocation3 + $0x122] sm:$0xff]
        %v2866 = vld [vmem:[#allocation3 + $0x12a] sm:$0xff]
        %v2867 = vld [vmem:[#allocation3 + $0x13a] sm:$0xff]
        %v2868 = vld [vmem:[#allocation3 + $0x142] sm:$0xff]
        %v2869 = vld [vmem:[#allocation3 + $0x152] sm:$0xff]
        %v2870 = vld [vmem:[#allocation3 + $0x15a] sm:$0xff]
        %v2871 = vld [vmem:[#allocation3 + $0x16a] sm:$0xff]
        %v2872 = vld [vmem:[#allocation3 + $0x172] sm:$0xff]
        %v2873 = vld [vmem:[%s2744] sm:$0xff]
        %v2874 = vld [vmem:[%s2744 + $0x8] sm:$0xff]
        %v2875 = vld [vmem:[%s2744 + $0x18] sm:$0xff]
        %v2876 = vld [vmem:[%s2744 + $0x20] sm:$0xff]
        %v2877 = vld [vmem:[%s2744 + $0x30] sm:$0xff]
        %v2878 = vld [vmem:[%s2744 + $0x38] sm:$0xff]
        %v2879 = vld [vmem:[%s2744 + $0x48] sm:$0xff]
        %v2880 = vld [vmem:[%s2744 + $0x50] sm:$0xff]
        %v2881 = vld [vmem:[%s2744 + $0x60] sm:$0xff]
        %v2882 = vld [vmem:[%s2744 + $0x68] sm:$0xff]
        %v2883 = vld [vmem:[%s2744 + $0x78] sm:$0xff]
        %v2884 = vld [vmem:[%s2744 + $0x80] sm:$0xff]
        %v2885 = vld [vmem:[%s2744 + $0x90] sm:$0xff]
        %v2886 = vld [vmem:[%s2744 + $0x98] sm:$0xff]
        %v2887 = vld [vmem:[%s2744 + $0xa8] sm:$0xff]
        %v2888 = vld [vmem:[%s2744 + $0xb0] sm:$0xff]
        %v2889 = vld [vmem:[%s2744 + $0xc0] sm:$0xff]
        %v2890 = vld [vmem:[%s2744 + $0xc8] sm:$0xff]
        %v2891 = vld [vmem:[%s2744 + $0xd8] sm:$0xff]
        %v2892 = vld [vmem:[%s2744 + $0xe0] sm:$0xff]
        %v2893 = vld [vmem:[%s2744 + $0xf0] sm:$0xff]
        %v2894 = vld [vmem:[%s2744 + $0xf8] sm:$0xff]
        %v2895 = vld [vmem:[%s2744 + $0x108] sm:$0xff]
        %v2896 = vld [vmem:[%s2744 + $0x110] sm:$0xff]
        %v2897 = vld [vmem:[%s2744 + $0x120] sm:$0xff]
        %v2898 = vld [vmem:[%s2744 + $0x128] sm:$0xff]
        %v2899 = vld [vmem:[%s2744 + $0x138] sm:$0xff]
        %v2900 = vld [vmem:[%s2744 + $0x140] sm:$0xff]
        %v2901 = vld [vmem:[%s2744 + $0x150] sm:$0xff]
        %v2902 = vld [vmem:[%s2744 + $0x158] sm:$0xff]
        %v2903 = vld [vmem:[%s2744 + $0x168] sm:$0xff]
        %v2904 = vld [vmem:[%s2744 + $0x170] sm:$0xff]
        %v2905 = vld [vmem:[%s2744 + $0x1] sm:$0xff]
        %v2906 = vld [vmem:[%s2744 + $0x9] sm:$0xff]
        %v2907 = vld [vmem:[%s2744 + $0x19] sm:$0xff]
        %v2908 = vld [vmem:[%s2744 + $0x21] sm:$0xff]
        %v2909 = vld [vmem:[%s2744 + $0x31] sm:$0xff]
        %v2910 = vld [vmem:[%s2744 + $0x39] sm:$0xff]
        %v2911 = vld [vmem:[%s2744 + $0x49] sm:$0xff]
        %v2912 = vld [vmem:[%s2744 + $0x51] sm:$0xff]
        %v2913 = vld [vmem:[%s2744 + $0x61] sm:$0xff]
        %v2914 = vld [vmem:[%s2744 + $0x69] sm:$0xff]
        %v2915 = vld [vmem:[%s2744 + $0x79] sm:$0xff]
        %v2916 = vld [vmem:[%s2744 + $0x81] sm:$0xff]
        %v2917 = vld [vmem:[%s2744 + $0x91] sm:$0xff]
        %v2918 = vld [vmem:[%s2744 + $0x99] sm:$0xff]
        %v2919 = vld [vmem:[%s2744 + $0xa9] sm:$0xff]
        %v2920 = vld [vmem:[%s2744 + $0xb1] sm:$0xff]
        %v2921 = vld [vmem:[%s2744 + $0xc1] sm:$0xff]
        %v2922 = vld [vmem:[%s2744 + $0xc9] sm:$0xff]
        %v2923 = vld [vmem:[%s2744 + $0xd9] sm:$0xff]
        %v2924 = vld [vmem:[%s2744 + $0xe1] sm:$0xff]
        %v2925 = vld [vmem:[%s2744 + $0xf1] sm:$0xff]
        %v2926 = vld [vmem:[%s2744 + $0xf9] sm:$0xff]
        %v2927 = vld [vmem:[%s2744 + $0x109] sm:$0xff]
        %v2928 = vld [vmem:[%s2744 + $0x111] sm:$0xff]
        %v2929 = vld [vmem:[%s2744 + $0x121] sm:$0xff]
        %v2930 = vld [vmem:[%s2744 + $0x129] sm:$0xff]
        %v2931 = vld [vmem:[%s2744 + $0x139] sm:$0xff]
        %v2932 = vld [vmem:[%s2744 + $0x141] sm:$0xff]
        %v2933 = vld [vmem:[%s2744 + $0x151] sm:$0xff]
        %v2934 = vld [vmem:[%s2744 + $0x159] sm:$0xff]
        %v2935 = vld [vmem:[%s2744 + $0x169] sm:$0xff]
        %v2936 = vld [vmem:[%s2744 + $0x171] sm:$0xff]
        %v2937 = vld [vmem:[%s2744 + $0x2] sm:$0xff]
        %v2938 = vld [vmem:[%s2744 + $0xa] sm:$0xff]
        %v2939 = vld [vmem:[%s2744 + $0x1a] sm:$0xff]
        %v2940 = vld [vmem:[%s2744 + $0x22] sm:$0xff]
        %v2941 = vld [vmem:[%s2744 + $0x32] sm:$0xff]
        %v2942 = vld [vmem:[%s2744 + $0x3a] sm:$0xff]
        %v2943 = vld [vmem:[%s2744 + $0x4a] sm:$0xff]
        %v2944 = vld [vmem:[%s2744 + $0x52] sm:$0xff]
        %v2945 = vld [vmem:[%s2744 + $0x62] sm:$0xff]
        %v2946 = vld [vmem:[%s2744 + $0x6a] sm:$0xff]
        %v2947 = vld [vmem:[%s2744 + $0x7a] sm:$0xff]
        %v2948 = vld [vmem:[%s2744 + $0x82] sm:$0xff]
        %v2949 = vld [vmem:[%s2744 + $0x92] sm:$0xff]
        %v2950 = vld [vmem:[%s2744 + $0x9a] sm:$0xff]
        %v2951 = vld [vmem:[%s2744 + $0xaa] sm:$0xff]
        %v2952 = vld [vmem:[%s2744 + $0xb2] sm:$0xff]
        %v2953 = vld [vmem:[%s2744 + $0xc2] sm:$0xff]
        %v2954 = vld [vmem:[%s2744 + $0xca] sm:$0xff]
        %v2955 = vld [vmem:[%s2744 + $0xda] sm:$0xff]
        %v2956 = vld [vmem:[%s2744 + $0xe2] sm:$0xff]
        %v2957 = vld [vmem:[%s2744 + $0xf2] sm:$0xff]
        %v2958 = vld [vmem:[%s2744 + $0xfa] sm:$0xff]
        %v2959 = vld [vmem:[%s2744 + $0x10a] sm:$0xff]
        %v2960 = vld [vmem:[%s2744 + $0x112] sm:$0xff]
        %v2961 = vld [vmem:[%s2744 + $0x122] sm:$0xff]
        %v2962 = vld [vmem:[%s2744 + $0x12a] sm:$0xff]
        %v2963 = vld [vmem:[%s2744 + $0x13a] sm:$0xff]
        %v2964 = vld [vmem:[%s2744 + $0x142] sm:$0xff]
        %v2965 = vld [vmem:[%s2744 + $0x152] sm:$0xff]
        %v2966 = vld [vmem:[%s2744 + $0x15a] sm:$0xff]
        %v2967 = vld [vmem:[%s2744 + $0x16a] sm:$0xff]
        %v2968 = vld [vmem:[%s2744 + $0x172] sm:$0xff]
        %s2969 = scalar_lea.vmem [#allocation3], 48
        %v2970 = vld [vmem:[%s2969] sm:$0xff]
        %v2971 = vld [vmem:[%s2969 + $0x8] sm:$0xff]
        %v2972 = vld [vmem:[%s2969 + $0x18] sm:$0xff]
        %v2973 = vld [vmem:[%s2969 + $0x20] sm:$0xff]
        %v2974 = vld [vmem:[%s2969 + $0x30] sm:$0xff]
        %v2975 = vld [vmem:[%s2969 + $0x38] sm:$0xff]
        %v2976 = vld [vmem:[%s2969 + $0x48] sm:$0xff]
        %v2977 = vld [vmem:[%s2969 + $0x50] sm:$0xff]
        %v2978 = vld [vmem:[%s2969 + $0x60] sm:$0xff]
        %v2979 = vld [vmem:[%s2969 + $0x68] sm:$0xff]
        %v2980 = vld [vmem:[%s2969 + $0x78] sm:$0xff]
        %v2981 = vld [vmem:[%s2969 + $0x80] sm:$0xff]
        %v2982 = vld [vmem:[%s2969 + $0x90] sm:$0xff]
        %v2983 = vld [vmem:[%s2969 + $0x98] sm:$0xff]
        %v2984 = vld [vmem:[%s2969 + $0xa8] sm:$0xff]
        %v2985 = vld [vmem:[%s2969 + $0xb0] sm:$0xff]
        %v2986 = vld [vmem:[%s2969 + $0xc0] sm:$0xff]
        %v2987 = vld [vmem:[%s2969 + $0xc8] sm:$0xff]
        %v2988 = vld [vmem:[%s2969 + $0xd8] sm:$0xff]
        %v2989 = vld [vmem:[%s2969 + $0xe0] sm:$0xff]
        %v2990 = vld [vmem:[%s2969 + $0xf0] sm:$0xff]
        %v2991 = vld [vmem:[%s2969 + $0xf8] sm:$0xff]
        %v2992 = vld [vmem:[%s2969 + $0x108] sm:$0xff]
        %v2993 = vld [vmem:[%s2969 + $0x110] sm:$0xff]
        %v2994 = vld [vmem:[%s2969 + $0x120] sm:$0xff]
        %v2995 = vld [vmem:[%s2969 + $0x128] sm:$0xff]
        %v2996 = vld [vmem:[%s2969 + $0x138] sm:$0xff]
        %v2997 = vld [vmem:[%s2969 + $0x140] sm:$0xff]
        %v2998 = vld [vmem:[%s2969 + $0x150] sm:$0xff]
        %v2999 = vld [vmem:[%s2969 + $0x158] sm:$0xff]
        %v3000 = vld [vmem:[%s2969 + $0x168] sm:$0xff]
        %v3001 = vld [vmem:[%s2969 + $0x170] sm:$0xff]
        %v3002 = vld [vmem:[%s2969 + $0x1] sm:$0xff]
        %v3003 = vld [vmem:[%s2969 + $0x9] sm:$0xff]
        %v3004 = vld [vmem:[%s2969 + $0x19] sm:$0xff]
        %v3005 = vld [vmem:[%s2969 + $0x21] sm:$0xff]
        %v3006 = vld [vmem:[%s2969 + $0x31] sm:$0xff]
        %v3007 = vld [vmem:[%s2969 + $0x39] sm:$0xff]
        %v3008 = vld [vmem:[%s2969 + $0x49] sm:$0xff]
        %v3009 = vld [vmem:[%s2969 + $0x51] sm:$0xff]
        %v3010 = vld [vmem:[%s2969 + $0x61] sm:$0xff]
        %v3011 = vld [vmem:[%s2969 + $0x69] sm:$0xff]
        %v3012 = vld [vmem:[%s2969 + $0x79] sm:$0xff]
        %v3013 = vld [vmem:[%s2969 + $0x81] sm:$0xff]
        %v3014 = vld [vmem:[%s2969 + $0x91] sm:$0xff]
        %v3015 = vld [vmem:[%s2969 + $0x99] sm:$0xff]
        %v3016 = vld [vmem:[%s2969 + $0xa9] sm:$0xff]
        %v3017 = vld [vmem:[%s2969 + $0xb1] sm:$0xff]
        %v3018 = vld [vmem:[%s2969 + $0xc1] sm:$0xff]
        %v3019 = vld [vmem:[%s2969 + $0xc9] sm:$0xff]
        %v3020 = vld [vmem:[%s2969 + $0xd9] sm:$0xff]
        %v3021 = vld [vmem:[%s2969 + $0xe1] sm:$0xff]
        %v3022 = vld [vmem:[%s2969 + $0xf1] sm:$0xff]
        %v3023 = vld [vmem:[%s2969 + $0xf9] sm:$0xff]
        %v3024 = vld [vmem:[%s2969 + $0x109] sm:$0xff]
        %v3025 = vld [vmem:[%s2969 + $0x111] sm:$0xff]
        %v3026 = vld [vmem:[%s2969 + $0x121] sm:$0xff]
        %v3027 = vld [vmem:[%s2969 + $0x129] sm:$0xff]
        %v3028 = vld [vmem:[%s2969 + $0x139] sm:$0xff]
        %v3029 = vld [vmem:[%s2969 + $0x141] sm:$0xff]
        %v3030 = vld [vmem:[%s2969 + $0x151] sm:$0xff]
        %v3031 = vld [vmem:[%s2969 + $0x159] sm:$0xff]
        %v3032 = vld [vmem:[%s2969 + $0x169] sm:$0xff]
        %v3033 = vld [vmem:[%s2969 + $0x171] sm:$0xff]
        %v3034 = vld [vmem:[%s2969 + $0x2] sm:$0xff]
        %v3035 = vld [vmem:[%s2969 + $0xa] sm:$0xff]
        %v3036 = vld [vmem:[%s2969 + $0x1a] sm:$0xff]
        %v3037 = vld [vmem:[%s2969 + $0x22] sm:$0xff]
        %v3038 = vld [vmem:[%s2969 + $0x32] sm:$0xff]
        %v3039 = vld [vmem:[%s2969 + $0x3a] sm:$0xff]
        %v3040 = vld [vmem:[%s2969 + $0x4a] sm:$0xff]
        %v3041 = vld [vmem:[%s2969 + $0x52] sm:$0xff]
        %v3042 = vld [vmem:[%s2969 + $0x62] sm:$0xff]
        %v3043 = vld [vmem:[%s2969 + $0x6a] sm:$0xff]
        %v3044 = vld [vmem:[%s2969 + $0x7a] sm:$0xff]
        %v3045 = vld [vmem:[%s2969 + $0x82] sm:$0xff]
        %v3046 = vld [vmem:[%s2969 + $0x92] sm:$0xff]
        %v3047 = vld [vmem:[%s2969 + $0x9a] sm:$0xff]
        %v3048 = vld [vmem:[%s2969 + $0xaa] sm:$0xff]
        %v3049 = vld [vmem:[%s2969 + $0xb2] sm:$0xff]
        %v3050 = vld [vmem:[%s2969 + $0xc2] sm:$0xff]
        %v3051 = vld [vmem:[%s2969 + $0xca] sm:$0xff]
        %v3052 = vld [vmem:[%s2969 + $0xda] sm:$0xff]
        %v3053 = vld [vmem:[%s2969 + $0xe2] sm:$0xff]
        %v3054 = vld [vmem:[%s2969 + $0xf2] sm:$0xff]
        %v3055 = vld [vmem:[%s2969 + $0xfa] sm:$0xff]
        %v3056 = vld [vmem:[%s2969 + $0x10a] sm:$0xff]
        %v3057 = vld [vmem:[%s2969 + $0x112] sm:$0xff]
        %v3058 = vld [vmem:[%s2969 + $0x122] sm:$0xff]
        %v3059 = vld [vmem:[%s2969 + $0x12a] sm:$0xff]
        %v3060 = vld [vmem:[%s2969 + $0x13a] sm:$0xff]
        %v3061 = vld [vmem:[%s2969 + $0x142] sm:$0xff]
        %v3062 = vld [vmem:[%s2969 + $0x152] sm:$0xff]
        %v3063 = vld [vmem:[%s2969 + $0x15a] sm:$0xff]
        %v3064 = vld [vmem:[%s2969 + $0x16a] sm:$0xff]
        %v3065 = vld [vmem:[%s2969 + $0x172] sm:$0xff]
        %3098 = vrot.lane.b32.xlu0 %v2809, 32
        %v3099 = vpop.permute.xlu0 %3098
        %3100 = vrot.lane.b32.xlu0 %v2810, 32
        %v3101 = vpop.permute.xlu0 %3100
        %3102 = vrot.lane.b32.xlu0 %v2811, 32
        %v3103 = vpop.permute.xlu0 %3102
        %3104 = vrot.lane.b32.xlu0 %v2812, 32
        %v3105 = vpop.permute.xlu0 %3104
        %3106 = vrot.lane.b32.xlu0 %v2813, 32
        %v3107 = vpop.permute.xlu0 %3106
        %3108 = vrot.lane.b32.xlu0 %v2814, 32
        %v3109 = vpop.permute.xlu0 %3108
        %3110 = vrot.lane.b32.xlu0 %v2815, 32
        %v3111 = vpop.permute.xlu0 %3110
        %3112 = vrot.lane.b32.xlu0 %v2816, 32
        %v3113 = vpop.permute.xlu0 %3112
        %3114 = vrot.lane.b32.xlu0 %v2817, 32
        %v3115 = vpop.permute.xlu0 %3114
        %3116 = vrot.lane.b32.xlu0 %v2818, 32
        %v3117 = vpop.permute.xlu0 %3116
        %3118 = vrot.lane.b32.xlu0 %v2819, 32
        %v3119 = vpop.permute.xlu0 %3118
        %3120 = vrot.lane.b32.xlu0 %v2820, 32
        %v3121 = vpop.permute.xlu0 %3120
        %3122 = vrot.lane.b32.xlu0 %v2821, 32
        %v3123 = vpop.permute.xlu0 %3122
        %3124 = vrot.lane.b32.xlu0 %v2822, 32
        %v3125 = vpop.permute.xlu0 %3124
        %3126 = vrot.lane.b32.xlu0 %v2823, 32
        %v3127 = vpop.permute.xlu0 %3126
        %3128 = vrot.lane.b32.xlu0 %v2824, 32
        %v3129 = vpop.permute.xlu0 %3128
        %3130 = vrot.lane.b32.xlu0 %v2825, 32
        %v3131 = vpop.permute.xlu0 %3130
        %3132 = vrot.lane.b32.xlu0 %v2826, 32
        %v3133 = vpop.permute.xlu0 %3132
        %3134 = vrot.lane.b32.xlu0 %v2827, 32
        %v3135 = vpop.permute.xlu0 %3134
        %3136 = vrot.lane.b32.xlu0 %v2828, 32
        %v3137 = vpop.permute.xlu0 %3136
        %3138 = vrot.lane.b32.xlu0 %v2829, 32
        %v3139 = vpop.permute.xlu0 %3138
        %3140 = vrot.lane.b32.xlu0 %v2830, 32
        %v3141 = vpop.permute.xlu0 %3140
        %3142 = vrot.lane.b32.xlu0 %v2831, 32
        %v3143 = vpop.permute.xlu0 %3142
        %3144 = vrot.lane.b32.xlu0 %v2832, 32
        %v3145 = vpop.permute.xlu0 %3144
        %3146 = vrot.lane.b32.xlu0 %v2833, 32
        %v3147 = vpop.permute.xlu0 %3146
        %3148 = vrot.lane.b32.xlu0 %v2834, 32
        %v3149 = vpop.permute.xlu0 %3148
        %3150 = vrot.lane.b32.xlu0 %v2835, 32
        %v3151 = vpop.permute.xlu0 %3150
        %3152 = vrot.lane.b32.xlu0 %v2836, 32
        %v3153 = vpop.permute.xlu0 %3152
        %3154 = vrot.lane.b32.xlu0 %v2837, 32
        %v3155 = vpop.permute.xlu0 %3154
        %3156 = vrot.lane.b32.xlu0 %v2838, 32
        %v3157 = vpop.permute.xlu0 %3156
        %3158 = vrot.lane.b32.xlu0 %v2839, 32
        %v3159 = vpop.permute.xlu0 %3158
        %3160 = vrot.lane.b32.xlu0 %v2840, 32
        %v3161 = vpop.permute.xlu0 %3160
        %3226 = vrot.lane.b32.xlu0 %v2841, 64
        %v3227 = vpop.permute.xlu0 %3226
        %3228 = vrot.lane.b32.xlu0 %v2842, 64
        %v3229 = vpop.permute.xlu0 %3228
        %3230 = vrot.lane.b32.xlu0 %v2843, 64
        %v3231 = vpop.permute.xlu0 %3230
        %3232 = vrot.lane.b32.xlu0 %v2844, 64
        %v3233 = vpop.permute.xlu0 %3232
        %3234 = vrot.lane.b32.xlu0 %v2845, 64
        %v3235 = vpop.permute.xlu0 %3234
        %3236 = vrot.lane.b32.xlu0 %v2846, 64
        %v3237 = vpop.permute.xlu0 %3236
        %3238 = vrot.lane.b32.xlu0 %v2847, 64
        %v3239 = vpop.permute.xlu0 %3238
        %3240 = vrot.lane.b32.xlu0 %v2848, 64
        %v3241 = vpop.permute.xlu0 %3240
        %3242 = vrot.lane.b32.xlu0 %v2849, 64
        %v3243 = vpop.permute.xlu0 %3242
        %3244 = vrot.lane.b32.xlu0 %v2850, 64
        %v3245 = vpop.permute.xlu0 %3244
        %3246 = vrot.lane.b32.xlu0 %v2851, 64
        %v3247 = vpop.permute.xlu0 %3246
        %3248 = vrot.lane.b32.xlu0 %v2852, 64
        %v3249 = vpop.permute.xlu0 %3248
        %3250 = vrot.lane.b32.xlu0 %v2853, 64
        %v3251 = vpop.permute.xlu0 %3250
        %3252 = vrot.lane.b32.xlu0 %v2854, 64
        %v3253 = vpop.permute.xlu0 %3252
        %3254 = vrot.lane.b32.xlu0 %v2855, 64
        %v3255 = vpop.permute.xlu0 %3254
        %3256 = vrot.lane.b32.xlu0 %v2856, 64
        %v3257 = vpop.permute.xlu0 %3256
        %3258 = vrot.lane.b32.xlu0 %v2857, 64
        %v3259 = vpop.permute.xlu0 %3258
        %3260 = vrot.lane.b32.xlu0 %v2858, 64
        %v3261 = vpop.permute.xlu0 %3260
        %3262 = vrot.lane.b32.xlu0 %v2859, 64
        %v3263 = vpop.permute.xlu0 %3262
        %3264 = vrot.lane.b32.xlu0 %v2860, 64
        %v3265 = vpop.permute.xlu0 %3264
        %3266 = vrot.lane.b32.xlu0 %v2861, 64
        %v3267 = vpop.permute.xlu0 %3266
        %3268 = vrot.lane.b32.xlu0 %v2862, 64
        %v3269 = vpop.permute.xlu0 %3268
        %3270 = vrot.lane.b32.xlu0 %v2863, 64
        %v3271 = vpop.permute.xlu0 %3270
        %3272 = vrot.lane.b32.xlu0 %v2864, 64
        %v3273 = vpop.permute.xlu0 %3272
        %3274 = vrot.lane.b32.xlu0 %v2865, 64
        %v3275 = vpop.permute.xlu0 %3274
        %3276 = vrot.lane.b32.xlu0 %v2866, 64
        %v3277 = vpop.permute.xlu0 %3276
        %3278 = vrot.lane.b32.xlu0 %v2867, 64
        %v3279 = vpop.permute.xlu0 %3278
        %3280 = vrot.lane.b32.xlu0 %v2868, 64
        %v3281 = vpop.permute.xlu0 %3280
        %3282 = vrot.lane.b32.xlu0 %v2869, 64
        %v3283 = vpop.permute.xlu0 %3282
        %3284 = vrot.lane.b32.xlu0 %v2870, 64
        %v3285 = vpop.permute.xlu0 %3284
        %3286 = vrot.lane.b32.xlu0 %v2871, 64
        %v3287 = vpop.permute.xlu0 %3286
        %3288 = vrot.lane.b32.xlu0 %v2872, 64
        %v3289 = vpop.permute.xlu0 %3288
        %3354 = vrot.lane.b32.xlu0 %v2873, 96
        %v3355 = vpop.permute.xlu0 %3354
        %3356 = vrot.lane.b32.xlu0 %v2874, 96
        %v3357 = vpop.permute.xlu0 %3356
        %3358 = vrot.lane.b32.xlu0 %v2875, 96
        %v3359 = vpop.permute.xlu0 %3358
        %3360 = vrot.lane.b32.xlu0 %v2876, 96
        %v3361 = vpop.permute.xlu0 %3360
        %3362 = vrot.lane.b32.xlu0 %v2877, 96
        %v3363 = vpop.permute.xlu0 %3362
        %3364 = vrot.lane.b32.xlu0 %v2878, 96
        %v3365 = vpop.permute.xlu0 %3364
        %3366 = vrot.lane.b32.xlu0 %v2879, 96
        %v3367 = vpop.permute.xlu0 %3366
        %3368 = vrot.lane.b32.xlu0 %v2880, 96
        %v3369 = vpop.permute.xlu0 %3368
        %3370 = vrot.lane.b32.xlu0 %v2881, 96
        %v3371 = vpop.permute.xlu0 %3370
        %3372 = vrot.lane.b32.xlu0 %v2882, 96
        %v3373 = vpop.permute.xlu0 %3372
        %3374 = vrot.lane.b32.xlu0 %v2883, 96
        %v3375 = vpop.permute.xlu0 %3374
        %3376 = vrot.lane.b32.xlu0 %v2884, 96
        %v3377 = vpop.permute.xlu0 %3376
        %3378 = vrot.lane.b32.xlu0 %v2885, 96
        %v3379 = vpop.permute.xlu0 %3378
        %3380 = vrot.lane.b32.xlu0 %v2886, 96
        %v3381 = vpop.permute.xlu0 %3380
        %3382 = vrot.lane.b32.xlu0 %v2887, 96
        %v3383 = vpop.permute.xlu0 %3382
        %3384 = vrot.lane.b32.xlu0 %v2888, 96
        %v3385 = vpop.permute.xlu0 %3384
        %3386 = vrot.lane.b32.xlu0 %v2889, 96
        %v3387 = vpop.permute.xlu0 %3386
        %3388 = vrot.lane.b32.xlu0 %v2890, 96
        %v3389 = vpop.permute.xlu0 %3388
        %3390 = vrot.lane.b32.xlu0 %v2891, 96
        %v3391 = vpop.permute.xlu0 %3390
        %3392 = vrot.lane.b32.xlu0 %v2892, 96
        %v3393 = vpop.permute.xlu0 %3392
        %3394 = vrot.lane.b32.xlu0 %v2893, 96
        %v3395 = vpop.permute.xlu0 %3394
        %3396 = vrot.lane.b32.xlu0 %v2894, 96
        %v3397 = vpop.permute.xlu0 %3396
        %3398 = vrot.lane.b32.xlu0 %v2895, 96
        %v3399 = vpop.permute.xlu0 %3398
        %3400 = vrot.lane.b32.xlu0 %v2896, 96
        %v3401 = vpop.permute.xlu0 %3400
        %3402 = vrot.lane.b32.xlu0 %v2897, 96
        %v3403 = vpop.permute.xlu0 %3402
        %3404 = vrot.lane.b32.xlu0 %v2898, 96
        %v3405 = vpop.permute.xlu0 %3404
        %3406 = vrot.lane.b32.xlu0 %v2899, 96
        %v3407 = vpop.permute.xlu0 %3406
        %3408 = vrot.lane.b32.xlu0 %v2900, 96
        %v3409 = vpop.permute.xlu0 %3408
        %3410 = vrot.lane.b32.xlu0 %v2901, 96
        %v3411 = vpop.permute.xlu0 %3410
        %3412 = vrot.lane.b32.xlu0 %v2902, 96
        %v3413 = vpop.permute.xlu0 %3412
        %3414 = vrot.lane.b32.xlu0 %v2903, 96
        %v3415 = vpop.permute.xlu0 %3414
        %3416 = vrot.lane.b32.xlu0 %v2904, 96
        %v3417 = vpop.permute.xlu0 %3416
        %3482 = vrot.lane.b32.xlu0 %v2937, 32
        %v3483 = vpop.permute.xlu0 %3482
        %3484 = vrot.lane.b32.xlu0 %v2938, 32
        %v3485 = vpop.permute.xlu0 %3484
        %3486 = vrot.lane.b32.xlu0 %v2939, 32
        %v3487 = vpop.permute.xlu0 %3486
        %3488 = vrot.lane.b32.xlu0 %v2940, 32
        %v3489 = vpop.permute.xlu0 %3488
        %3490 = vrot.lane.b32.xlu0 %v2941, 32
        %v3491 = vpop.permute.xlu0 %3490
        %3492 = vrot.lane.b32.xlu0 %v2942, 32
        %v3493 = vpop.permute.xlu0 %3492
        %3494 = vrot.lane.b32.xlu0 %v2943, 32
        %v3495 = vpop.permute.xlu0 %3494
        %3496 = vrot.lane.b32.xlu0 %v2944, 32
        %v3497 = vpop.permute.xlu0 %3496
        %3498 = vrot.lane.b32.xlu0 %v2945, 32
        %v3499 = vpop.permute.xlu0 %3498
        %3500 = vrot.lane.b32.xlu0 %v2946, 32
        %v3501 = vpop.permute.xlu0 %3500
        %3502 = vrot.lane.b32.xlu0 %v2947, 32
        %v3503 = vpop.permute.xlu0 %3502
        %3504 = vrot.lane.b32.xlu0 %v2948, 32
        %v3505 = vpop.permute.xlu0 %3504
        %3506 = vrot.lane.b32.xlu0 %v2949, 32
        %v3507 = vpop.permute.xlu0 %3506
        %3508 = vrot.lane.b32.xlu0 %v2950, 32
        %v3509 = vpop.permute.xlu0 %3508
        %3510 = vrot.lane.b32.xlu0 %v2951, 32
        %v3511 = vpop.permute.xlu0 %3510
        %3512 = vrot.lane.b32.xlu0 %v2952, 32
        %v3513 = vpop.permute.xlu0 %3512
        %3514 = vrot.lane.b32.xlu0 %v2953, 32
        %v3515 = vpop.permute.xlu0 %3514
        %3516 = vrot.lane.b32.xlu0 %v2954, 32
        %v3517 = vpop.permute.xlu0 %3516
        %3518 = vrot.lane.b32.xlu0 %v2955, 32
        %v3519 = vpop.permute.xlu0 %3518
        %3520 = vrot.lane.b32.xlu0 %v2956, 32
        %v3521 = vpop.permute.xlu0 %3520
        %3522 = vrot.lane.b32.xlu0 %v2957, 32
        %v3523 = vpop.permute.xlu0 %3522
        %3524 = vrot.lane.b32.xlu0 %v2958, 32
        %v3525 = vpop.permute.xlu0 %3524
        %3526 = vrot.lane.b32.xlu0 %v2959, 32
        %v3527 = vpop.permute.xlu0 %3526
        %3528 = vrot.lane.b32.xlu0 %v2960, 32
        %v3529 = vpop.permute.xlu0 %3528
        %3530 = vrot.lane.b32.xlu0 %v2961, 32
        %v3531 = vpop.permute.xlu0 %3530
        %3532 = vrot.lane.b32.xlu0 %v2962, 32
        %v3533 = vpop.permute.xlu0 %3532
        %3534 = vrot.lane.b32.xlu0 %v2963, 32
        %v3535 = vpop.permute.xlu0 %3534
        %3536 = vrot.lane.b32.xlu0 %v2964, 32
        %v3537 = vpop.permute.xlu0 %3536
        %3538 = vrot.lane.b32.xlu0 %v2965, 32
        %v3539 = vpop.permute.xlu0 %3538
        %3540 = vrot.lane.b32.xlu0 %v2966, 32
        %v3541 = vpop.permute.xlu0 %3540
        %3542 = vrot.lane.b32.xlu0 %v2967, 32
        %v3543 = vpop.permute.xlu0 %3542
        %3544 = vrot.lane.b32.xlu0 %v2968, 32
        %v3545 = vpop.permute.xlu0 %3544
        %3610 = vrot.lane.b32.xlu0 %v2970, 64
        %v3611 = vpop.permute.xlu0 %3610
        %3612 = vrot.lane.b32.xlu0 %v2971, 64
        %v3613 = vpop.permute.xlu0 %3612
        %3614 = vrot.lane.b32.xlu0 %v2972, 64
        %v3615 = vpop.permute.xlu0 %3614
        %3616 = vrot.lane.b32.xlu0 %v2973, 64
        %v3617 = vpop.permute.xlu0 %3616
        %3618 = vrot.lane.b32.xlu0 %v2974, 64
        %v3619 = vpop.permute.xlu0 %3618
        %3620 = vrot.lane.b32.xlu0 %v2975, 64
        %v3621 = vpop.permute.xlu0 %3620
        %3622 = vrot.lane.b32.xlu0 %v2976, 64
        %v3623 = vpop.permute.xlu0 %3622
        %3624 = vrot.lane.b32.xlu0 %v2977, 64
        %v3625 = vpop.permute.xlu0 %3624
        %3626 = vrot.lane.b32.xlu0 %v2978, 64
        %v3627 = vpop.permute.xlu0 %3626
        %3628 = vrot.lane.b32.xlu0 %v2979, 64
        %v3629 = vpop.permute.xlu0 %3628
        %3630 = vrot.lane.b32.xlu0 %v2980, 64
        %v3631 = vpop.permute.xlu0 %3630
        %3632 = vrot.lane.b32.xlu0 %v2981, 64
        %v3633 = vpop.permute.xlu0 %3632
        %3634 = vrot.lane.b32.xlu0 %v2982, 64
        %v3635 = vpop.permute.xlu0 %3634
        %3636 = vrot.lane.b32.xlu0 %v2983, 64
        %v3637 = vpop.permute.xlu0 %3636
        %3638 = vrot.lane.b32.xlu0 %v2984, 64
        %v3639 = vpop.permute.xlu0 %3638
        %3640 = vrot.lane.b32.xlu0 %v2985, 64
        %v3641 = vpop.permute.xlu0 %3640
        %3642 = vrot.lane.b32.xlu0 %v2986, 64
        %v3643 = vpop.permute.xlu0 %3642
        %3644 = vrot.lane.b32.xlu0 %v2987, 64
        %v3645 = vpop.permute.xlu0 %3644
        %3646 = vrot.lane.b32.xlu0 %v2988, 64
        %v3647 = vpop.permute.xlu0 %3646
        %3648 = vrot.lane.b32.xlu0 %v2989, 64
        %v3649 = vpop.permute.xlu0 %3648
        %3650 = vrot.lane.b32.xlu0 %v2990, 64
        %v3651 = vpop.permute.xlu0 %3650
        %3652 = vrot.lane.b32.xlu0 %v2991, 64
        %v3653 = vpop.permute.xlu0 %3652
        %3654 = vrot.lane.b32.xlu0 %v2992, 64
        %v3655 = vpop.permute.xlu0 %3654
        %3656 = vrot.lane.b32.xlu0 %v2993, 64
        %v3657 = vpop.permute.xlu0 %3656
        %3658 = vrot.lane.b32.xlu0 %v2994, 64
        %v3659 = vpop.permute.xlu0 %3658
        %3660 = vrot.lane.b32.xlu0 %v2995, 64
        %v3661 = vpop.permute.xlu0 %3660
        %3662 = vrot.lane.b32.xlu0 %v2996, 64
        %v3663 = vpop.permute.xlu0 %3662
        %3664 = vrot.lane.b32.xlu0 %v2997, 64
        %v3665 = vpop.permute.xlu0 %3664
        %3666 = vrot.lane.b32.xlu0 %v2998, 64
        %v3667 = vpop.permute.xlu0 %3666
        %3668 = vrot.lane.b32.xlu0 %v2999, 64
        %v3669 = vpop.permute.xlu0 %3668
        %3670 = vrot.lane.b32.xlu0 %v3000, 64
        %v3671 = vpop.permute.xlu0 %3670
        %3672 = vrot.lane.b32.xlu0 %v3001, 64
        %v3673 = vpop.permute.xlu0 %3672
        %3738 = vrot.lane.b32.xlu0 %v3002, 96
        %v3739 = vpop.permute.xlu0 %3738
        %3740 = vrot.lane.b32.xlu0 %v3003, 96
        %v3741 = vpop.permute.xlu0 %3740
        %3742 = vrot.lane.b32.xlu0 %v3004, 96
        %v3743 = vpop.permute.xlu0 %3742
        %3744 = vrot.lane.b32.xlu0 %v3005, 96
        %v3745 = vpop.permute.xlu0 %3744
        %3746 = vrot.lane.b32.xlu0 %v3006, 96
        %v3747 = vpop.permute.xlu0 %3746
        %3748 = vrot.lane.b32.xlu0 %v3007, 96
        %v3749 = vpop.permute.xlu0 %3748
        %3750 = vrot.lane.b32.xlu0 %v3008, 96
        %v3751 = vpop.permute.xlu0 %3750
        %3752 = vrot.lane.b32.xlu0 %v3009, 96
        %v3753 = vpop.permute.xlu0 %3752
        %3754 = vrot.lane.b32.xlu0 %v3010, 96
        %v3755 = vpop.permute.xlu0 %3754
        %3756 = vrot.lane.b32.xlu0 %v3011, 96
        %v3757 = vpop.permute.xlu0 %3756
        %3758 = vrot.lane.b32.xlu0 %v3012, 96
        %v3759 = vpop.permute.xlu0 %3758
        %3760 = vrot.lane.b32.xlu0 %v3013, 96
        %v3761 = vpop.permute.xlu0 %3760
        %3762 = vrot.lane.b32.xlu0 %v3014, 96
        %v3763 = vpop.permute.xlu0 %3762
        %3764 = vrot.lane.b32.xlu0 %v3015, 96
        %v3765 = vpop.permute.xlu0 %3764
        %3766 = vrot.lane.b32.xlu0 %v3016, 96
        %v3767 = vpop.permute.xlu0 %3766
        %3768 = vrot.lane.b32.xlu0 %v3017, 96
        %v3769 = vpop.permute.xlu0 %3768
        %3770 = vrot.lane.b32.xlu0 %v3018, 96
        %v3771 = vpop.permute.xlu0 %3770
        %3772 = vrot.lane.b32.xlu0 %v3019, 96
        %v3773 = vpop.permute.xlu0 %3772
        %3774 = vrot.lane.b32.xlu0 %v3020, 96
        %v3775 = vpop.permute.xlu0 %3774
        %3776 = vrot.lane.b32.xlu0 %v3021, 96
        %v3777 = vpop.permute.xlu0 %3776
        %3778 = vrot.lane.b32.xlu0 %v3022, 96
        %v3779 = vpop.permute.xlu0 %3778
        %3780 = vrot.lane.b32.xlu0 %v3023, 96
        %v3781 = vpop.permute.xlu0 %3780
        %3782 = vrot.lane.b32.xlu0 %v3024, 96
        %v3783 = vpop.permute.xlu0 %3782
        %3784 = vrot.lane.b32.xlu0 %v3025, 96
        %v3785 = vpop.permute.xlu0 %3784
        %3786 = vrot.lane.b32.xlu0 %v3026, 96
        %v3787 = vpop.permute.xlu0 %3786
        %3788 = vrot.lane.b32.xlu0 %v3027, 96
        %v3789 = vpop.permute.xlu0 %3788
        %3790 = vrot.lane.b32.xlu0 %v3028, 96
        %v3791 = vpop.permute.xlu0 %3790
        %3792 = vrot.lane.b32.xlu0 %v3029, 96
        %v3793 = vpop.permute.xlu0 %3792
        %3794 = vrot.lane.b32.xlu0 %v3030, 96
        %v3795 = vpop.permute.xlu0 %3794
        %3796 = vrot.lane.b32.xlu0 %v3031, 96
        %v3797 = vpop.permute.xlu0 %3796
        %3798 = vrot.lane.b32.xlu0 %v3032, 96
        %v3799 = vpop.permute.xlu0 %3798
        %3800 = vrot.lane.b32.xlu0 %v3033, 96
        %v3801 = vpop.permute.xlu0 %3800
        %v3834 = vsel %vm2698, %v2777, %v3099
        %v3835 = vsel %vm2698, %v2778, %v3101
        %v3836 = vsel %vm2698, %v2779, %v3103
        %v3837 = vsel %vm2698, %v2780, %v3105
        %v3838 = vsel %vm2698, %v2781, %v3107
        %v3839 = vsel %vm2698, %v2782, %v3109
        %v3840 = vsel %vm2698, %v2783, %v3111
        %v3841 = vsel %vm2698, %v2784, %v3113
        %v3842 = vsel %vm2698, %v2785, %v3115
        %v3843 = vsel %vm2698, %v2786, %v3117
        %v3844 = vsel %vm2698, %v2787, %v3119
        %v3845 = vsel %vm2698, %v2788, %v3121
        %v3846 = vsel %vm2698, %v2789, %v3123
        %v3847 = vsel %vm2698, %v2790, %v3125
        %v3848 = vsel %vm2698, %v2791, %v3127
        %v3849 = vsel %vm2698, %v2792, %v3129
        %v3850 = vsel %vm2698, %v2793, %v3131
        %v3851 = vsel %vm2698, %v2794, %v3133
        %v3852 = vsel %vm2698, %v2795, %v3135
        %v3853 = vsel %vm2698, %v2796, %v3137
        %v3854 = vsel %vm2698, %v2797, %v3139
        %v3855 = vsel %vm2698, %v2798, %v3141
        %v3856 = vsel %vm2698, %v2799, %v3143
        %v3857 = vsel %vm2698, %v2800, %v3145
        %v3858 = vsel %vm2698, %v2801, %v3147
        %v3859 = vsel %vm2698, %v2802, %v3149
        %v3860 = vsel %vm2698, %v2803, %v3151
        %v3861 = vsel %vm2698, %v2804, %v3153
        %v3862 = vsel %vm2698, %v2805, %v3155
        %v3863 = vsel %vm2698, %v2806, %v3157
        %v3864 = vsel %vm2698, %v2807, %v3159
        %v3865 = vsel %vm2698, %v2808, %v3161
        %vm3866 = vcmask 523264
        %v3867 = vsel %vm3866, %v3834, %v3227
        %v3868 = vsel %vm3866, %v3835, %v3229
        %v3869 = vsel %vm3866, %v3836, %v3231
        %v3870 = vsel %vm3866, %v3837, %v3233
        %v3871 = vsel %vm3866, %v3838, %v3235
        %v3872 = vsel %vm3866, %v3839, %v3237
        %v3873 = vsel %vm3866, %v3840, %v3239
        %v3874 = vsel %vm3866, %v3841, %v3241
        %v3875 = vsel %vm3866, %v3842, %v3243
        %v3876 = vsel %vm3866, %v3843, %v3245
        %v3877 = vsel %vm3866, %v3844, %v3247
        %v3878 = vsel %vm3866, %v3845, %v3249
        %v3879 = vsel %vm3866, %v3846, %v3251
        %v3880 = vsel %vm3866, %v3847, %v3253
        %v3881 = vsel %vm3866, %v3848, %v3255
        %v3882 = vsel %vm3866, %v3849, %v3257
        %v3883 = vsel %vm3866, %v3850, %v3259
        %v3884 = vsel %vm3866, %v3851, %v3261
        %v3885 = vsel %vm3866, %v3852, %v3263
        %v3886 = vsel %vm3866, %v3853, %v3265
        %v3887 = vsel %vm3866, %v3854, %v3267
        %v3888 = vsel %vm3866, %v3855, %v3269
        %v3889 = vsel %vm3866, %v3856, %v3271
        %v3890 = vsel %vm3866, %v3857, %v3273
        %v3891 = vsel %vm3866, %v3858, %v3275
        %v3892 = vsel %vm3866, %v3859, %v3277
        %v3893 = vsel %vm3866, %v3860, %v3279
        %v3894 = vsel %vm3866, %v3861, %v3281
        %v3895 = vsel %vm3866, %v3862, %v3283
        %v3896 = vsel %vm3866, %v3863, %v3285
        %v3897 = vsel %vm3866, %v3864, %v3287
        %v3898 = vsel %vm3866, %v3865, %v3289
        %vm3899 = vcmask 785408
        %v3900 = vsel %vm3899, %v3867, %v3355
        %v3901 = vsel %vm3899, %v3868, %v3357
        %v3902 = vsel %vm3899, %v3869, %v3359
        %v3903 = vsel %vm3899, %v3870, %v3361
        %v3904 = vsel %vm3899, %v3871, %v3363
        %v3905 = vsel %vm3899, %v3872, %v3365
        %v3906 = vsel %vm3899, %v3873, %v3367
        %v3907 = vsel %vm3899, %v3874, %v3369
        %v3908 = vsel %vm3899, %v3875, %v3371
        %v3909 = vsel %vm3899, %v3876, %v3373
        %v3910 = vsel %vm3899, %v3877, %v3375
        %v3911 = vsel %vm3899, %v3878, %v3377
        %v3912 = vsel %vm3899, %v3879, %v3379
        %v3913 = vsel %vm3899, %v3880, %v3381
        %v3914 = vsel %vm3899, %v3881, %v3383
        %v3915 = vsel %vm3899, %v3882, %v3385
        %v3916 = vsel %vm3899, %v3883, %v3387
        %v3917 = vsel %vm3899, %v3884, %v3389
        %v3918 = vsel %vm3899, %v3885, %v3391
        %v3919 = vsel %vm3899, %v3886, %v3393
        %v3920 = vsel %vm3899, %v3887, %v3395
        %v3921 = vsel %vm3899, %v3888, %v3397
        %v3922 = vsel %vm3899, %v3889, %v3399
        %v3923 = vsel %vm3899, %v3890, %v3401
        %v3924 = vsel %vm3899, %v3891, %v3403
        %v3925 = vsel %vm3899, %v3892, %v3405
        %v3926 = vsel %vm3899, %v3893, %v3407
        %v3927 = vsel %vm3899, %v3894, %v3409
        %v3928 = vsel %vm3899, %v3895, %v3411
        %v3929 = vsel %vm3899, %v3896, %v3413
        %v3930 = vsel %vm3899, %v3897, %v3415
        %v3931 = vsel %vm3899, %v3898, %v3417
        %v3932 = vsel %vm2698, %v2905, %v3483
        %v3933 = vsel %vm2698, %v2906, %v3485
        %v3934 = vsel %vm2698, %v2907, %v3487
        %v3935 = vsel %vm2698, %v2908, %v3489
        %v3936 = vsel %vm2698, %v2909, %v3491
        %v3937 = vsel %vm2698, %v2910, %v3493
        %v3938 = vsel %vm2698, %v2911, %v3495
        %v3939 = vsel %vm2698, %v2912, %v3497
        %v3940 = vsel %vm2698, %v2913, %v3499
        %v3941 = vsel %vm2698, %v2914, %v3501
        %v3942 = vsel %vm2698, %v2915, %v3503
        %v3943 = vsel %vm2698, %v2916, %v3505
        %v3944 = vsel %vm2698, %v2917, %v3507
        %v3945 = vsel %vm2698, %v2918, %v3509
        %v3946 = vsel %vm2698, %v2919, %v3511
        %v3947 = vsel %vm2698, %v2920, %v3513
        %v3948 = vsel %vm2698, %v2921, %v3515
        %v3949 = vsel %vm2698, %v2922, %v3517
        %v3950 = vsel %vm2698, %v2923, %v3519
        %v3951 = vsel %vm2698, %v2924, %v3521
        %v3952 = vsel %vm2698, %v2925, %v3523
        %v3953 = vsel %vm2698, %v2926, %v3525
        %v3954 = vsel %vm2698, %v2927, %v3527
        %v3955 = vsel %vm2698, %v2928, %v3529
        %v3956 = vsel %vm2698, %v2929, %v3531
        %v3957 = vsel %vm2698, %v2930, %v3533
        %v3958 = vsel %vm2698, %v2931, %v3535
        %v3959 = vsel %vm2698, %v2932, %v3537
        %v3960 = vsel %vm2698, %v2933, %v3539
        %v3961 = vsel %vm2698, %v2934, %v3541
        %v3962 = vsel %vm2698, %v2935, %v3543
        %v3963 = vsel %vm2698, %v2936, %v3545
        %v3964 = vsel %vm3866, %v3932, %v3611
        %v3965 = vsel %vm3866, %v3933, %v3613
        %v3966 = vsel %vm3866, %v3934, %v3615
        %v3967 = vsel %vm3866, %v3935, %v3617
        %v3968 = vsel %vm3866, %v3936, %v3619
        %v3969 = vsel %vm3866, %v3937, %v3621
        %v3970 = vsel %vm3866, %v3938, %v3623
        %v3971 = vsel %vm3866, %v3939, %v3625
        %v3972 = vsel %vm3866, %v3940, %v3627
        %v3973 = vsel %vm3866, %v3941, %v3629
        %v3974 = vsel %vm3866, %v3942, %v3631
        %v3975 = vsel %vm3866, %v3943, %v3633
        %v3976 = vsel %vm3866, %v3944, %v3635
        %v3977 = vsel %vm3866, %v3945, %v3637
        %v3978 = vsel %vm3866, %v3946, %v3639
        %v3979 = vsel %vm3866, %v3947, %v3641
        %v3980 = vsel %vm3866, %v3948, %v3643
        %v3981 = vsel %vm3866, %v3949, %v3645
        %v3982 = vsel %vm3866, %v3950, %v3647
        %v3983 = vsel %vm3866, %v3951, %v3649
        %v3984 = vsel %vm3866, %v3952, %v3651
        %v3985 = vsel %vm3866, %v3953, %v3653
        %v3986 = vsel %vm3866, %v3954, %v3655
        %v3987 = vsel %vm3866, %v3955, %v3657
        %v3988 = vsel %vm3866, %v3956, %v3659
        %v3989 = vsel %vm3866, %v3957, %v3661
        %v3990 = vsel %vm3866, %v3958, %v3663
        %v3991 = vsel %vm3866, %v3959, %v3665
        %v3992 = vsel %vm3866, %v3960, %v3667
        %v3993 = vsel %vm3866, %v3961, %v3669
        %v3994 = vsel %vm3866, %v3962, %v3671
        %v3995 = vsel %vm3866, %v3963, %v3673
        %v3996 = vsel %vm3899, %v3964, %v3739
        %v3997 = vsel %vm3899, %v3965, %v3741
        %v3998 = vsel %vm3899, %v3966, %v3743
        %v3999 = vsel %vm3899, %v3967, %v3745
        %v4000 = vsel %vm3899, %v3968, %v3747
        %v4001 = vsel %vm3899, %v3969, %v3749
        %v4002 = vsel %vm3899, %v3970, %v3751
        %v4003 = vsel %vm3899, %v3971, %v3753
        %v4004 = vsel %vm3899, %v3972, %v3755
        %v4005 = vsel %vm3899, %v3973, %v3757
        %v4006 = vsel %vm3899, %v3974, %v3759
        %v4007 = vsel %vm3899, %v3975, %v3761
        %v4008 = vsel %vm3899, %v3976, %v3763
        %v4009 = vsel %vm3899, %v3977, %v3765
        %v4010 = vsel %vm3899, %v3978, %v3767
        %v4011 = vsel %vm3899, %v3979, %v3769
        %v4012 = vsel %vm3899, %v3980, %v3771
        %v4013 = vsel %vm3899, %v3981, %v3773
        %v4014 = vsel %vm3899, %v3982, %v3775
        %v4015 = vsel %vm3899, %v3983, %v3777
        %v4016 = vsel %vm3899, %v3984, %v3779
        %v4017 = vsel %vm3899, %v3985, %v3781
        %v4018 = vsel %vm3899, %v3986, %v3783
        %v4019 = vsel %vm3899, %v3987, %v3785
        %v4020 = vsel %vm3899, %v3988, %v3787
        %v4021 = vsel %vm3899, %v3989, %v3789
        %v4022 = vsel %vm3899, %v3990, %v3791
        %v4023 = vsel %vm3899, %v3991, %v3793
        %v4024 = vsel %vm3899, %v3992, %v3795
        %v4025 = vsel %vm3899, %v3993, %v3797
        %v4026 = vsel %vm3899, %v3994, %v3799
        %v4027 = vsel %vm3899, %v3995, %v3801
        %v4028 = vpack.c.bf16 %v3901, %v3900
        %v4029 = vpack.c.bf16 %v3997, %v3996
        %v4030 = vpack.c.bf16 %v3035, %v3034
        %v4031 = vpack.c.bf16 %v3903, %v3902
        %v4032 = vpack.c.bf16 %v3999, %v3998
        %v4033 = vpack.c.bf16 %v3037, %v3036
        %v4034 = vpack.c.bf16 %v3905, %v3904
        %v4035 = vpack.c.bf16 %v4001, %v4000
        %v4036 = vpack.c.bf16 %v3039, %v3038
        %v4037 = vpack.c.bf16 %v3907, %v3906
        %v4038 = vpack.c.bf16 %v4003, %v4002
        %v4039 = vpack.c.bf16 %v3041, %v3040
        %v4040 = vpack.c.bf16 %v3909, %v3908
        %v4041 = vpack.c.bf16 %v4005, %v4004
        %v4042 = vpack.c.bf16 %v3043, %v3042
        %v4043 = vpack.c.bf16 %v3911, %v3910
        %v4044 = vpack.c.bf16 %v4007, %v4006
        %v4045 = vpack.c.bf16 %v3045, %v3044
        %v4046 = vpack.c.bf16 %v3913, %v3912
        %v4047 = vpack.c.bf16 %v4009, %v4008
        %v4048 = vpack.c.bf16 %v3047, %v3046
        %v4049 = vpack.c.bf16 %v3915, %v3914
        %v4050 = vpack.c.bf16 %v4011, %v4010
        %v4051 = vpack.c.bf16 %v3049, %v3048
        %v4052 = vpack.c.bf16 %v3917, %v3916
        %v4053 = vpack.c.bf16 %v4013, %v4012
        %v4054 = vpack.c.bf16 %v3051, %v3050
        %v4055 = vpack.c.bf16 %v3919, %v3918
        %v4056 = vpack.c.bf16 %v4015, %v4014
        %v4057 = vpack.c.bf16 %v3053, %v3052
        %v4058 = vpack.c.bf16 %v3921, %v3920
        %v4059 = vpack.c.bf16 %v4017, %v4016
        %v4060 = vpack.c.bf16 %v3055, %v3054
        %v4061 = vpack.c.bf16 %v3923, %v3922
        %v4062 = vpack.c.bf16 %v4019, %v4018
        %v4063 = vpack.c.bf16 %v3057, %v3056
        %v4064 = vpack.c.bf16 %v3925, %v3924
        %v4065 = vpack.c.bf16 %v4021, %v4020
        %v4066 = vpack.c.bf16 %v3059, %v3058
        %v4067 = vpack.c.bf16 %v3927, %v3926
        %v4068 = vpack.c.bf16 %v4023, %v4022
        %v4069 = vpack.c.bf16 %v3061, %v3060
        %v4070 = vpack.c.bf16 %v3929, %v3928
        %v4071 = vpack.c.bf16 %v4025, %v4024
        %v4072 = vpack.c.bf16 %v3063, %v3062
        %v4073 = vpack.c.bf16 %v3931, %v3930
        %v4074 = vpack.c.bf16 %v4027, %v4026
        %v4075 = vpack.c.bf16 %v3065, %v3064
        %v4076 = vld [vmem:[%s4] sm:$0xf]
        %v4077 = vld [vmem:[%s4 + $0x4] sm:$0xf]
        %v4078 = vld [vmem:[%s4 + $0x8] sm:$0xf]
        %v4079 = vld [vmem:[%s4 + $0xc] sm:$0xf]
        %v4080 = vld [vmem:[%s4 + $0x10] sm:$0xf]
        %v4081 = vld [vmem:[%s4 + $0x14] sm:$0xf]
        %v4082 = vld [vmem:[%s4 + $0x18] sm:$0xf]
        %v4083 = vld [vmem:[%s4 + $0x1c] sm:$0xf]
        %v4084 = vld [vmem:[%s4 + $0x20] sm:$0xf]
        %v4085 = vld [vmem:[%s4 + $0x24] sm:$0xf]
        %v4086 = vld [vmem:[%s4 + $0x28] sm:$0xf]
        %v4087 = vld [vmem:[%s4 + $0x2c] sm:$0xf]
        %v4088 = vld [vmem:[%s4 + $0x30] sm:$0xf]
        %v4089 = vld [vmem:[%s4 + $0x34] sm:$0xf]
        %v4090 = vld [vmem:[%s4 + $0x38] sm:$0xf]
        %v4091 = vld [vmem:[%s4 + $0x3c] sm:$0xf]
        %v4092 = vld [vmem:[%s4 + $0x40] sm:$0xf]
        %v4093 = vld [vmem:[%s4 + $0x44] sm:$0xf]
        %v4094 = vld [vmem:[%s4 + $0x48] sm:$0xf]
        %v4095 = vld [vmem:[%s4 + $0x4c] sm:$0xf]
        %v4096 = vld [vmem:[%s4 + $0x50] sm:$0xf]
        %v4097 = vld [vmem:[%s4 + $0x54] sm:$0xf]
        %v4098 = vld [vmem:[%s4 + $0x58] sm:$0xf]
        %v4099 = vld [vmem:[%s4 + $0x5c] sm:$0xf]
        %v4100 = vld [vmem:[%s4 + $0x60] sm:$0xf]
        %v4101 = vld [vmem:[%s4 + $0x64] sm:$0xf]
        %v4102 = vld [vmem:[%s4 + $0x68] sm:$0xf]
        %v4103 = vld [vmem:[%s4 + $0x6c] sm:$0xf]
        %v4104 = vld [vmem:[%s4 + $0x70] sm:$0xf]
        %v4105 = vld [vmem:[%s4 + $0x74] sm:$0xf]
        %v4106 = vld [vmem:[%s4 + $0x78] sm:$0xf]
        %v4107 = vld [vmem:[%s4 + $0x7c] sm:$0xf]
        %v4108 = vld [vmem:[%s4 + $0x80] sm:$0xf]
        %v4109 = vld [vmem:[%s4 + $0x84] sm:$0xf]
        %v4110 = vld [vmem:[%s4 + $0x88] sm:$0xf]
        %v4111 = vld [vmem:[%s4 + $0x8c] sm:$0xf]
        %v4112 = vld [vmem:[%s5] sm:$0x1]
        %v4114 = vperm.slane %v4112, 0
        %v4152 = vunpack.c.l.b16 %v4076
        %v4153 = vunpack.c.l.b16 %v4077
        %v4154 = vunpack.c.l.b16 %v4078
        %v4155 = vunpack.c.l.b16 %v4079
        %v4156 = vunpack.c.l.b16 %v4080
        %v4157 = vunpack.c.l.b16 %v4081
        %v4158 = vunpack.c.l.b16 %v4082
        %v4159 = vunpack.c.l.b16 %v4083
        %v4160 = vunpack.c.l.b16 %v4084
        %v4161 = vunpack.c.l.b16 %v4085
        %v4162 = vunpack.c.l.b16 %v4086
        %v4163 = vunpack.c.l.b16 %v4087
        %v4164 = vunpack.c.l.b16 %v4088
        %v4165 = vunpack.c.l.b16 %v4089
        %v4166 = vunpack.c.l.b16 %v4090
        %v4167 = vunpack.c.l.b16 %v4091
        %v4168 = vunpack.c.l.b16 %v4092
        %v4169 = vunpack.c.l.b16 %v4093
        %v4170 = vunpack.c.l.b16 %v4094
        %v4171 = vunpack.c.l.b16 %v4095
        %v4172 = vunpack.c.l.b16 %v4096
        %v4173 = vunpack.c.l.b16 %v4097
        %v4174 = vunpack.c.l.b16 %v4098
        %v4175 = vunpack.c.l.b16 %v4099
        %v4176 = vunpack.c.l.b16 %v4100
        %v4177 = vunpack.c.l.b16 %v4101
        %v4178 = vunpack.c.l.b16 %v4102
        %v4179 = vunpack.c.l.b16 %v4103
        %v4180 = vunpack.c.l.b16 %v4104
        %v4181 = vunpack.c.l.b16 %v4105
        %v4182 = vunpack.c.l.b16 %v4106
        %v4183 = vunpack.c.l.b16 %v4107
        %v4184 = vunpack.c.l.b16 %v4108
        %v4185 = vunpack.c.l.b16 %v4109
        %v4186 = vunpack.c.l.b16 %v4110
        %v4187 = vunpack.c.l.b16 %v4111
        %v4188 = vpack.c.b16 %v4153, %v4152
        %v4189 = vpack.c.b16 %v4155, %v4154
        %v4190 = vpack.c.b16 %v4157, %v4156
        %v4191 = vpack.c.b16 %v4159, %v4158
        %v4192 = vpack.c.b16 %v4161, %v4160
        %v4193 = vpack.c.b16 %v4163, %v4162
        %v4194 = vpack.c.b16 %v4165, %v4164
        %v4195 = vpack.c.b16 %v4167, %v4166
        %v4196 = vpack.c.b16 %v4169, %v4168
        %v4197 = vpack.c.b16 %v4171, %v4170
        %v4198 = vpack.c.b16 %v4173, %v4172
        %v4199 = vpack.c.b16 %v4175, %v4174
        %v4200 = vpack.c.b16 %v4177, %v4176
        %v4201 = vpack.c.b16 %v4179, %v4178
        %v4202 = vpack.c.b16 %v4181, %v4180
        %v4203 = vpack.c.b16 %v4183, %v4182
        %v4204 = vpack.c.b16 %v4185, %v4184
        %v4205 = vpack.c.b16 %v4187, %v4186
        %v4225 = vsel %vm2698, %v4030, 0
        %v4228 = vsel %vm2698, %v4033, 0
        %v4231 = vsel %vm2698, %v4036, 0
        %v4234 = vsel %vm2698, %v4039, 0
        %v4237 = vsel %vm2698, %v4042, 0
        %v4240 = vsel %vm2698, %v4045, 0
        %v4243 = vsel %vm2698, %v4048, 0
        %v4246 = vsel %vm2698, %v4051, 0
        %v4249 = vsel %vm2698, %v4054, 0
        %v4252 = vsel %vm2698, %v4057, 0
        %v4255 = vsel %vm2698, %v4060, 0
        %v4258 = vsel %vm2698, %v4063, 0
        %v4261 = vsel %vm2698, %v4066, 0
        %v4264 = vsel %vm2698, %v4069, 0
        %v4267 = vsel %vm2698, %v4072, 0
        %v4270 = vsel %vm2698, %v4075, 0
        %4272 = vmatpush.bf16.msra.mxu0 %v4195
        %4273 = vmatpush.bf16.msra.mxu0 %v4194
        %4274 = vmatpush.bf16.msra.mxu0 %v4193
        %4275 = vmatpush.bf16.msra.mxu0 %v4192
        %4276 = vmatpush.bf16.msra.mxu0 %v4191
        %4277 = vmatpush.bf16.msra.mxu0 %v4190
        %4278 = vmatpush.bf16.msra.mxu0 %v4189
        %4279 = vmatpush.bf16.msra.mxu0 %v4188
        %4280 = vmatmul.bf16.gmra.mxu0 %v4028
        %v4281 = vpop.f32.mrf.mxu0
        %v4282 = vadd.f32 %v4114, %v4281
        %v4283 = vpop.f32.mrf.mxu0
        %v4284 = vadd.f32 %v4114, %v4283
        %4285 = vmatmul.bf16.gmra.mxu0 %v4031
        %v4286 = vpop.f32.mrf.mxu0
        %v4287 = vadd.f32 %v4114, %v4286
        %v4288 = vpop.f32.mrf.mxu0
        %v4289 = vadd.f32 %v4114, %v4288
        %4290 = vmatmul.bf16.gmra.mxu0 %v4034
        %v4291 = vpop.f32.mrf.mxu0
        %v4292 = vadd.f32 %v4114, %v4291
        %v4293 = vpop.f32.mrf.mxu0
        %v4294 = vadd.f32 %v4114, %v4293
        %4295 = vmatmul.bf16.gmra.mxu0 %v4037
        %v4296 = vpop.f32.mrf.mxu0
        %v4297 = vadd.f32 %v4114, %v4296
        %v4298 = vpop.f32.mrf.mxu0
        %v4299 = vadd.f32 %v4114, %v4298
        %4300 = vmatmul.bf16.gmra.mxu0 %v4040
        %v4301 = vpop.f32.mrf.mxu0
        %v4302 = vadd.f32 %v4114, %v4301
        %v4303 = vpop.f32.mrf.mxu0
        %v4304 = vadd.f32 %v4114, %v4303
        %4305 = vmatmul.bf16.gmra.mxu0 %v4043
        %v4306 = vpop.f32.mrf.mxu0
        %v4307 = vadd.f32 %v4114, %v4306
        %v4308 = vpop.f32.mrf.mxu0
        %v4309 = vadd.f32 %v4114, %v4308
        %4310 = vmatmul.bf16.gmra.mxu0 %v4046
        %v4311 = vpop.f32.mrf.mxu0
        %v4312 = vadd.f32 %v4114, %v4311
        %v4313 = vpop.f32.mrf.mxu0
        %v4314 = vadd.f32 %v4114, %v4313
        %4315 = vmatmul.bf16.gmra.mxu0 %v4049
        %v4316 = vpop.f32.mrf.mxu0
        %v4317 = vadd.f32 %v4114, %v4316
        %v4318 = vpop.f32.mrf.mxu0
        %v4319 = vadd.f32 %v4114, %v4318
        %4320 = vmatmul.bf16.gmra.mxu0 %v4052
        %v4321 = vpop.f32.mrf.mxu0
        %v4322 = vadd.f32 %v4114, %v4321
        %v4323 = vpop.f32.mrf.mxu0
        %v4324 = vadd.f32 %v4114, %v4323
        %4325 = vmatmul.bf16.gmra.mxu0 %v4055
        %v4326 = vpop.f32.mrf.mxu0
        %v4327 = vadd.f32 %v4114, %v4326
        %v4328 = vpop.f32.mrf.mxu0
        %v4329 = vadd.f32 %v4114, %v4328
        %4330 = vmatmul.bf16.gmra.mxu0 %v4058
        %v4331 = vpop.f32.mrf.mxu0
        %v4332 = vadd.f32 %v4114, %v4331
        %v4333 = vpop.f32.mrf.mxu0
        %v4334 = vadd.f32 %v4114, %v4333
        %4335 = vmatmul.bf16.gmra.mxu0 %v4061
        %v4336 = vpop.f32.mrf.mxu0
        %v4337 = vadd.f32 %v4114, %v4336
        %v4338 = vpop.f32.mrf.mxu0
        %v4339 = vadd.f32 %v4114, %v4338
        %4340 = vmatmul.bf16.gmra.mxu0 %v4064
        %v4341 = vpop.f32.mrf.mxu0
        %v4342 = vadd.f32 %v4114, %v4341
        %v4343 = vpop.f32.mrf.mxu0
        %v4344 = vadd.f32 %v4114, %v4343
        %4345 = vmatmul.bf16.gmra.mxu0 %v4067
        %v4346 = vpop.f32.mrf.mxu0
        %v4347 = vadd.f32 %v4114, %v4346
        %v4348 = vpop.f32.mrf.mxu0
        %v4349 = vadd.f32 %v4114, %v4348
        %4350 = vmatmul.bf16.gmra.mxu0 %v4070
        %v4351 = vpop.f32.mrf.mxu0
        %v4352 = vadd.f32 %v4114, %v4351
        %v4353 = vpop.f32.mrf.mxu0
        %v4354 = vadd.f32 %v4114, %v4353
        %4355 = vmatmul.bf16.gmra.mxu0 %v4073
        %v4356 = vpop.f32.mrf.mxu0
        %v4357 = vadd.f32 %v4114, %v4356
        %v4358 = vpop.f32.mrf.mxu0
        %v4359 = vadd.f32 %v4114, %v4358
        %4360 = vdwg.mxu0
        %4361 = vmatpush.bf16.msra.mxu0 %v4203
        %4362 = vmatpush.bf16.msra.mxu0 %v4202
        %4363 = vmatpush.bf16.msra.mxu0 %v4201
        %4364 = vmatpush.bf16.msra.mxu0 %v4200
        %4365 = vmatpush.bf16.msra.mxu0 %v4199
        %4366 = vmatpush.bf16.msra.mxu0 %v4198
        %4367 = vmatpush.bf16.msra.mxu0 %v4197
        %4368 = vmatpush.bf16.msra.mxu0 %v4196
        %4369 = vmatmul.bf16.gmra.mxu0 %v4029
        %v4370 = vpop.f32.mrf.mxu0
        %v4371 = vadd.f32 %v4282, %v4370
        %v4372 = vpop.f32.mrf.mxu0
        %v4373 = vadd.f32 %v4284, %v4372
        %4374 = vmatmul.bf16.gmra.mxu0 %v4032
        %v4375 = vpop.f32.mrf.mxu0
        %v4376 = vadd.f32 %v4287, %v4375
        %v4377 = vpop.f32.mrf.mxu0
        %v4378 = vadd.f32 %v4289, %v4377
        %4379 = vmatmul.bf16.gmra.mxu0 %v4035
        %v4380 = vpop.f32.mrf.mxu0
        %v4381 = vadd.f32 %v4292, %v4380
        %v4382 = vpop.f32.mrf.mxu0
        %v4383 = vadd.f32 %v4294, %v4382
        %4384 = vmatmul.bf16.gmra.mxu0 %v4038
        %v4385 = vpop.f32.mrf.mxu0
        %v4386 = vadd.f32 %v4297, %v4385
        %v4387 = vpop.f32.mrf.mxu0
        %v4388 = vadd.f32 %v4299, %v4387
        %4389 = vmatmul.bf16.gmra.mxu0 %v4041
        %v4390 = vpop.f32.mrf.mxu0
        %v4391 = vadd.f32 %v4302, %v4390
        %v4392 = vpop.f32.mrf.mxu0
        %v4393 = vadd.f32 %v4304, %v4392
        %4394 = vmatmul.bf16.gmra.mxu0 %v4044
        %v4395 = vpop.f32.mrf.mxu0
        %v4396 = vadd.f32 %v4307, %v4395
        %v4397 = vpop.f32.mrf.mxu0
        %v4398 = vadd.f32 %v4309, %v4397
        %4399 = vmatmul.bf16.gmra.mxu0 %v4047
        %v4400 = vpop.f32.mrf.mxu0
        %v4401 = vadd.f32 %v4312, %v4400
        %v4402 = vpop.f32.mrf.mxu0
        %v4403 = vadd.f32 %v4314, %v4402
        %4404 = vmatmul.bf16.gmra.mxu0 %v4050
        %v4405 = vpop.f32.mrf.mxu0
        %v4406 = vadd.f32 %v4317, %v4405
        %v4407 = vpop.f32.mrf.mxu0
        %v4408 = vadd.f32 %v4319, %v4407
        %4409 = vmatmul.bf16.gmra.mxu0 %v4053
        %v4410 = vpop.f32.mrf.mxu0
        %v4411 = vadd.f32 %v4322, %v4410
        %v4412 = vpop.f32.mrf.mxu0
        %v4413 = vadd.f32 %v4324, %v4412
        %4414 = vmatmul.bf16.gmra.mxu0 %v4056
        %v4415 = vpop.f32.mrf.mxu0
        %v4416 = vadd.f32 %v4327, %v4415
        %v4417 = vpop.f32.mrf.mxu0
        %v4418 = vadd.f32 %v4329, %v4417
        %4419 = vmatmul.bf16.gmra.mxu0 %v4059
        %v4420 = vpop.f32.mrf.mxu0
        %v4421 = vadd.f32 %v4332, %v4420
        %v4422 = vpop.f32.mrf.mxu0
        %v4423 = vadd.f32 %v4334, %v4422
        %4424 = vmatmul.bf16.gmra.mxu0 %v4062
        %v4425 = vpop.f32.mrf.mxu0
        %v4426 = vadd.f32 %v4337, %v4425
        %v4427 = vpop.f32.mrf.mxu0
        %v4428 = vadd.f32 %v4339, %v4427
        %4429 = vmatmul.bf16.gmra.mxu0 %v4065
        %v4430 = vpop.f32.mrf.mxu0
        %v4431 = vadd.f32 %v4342, %v4430
        %v4432 = vpop.f32.mrf.mxu0
        %v4433 = vadd.f32 %v4344, %v4432
        %4434 = vmatmul.bf16.gmra.mxu0 %v4068
        %v4435 = vpop.f32.mrf.mxu0
        %v4436 = vadd.f32 %v4347, %v4435
        %v4437 = vpop.f32.mrf.mxu0
        %v4438 = vadd.f32 %v4349, %v4437
        %4439 = vmatmul.bf16.gmra.mxu0 %v4071
        %v4440 = vpop.f32.mrf.mxu0
        %v4441 = vadd.f32 %v4352, %v4440
        %v4442 = vpop.f32.mrf.mxu0
        %v4443 = vadd.f32 %v4354, %v4442
        %4444 = vmatmul.bf16.gmra.mxu0 %v4074
        %v4445 = vpop.f32.mrf.mxu0
        %v4446 = vadd.f32 %v4357, %v4445
        %v4447 = vpop.f32.mrf.mxu0
        %v4448 = vadd.f32 %v4359, %v4447
        %4449 = vdwg.mxu0
        %4450 = vmatpush.bf16.msra.mxu0 0
        %4451 = vmatpush.bf16.msra.mxu0 0
        %4452 = vmatpush.bf16.msra.mxu0 0
        %4453 = vmatpush.bf16.msra.mxu0 0
        %4454 = vmatpush.bf16.msra.mxu0 0
        %4455 = vmatpush.bf16.msra.mxu0 0
        %4456 = vmatpush.bf16.msra.mxu0 %v4205
        %4457 = vmatpush.bf16.msra.mxu0 %v4204
        %4458 = vmatmul.bf16.gmra.mxu0 %v4225
        %v4459 = vpop.f32.mrf.mxu0
        %v4460 = vadd.f32 %v4371, %v4459
        %v4461 = vpop.f32.mrf.mxu0
        %v4462 = vadd.f32 %v4373, %v4461
        %4463 = vmatmul.bf16.gmra.mxu0 %v4228
        %v4464 = vpop.f32.mrf.mxu0
        %v4465 = vadd.f32 %v4376, %v4464
        %v4466 = vpop.f32.mrf.mxu0
        %v4467 = vadd.f32 %v4378, %v4466
        %4468 = vmatmul.bf16.gmra.mxu0 %v4231
        %v4469 = vpop.f32.mrf.mxu0
        %v4470 = vadd.f32 %v4381, %v4469
        %v4471 = vpop.f32.mrf.mxu0
        %v4472 = vadd.f32 %v4383, %v4471
        %4473 = vmatmul.bf16.gmra.mxu0 %v4234
        %v4474 = vpop.f32.mrf.mxu0
        %v4475 = vadd.f32 %v4386, %v4474
        %v4476 = vpop.f32.mrf.mxu0
        %v4477 = vadd.f32 %v4388, %v4476
        %4478 = vmatmul.bf16.gmra.mxu0 %v4237
        %v4479 = vpop.f32.mrf.mxu0
        %v4480 = vadd.f32 %v4391, %v4479
        %v4481 = vpop.f32.mrf.mxu0
        %v4482 = vadd.f32 %v4393, %v4481
        %4483 = vmatmul.bf16.gmra.mxu0 %v4240
        %v4484 = vpop.f32.mrf.mxu0
        %v4485 = vadd.f32 %v4396, %v4484
        %v4486 = vpop.f32.mrf.mxu0
        %v4487 = vadd.f32 %v4398, %v4486
        %4488 = vmatmul.bf16.gmra.mxu0 %v4243
        %v4489 = vpop.f32.mrf.mxu0
        %v4490 = vadd.f32 %v4401, %v4489
        %v4491 = vpop.f32.mrf.mxu0
        %v4492 = vadd.f32 %v4403, %v4491
        %4493 = vmatmul.bf16.gmra.mxu0 %v4246
        %v4494 = vpop.f32.mrf.mxu0
        %v4495 = vadd.f32 %v4406, %v4494
        %v4496 = vpop.f32.mrf.mxu0
        %v4497 = vadd.f32 %v4408, %v4496
        %4498 = vmatmul.bf16.gmra.mxu0 %v4249
        %v4499 = vpop.f32.mrf.mxu0
        %v4500 = vadd.f32 %v4411, %v4499
        %v4501 = vpop.f32.mrf.mxu0
        %v4502 = vadd.f32 %v4413, %v4501
        %4503 = vmatmul.bf16.gmra.mxu0 %v4252
        %v4504 = vpop.f32.mrf.mxu0
        %v4505 = vadd.f32 %v4416, %v4504
        %v4506 = vpop.f32.mrf.mxu0
        %v4507 = vadd.f32 %v4418, %v4506
        %4508 = vmatmul.bf16.gmra.mxu0 %v4255
        %v4509 = vpop.f32.mrf.mxu0
        %v4510 = vadd.f32 %v4421, %v4509
        %v4511 = vpop.f32.mrf.mxu0
        %v4512 = vadd.f32 %v4423, %v4511
        %4513 = vmatmul.bf16.gmra.mxu0 %v4258
        %v4514 = vpop.f32.mrf.mxu0
        %v4515 = vadd.f32 %v4426, %v4514
        %v4516 = vpop.f32.mrf.mxu0
        %v4517 = vadd.f32 %v4428, %v4516
        %4518 = vmatmul.bf16.gmra.mxu0 %v4261
        %v4519 = vpop.f32.mrf.mxu0
        %v4520 = vadd.f32 %v4431, %v4519
        %v4521 = vpop.f32.mrf.mxu0
        %v4522 = vadd.f32 %v4433, %v4521
        %4523 = vmatmul.bf16.gmra.mxu0 %v4264
        %v4524 = vpop.f32.mrf.mxu0
        %v4525 = vadd.f32 %v4436, %v4524
        %v4526 = vpop.f32.mrf.mxu0
        %v4527 = vadd.f32 %v4438, %v4526
        %4528 = vmatmul.bf16.gmra.mxu0 %v4267
        %v4529 = vpop.f32.mrf.mxu0
        %v4530 = vadd.f32 %v4441, %v4529
        %v4531 = vpop.f32.mrf.mxu0
        %v4532 = vadd.f32 %v4443, %v4531
        %4533 = vmatmul.bf16.gmra.mxu0 %v4270
        %v4534 = vpop.f32.mrf.mxu0
        %v4535 = vadd.f32 %v4446, %v4534
        %v4536 = vpop.f32.mrf.mxu0
        %v4537 = vadd.f32 %v4448, %v4536
        %4538 = vdwg.mxu0
        %v4539 = vld [vmem:[%s402] sm:$0xff]
        %v4540 = vld [vmem:[%s402 + $0x8] sm:$0xff]
        %v4541 = vld [vmem:[%s402 + $0x10] sm:$0xff]
        %v4542 = vld [vmem:[%s402 + $0x18] sm:$0xff]
        %v4543 = vld [vmem:[%s402 + $0x20] sm:$0xff]
        %v4544 = vld [vmem:[%s402 + $0x28] sm:$0xff]
        %v4545 = vld [vmem:[%s402 + $0x30] sm:$0xff]
        %v4546 = vld [vmem:[%s402 + $0x38] sm:$0xff]
        %v4547 = vld [vmem:[%s402 + $0x40] sm:$0xff]
        %v4548 = vld [vmem:[%s402 + $0x48] sm:$0xff]
        %v4549 = vld [vmem:[%s402 + $0x50] sm:$0xff]
        %v4550 = vld [vmem:[%s402 + $0x58] sm:$0xff]
        %v4551 = vld [vmem:[%s402 + $0x60] sm:$0xff]
        %v4552 = vld [vmem:[%s402 + $0x68] sm:$0xff]
        %v4553 = vld [vmem:[%s402 + $0x70] sm:$0xff]
        %v4554 = vld [vmem:[%s402 + $0x78] sm:$0xff]
        %v4555 = vld [vmem:[%s402 + $0x80] sm:$0xff]
        %v4556 = vld [vmem:[%s402 + $0x88] sm:$0xff]
        %v4557 = vld [vmem:[%s402 + $0x90] sm:$0xff]
        %v4558 = vld [vmem:[%s402 + $0x98] sm:$0xff]
        %v4559 = vld [vmem:[%s402 + $0xa0] sm:$0xff]
        %v4560 = vld [vmem:[%s402 + $0xa8] sm:$0xff]
        %v4561 = vld [vmem:[%s402 + $0xb0] sm:$0xff]
        %v4562 = vld [vmem:[%s402 + $0xb8] sm:$0xff]
        %v4563 = vld [vmem:[%s402 + $0xc0] sm:$0xff]
        %v4564 = vld [vmem:[%s402 + $0xc8] sm:$0xff]
        %v4565 = vld [vmem:[%s402 + $0xd0] sm:$0xff]
        %v4566 = vld [vmem:[%s402 + $0xd8] sm:$0xff]
        %v4567 = vld [vmem:[%s402 + $0xe0] sm:$0xff]
        %v4568 = vld [vmem:[%s402 + $0xe8] sm:$0xff]
        %v4569 = vld [vmem:[%s402 + $0xf0] sm:$0xff]
        %v4570 = vld [vmem:[%s402 + $0xf8] sm:$0xff]
        %v4571 = vmul.f32 %v4539, 0.4
        %v4572 = vmul.f32 %v4540, 0.4
        %v4573 = vmul.f32 %v4541, 0.4
        %v4574 = vmul.f32 %v4542, 0.4
        %v4575 = vmul.f32 %v4543, 0.4
        %v4576 = vmul.f32 %v4544, 0.4
        %v4577 = vmul.f32 %v4545, 0.4
        %v4578 = vmul.f32 %v4546, 0.4
        %v4579 = vmul.f32 %v4547, 0.4
        %v4580 = vmul.f32 %v4548, 0.4
        %v4581 = vmul.f32 %v4549, 0.4
        %v4582 = vmul.f32 %v4550, 0.4
        %v4583 = vmul.f32 %v4551, 0.4
        %v4584 = vmul.f32 %v4552, 0.4
        %v4585 = vmul.f32 %v4553, 0.4
        %v4586 = vmul.f32 %v4554, 0.4
        %v4587 = vmul.f32 %v4555, 0.4
        %v4588 = vmul.f32 %v4556, 0.4
        %v4589 = vmul.f32 %v4557, 0.4
        %v4590 = vmul.f32 %v4558, 0.4
        %v4591 = vmul.f32 %v4559, 0.4
        %v4592 = vmul.f32 %v4560, 0.4
        %v4593 = vmul.f32 %v4561, 0.4
        %v4594 = vmul.f32 %v4562, 0.4
        %v4595 = vmul.f32 %v4563, 0.4
        %v4596 = vmul.f32 %v4564, 0.4
        %v4597 = vmul.f32 %v4565, 0.4
        %v4598 = vmul.f32 %v4566, 0.4
        %v4599 = vmul.f32 %v4567, 0.4
        %v4600 = vmul.f32 %v4568, 0.4
        %v4601 = vmul.f32 %v4569, 0.4
        %v4602 = vmul.f32 %v4570, 0.4
        %v4603 = vadd.f32 %v4571, %v4460
        %v4604 = vadd.f32 %v4572, %v4462
        %v4605 = vadd.f32 %v4573, %v4465
        %v4606 = vadd.f32 %v4574, %v4467
        %v4607 = vadd.f32 %v4575, %v4470
        %v4608 = vadd.f32 %v4576, %v4472
        %v4609 = vadd.f32 %v4577, %v4475
        %v4610 = vadd.f32 %v4578, %v4477
        %v4611 = vadd.f32 %v4579, %v4480
        %v4612 = vadd.f32 %v4580, %v4482
        %v4613 = vadd.f32 %v4581, %v4485
        %v4614 = vadd.f32 %v4582, %v4487
        %v4615 = vadd.f32 %v4583, %v4490
        %v4616 = vadd.f32 %v4584, %v4492
        %v4617 = vadd.f32 %v4585, %v4495
        %v4618 = vadd.f32 %v4586, %v4497
        %v4619 = vadd.f32 %v4587, %v4500
        %v4620 = vadd.f32 %v4588, %v4502
        %v4621 = vadd.f32 %v4589, %v4505
        %v4622 = vadd.f32 %v4590, %v4507
        %v4623 = vadd.f32 %v4591, %v4510
        %v4624 = vadd.f32 %v4592, %v4512
        %v4625 = vadd.f32 %v4593, %v4515
        %v4626 = vadd.f32 %v4594, %v4517
        %v4627 = vadd.f32 %v4595, %v4520
        %v4628 = vadd.f32 %v4596, %v4522
        %v4629 = vadd.f32 %v4597, %v4525
        %v4630 = vadd.f32 %v4598, %v4527
        %v4631 = vadd.f32 %v4599, %v4530
        %v4632 = vadd.f32 %v4600, %v4532
        %v4633 = vadd.f32 %v4601, %v4535
        %v4634 = vadd.f32 %v4602, %v4537
        %4635 = vst.msk [vmem:[%s410] sm:$0xff] %vm496, %v4603
        %4636 = vst.msk [vmem:[%s410 + $0x8] sm:$0xff] %vm496, %v4604
        %4637 = vst.msk [vmem:[%s410 + $0x10] sm:$0xff] %vm496, %v4605
        %4638 = vst.msk [vmem:[%s410 + $0x18] sm:$0xff] %vm496, %v4606
        %4639 = vst.msk [vmem:[%s410 + $0x20] sm:$0xff] %vm496, %v4607
        %4640 = vst.msk [vmem:[%s410 + $0x28] sm:$0xff] %vm496, %v4608
        %4641 = vst.msk [vmem:[%s410 + $0x30] sm:$0xff] %vm496, %v4609
        %4642 = vst.msk [vmem:[%s410 + $0x38] sm:$0xff] %vm496, %v4610
        %4643 = vst.msk [vmem:[%s410 + $0x40] sm:$0xff] %vm496, %v4611
        %4644 = vst.msk [vmem:[%s410 + $0x48] sm:$0xff] %vm496, %v4612
        %4645 = vst.msk [vmem:[%s410 + $0x50] sm:$0xff] %vm496, %v4613
        %4646 = vst.msk [vmem:[%s410 + $0x58] sm:$0xff] %vm496, %v4614
        %4647 = vst.msk [vmem:[%s410 + $0x60] sm:$0xff] %vm496, %v4615
        %4648 = vst.msk [vmem:[%s410 + $0x68] sm:$0xff] %vm496, %v4616
        %4649 = vst.msk [vmem:[%s410 + $0x70] sm:$0xff] %vm496, %v4617
        %4650 = vst.msk [vmem:[%s410 + $0x78] sm:$0xff] %vm496, %v4618
        %4651 = vst.msk [vmem:[%s410 + $0x80] sm:$0xff] %vm496, %v4619
        %4652 = vst.msk [vmem:[%s410 + $0x88] sm:$0xff] %vm496, %v4620
        %4653 = vst.msk [vmem:[%s410 + $0x90] sm:$0xff] %vm496, %v4621
        %4654 = vst.msk [vmem:[%s410 + $0x98] sm:$0xff] %vm496, %v4622
        %4655 = vst.msk [vmem:[%s410 + $0xa0] sm:$0xff] %vm496, %v4623
        %4656 = vst.msk [vmem:[%s410 + $0xa8] sm:$0xff] %vm496, %v4624
        %4657 = vst.msk [vmem:[%s410 + $0xb0] sm:$0xff] %vm496, %v4625
        %4658 = vst.msk [vmem:[%s410 + $0xb8] sm:$0xff] %vm496, %v4626
        %4659 = vst.msk [vmem:[%s410 + $0xc0] sm:$0xff] %vm496, %v4627
        %4660 = vst.msk [vmem:[%s410 + $0xc8] sm:$0xff] %vm496, %v4628
        %4661 = vst.msk [vmem:[%s410 + $0xd0] sm:$0xff] %vm496, %v4629
        %4662 = vst.msk [vmem:[%s410 + $0xd8] sm:$0xff] %vm496, %v4630
        %4663 = vst.msk [vmem:[%s410 + $0xe0] sm:$0xff] %vm496, %v4631
        %4664 = vst.msk [vmem:[%s410 + $0xe8] sm:$0xff] %vm496, %v4632
        %4665 = vst.msk [vmem:[%s410 + $0xf0] sm:$0xff] %vm496, %v4633
        %4666 = vst.msk [vmem:[%s410 + $0xf8] sm:$0xff] %vm496, %v4634
        %4667 = vst.msk [vmem:[#allocation4] sm:$0xff] %vm496, 0.0
        %4668 = vst.msk [vmem:[#allocation4 + $0x8] sm:$0xff] %vm496, 0.0
        %vm4669 = vcmask 25600
        %4670 = vst.msk [vmem:[#allocation4 + $0x10] sm:$0x3] %vm4669, 0.0
        %s4671 = scalar_lea.vmem [#allocation4], 408
        %4672 = vst.msk [vmem:[%s4671] sm:$0xff] %vm496, 0.0
        %4673 = vst.msk [vmem:[%s4671 + $0x8] sm:$0xff] %vm496, 0.0
        %4674 = vst.msk [vmem:[%s4671 + $0x10] sm:$0x3] %vm4669, 0.0
        %vm4675 = vcmask 24576
        %4676 = vst.msk [vmem:[#allocation4] sm:$0x1] %vm4675, 0.0
        %4677 = vst.msk [vmem:[#allocation4 + $0x18] sm:$0x1] %vm4675, 0.0
        %4678 = vst.msk [vmem:[#allocation4 + $0x30] sm:$0x1] %vm4675, 0.0
        %4679 = vst.msk [vmem:[#allocation4 + $0x48] sm:$0x1] %vm4675, 0.0
        %4680 = vst.msk [vmem:[#allocation4 + $0x60] sm:$0x1] %vm4675, 0.0
        %4681 = vst.msk [vmem:[#allocation4 + $0x78] sm:$0x1] %vm4675, 0.0
        %4682 = vst.msk [vmem:[#allocation4 + $0x90] sm:$0x1] %vm4675, 0.0
        %4683 = vst.msk [vmem:[#allocation4 + $0xa8] sm:$0x1] %vm4675, 0.0
        %4684 = vst.msk [vmem:[#allocation4 + $0xc0] sm:$0x1] %vm4675, 0.0
        %4685 = vst.msk [vmem:[#allocation4 + $0xd8] sm:$0x1] %vm4675, 0.0
        %4686 = vst.msk [vmem:[#allocation4 + $0xf0] sm:$0x1] %vm4675, 0.0
        %4687 = vst.msk [vmem:[#allocation4 + $0x108] sm:$0x1] %vm4675, 0.0
        %4688 = vst.msk [vmem:[#allocation4 + $0x120] sm:$0x1] %vm4675, 0.0
        %4689 = vst.msk [vmem:[#allocation4 + $0x138] sm:$0x1] %vm4675, 0.0
        %4690 = vst.msk [vmem:[#allocation4 + $0x150] sm:$0x1] %vm4675, 0.0
        %4691 = vst.msk [vmem:[#allocation4 + $0x168] sm:$0x1] %vm4675, 0.0
        %4692 = vst.msk [vmem:[#allocation4 + $0x180] sm:$0x1] %vm4675, 0.0
        %4693 = vst.msk [vmem:[#allocation4 + $0x198] sm:$0x1] %vm4675, 0.0
        %4694 = vst.msk [vmem:[#allocation4 + $0x11] sm:$0x1] %vm4675, 0.0
        %4695 = vst.msk [vmem:[#allocation4 + $0x29] sm:$0x1] %vm4675, 0.0
        %4696 = vst.msk [vmem:[#allocation4 + $0x41] sm:$0x1] %vm4675, 0.0
        %4697 = vst.msk [vmem:[#allocation4 + $0x59] sm:$0x1] %vm4675, 0.0
        %4698 = vst.msk [vmem:[#allocation4 + $0x71] sm:$0x1] %vm4675, 0.0
        %4699 = vst.msk [vmem:[#allocation4 + $0x89] sm:$0x1] %vm4675, 0.0
        %4700 = vst.msk [vmem:[#allocation4 + $0xa1] sm:$0x1] %vm4675, 0.0
        %4701 = vst.msk [vmem:[#allocation4 + $0xb9] sm:$0x1] %vm4675, 0.0
        %4702 = vst.msk [vmem:[#allocation4 + $0xd1] sm:$0x1] %vm4675, 0.0
        %4703 = vst.msk [vmem:[#allocation4 + $0xe9] sm:$0x1] %vm4675, 0.0
        %4704 = vst.msk [vmem:[#allocation4 + $0x101] sm:$0x1] %vm4675, 0.0
        %4705 = vst.msk [vmem:[#allocation4 + $0x119] sm:$0x1] %vm4675, 0.0
        %4706 = vst.msk [vmem:[#allocation4 + $0x131] sm:$0x1] %vm4675, 0.0
        %4707 = vst.msk [vmem:[#allocation4 + $0x149] sm:$0x1] %vm4675, 0.0
        %4708 = vst.msk [vmem:[#allocation4 + $0x161] sm:$0x1] %vm4675, 0.0
        %4709 = vst.msk [vmem:[#allocation4 + $0x179] sm:$0x1] %vm4675, 0.0
        %4710 = vst.msk [vmem:[#allocation4 + $0x191] sm:$0x1] %vm4675, 0.0
        %4711 = vst.msk [vmem:[#allocation4 + $0x1a9] sm:$0x1] %vm4675, 0.0
        %s4712 = scalar_lea.vmem [#allocation4], 24
        %4713 = vst.msk [vmem:[%s4712 + $0x1] sm:$0xff] %vm496, %v4603
        %4714 = vst.msk [vmem:[%s4712 + $0x9] sm:$0xff] %vm496, %v4604
        %4715 = vst.msk [vmem:[%s4712 + $0x19] sm:$0xff] %vm496, %v4605
        %4716 = vst.msk [vmem:[%s4712 + $0x21] sm:$0xff] %vm496, %v4606
        %4717 = vst.msk [vmem:[%s4712 + $0x31] sm:$0xff] %vm496, %v4607
        %4718 = vst.msk [vmem:[%s4712 + $0x39] sm:$0xff] %vm496, %v4608
        %4719 = vst.msk [vmem:[%s4712 + $0x49] sm:$0xff] %vm496, %v4609
        %4720 = vst.msk [vmem:[%s4712 + $0x51] sm:$0xff] %vm496, %v4610
        %4721 = vst.msk [vmem:[%s4712 + $0x61] sm:$0xff] %vm496, %v4611
        %4722 = vst.msk [vmem:[%s4712 + $0x69] sm:$0xff] %vm496, %v4612
        %4723 = vst.msk [vmem:[%s4712 + $0x79] sm:$0xff] %vm496, %v4613
        %4724 = vst.msk [vmem:[%s4712 + $0x81] sm:$0xff] %vm496, %v4614
        %4725 = vst.msk [vmem:[%s4712 + $0x91] sm:$0xff] %vm496, %v4615
        %4726 = vst.msk [vmem:[%s4712 + $0x99] sm:$0xff] %vm496, %v4616
        %4727 = vst.msk [vmem:[%s4712 + $0xa9] sm:$0xff] %vm496, %v4617
        %4728 = vst.msk [vmem:[%s4712 + $0xb1] sm:$0xff] %vm496, %v4618
        %4729 = vst.msk [vmem:[%s4712 + $0xc1] sm:$0xff] %vm496, %v4619
        %4730 = vst.msk [vmem:[%s4712 + $0xc9] sm:$0xff] %vm496, %v4620
        %4731 = vst.msk [vmem:[%s4712 + $0xd9] sm:$0xff] %vm496, %v4621
        %4732 = vst.msk [vmem:[%s4712 + $0xe1] sm:$0xff] %vm496, %v4622
        %4733 = vst.msk [vmem:[%s4712 + $0xf1] sm:$0xff] %vm496, %v4623
        %4734 = vst.msk [vmem:[%s4712 + $0xf9] sm:$0xff] %vm496, %v4624
        %4735 = vst.msk [vmem:[%s4712 + $0x109] sm:$0xff] %vm496, %v4625
        %4736 = vst.msk [vmem:[%s4712 + $0x111] sm:$0xff] %vm496, %v4626
        %4737 = vst.msk [vmem:[%s4712 + $0x121] sm:$0xff] %vm496, %v4627
        %4738 = vst.msk [vmem:[%s4712 + $0x129] sm:$0xff] %vm496, %v4628
        %4739 = vst.msk [vmem:[%s4712 + $0x139] sm:$0xff] %vm496, %v4629
        %4740 = vst.msk [vmem:[%s4712 + $0x141] sm:$0xff] %vm496, %v4630
        %4741 = vst.msk [vmem:[%s4712 + $0x151] sm:$0xff] %vm496, %v4631
        %4742 = vst.msk [vmem:[%s4712 + $0x159] sm:$0xff] %vm496, %v4632
        %4743 = vst.msk [vmem:[%s4712 + $0x169] sm:$0xff] %vm496, %v4633
        %4744 = vst.msk [vmem:[%s4712 + $0x171] sm:$0xff] %vm496, %v4634
        %v4745 = vld [vmem:[#allocation4] sm:$0xff]
        %v4746 = vld [vmem:[#allocation4 + $0x8] sm:$0xff]
        %v4747 = vld [vmem:[#allocation4 + $0x18] sm:$0xff]
        %v4748 = vld [vmem:[#allocation4 + $0x20] sm:$0xff]
        %v4749 = vld [vmem:[#allocation4 + $0x30] sm:$0xff]
        %v4750 = vld [vmem:[#allocation4 + $0x38] sm:$0xff]
        %v4751 = vld [vmem:[#allocation4 + $0x48] sm:$0xff]
        %v4752 = vld [vmem:[#allocation4 + $0x50] sm:$0xff]
        %v4753 = vld [vmem:[#allocation4 + $0x60] sm:$0xff]
        %v4754 = vld [vmem:[#allocation4 + $0x68] sm:$0xff]
        %v4755 = vld [vmem:[#allocation4 + $0x78] sm:$0xff]
        %v4756 = vld [vmem:[#allocation4 + $0x80] sm:$0xff]
        %v4757 = vld [vmem:[#allocation4 + $0x90] sm:$0xff]
        %v4758 = vld [vmem:[#allocation4 + $0x98] sm:$0xff]
        %v4759 = vld [vmem:[#allocation4 + $0xa8] sm:$0xff]
        %v4760 = vld [vmem:[#allocation4 + $0xb0] sm:$0xff]
        %v4761 = vld [vmem:[#allocation4 + $0xc0] sm:$0xff]
        %v4762 = vld [vmem:[#allocation4 + $0xc8] sm:$0xff]
        %v4763 = vld [vmem:[#allocation4 + $0xd8] sm:$0xff]
        %v4764 = vld [vmem:[#allocation4 + $0xe0] sm:$0xff]
        %v4765 = vld [vmem:[#allocation4 + $0xf0] sm:$0xff]
        %v4766 = vld [vmem:[#allocation4 + $0xf8] sm:$0xff]
        %v4767 = vld [vmem:[#allocation4 + $0x108] sm:$0xff]
        %v4768 = vld [vmem:[#allocation4 + $0x110] sm:$0xff]
        %v4769 = vld [vmem:[#allocation4 + $0x120] sm:$0xff]
        %v4770 = vld [vmem:[#allocation4 + $0x128] sm:$0xff]
        %v4771 = vld [vmem:[#allocation4 + $0x138] sm:$0xff]
        %v4772 = vld [vmem:[#allocation4 + $0x140] sm:$0xff]
        %v4773 = vld [vmem:[#allocation4 + $0x150] sm:$0xff]
        %v4774 = vld [vmem:[#allocation4 + $0x158] sm:$0xff]
        %v4775 = vld [vmem:[#allocation4 + $0x168] sm:$0xff]
        %v4776 = vld [vmem:[#allocation4 + $0x170] sm:$0xff]
        %v4777 = vld [vmem:[#allocation4 + $0x1] sm:$0xff]
        %v4778 = vld [vmem:[#allocation4 + $0x9] sm:$0xff]
        %v4779 = vld [vmem:[#allocation4 + $0x19] sm:$0xff]
        %v4780 = vld [vmem:[#allocation4 + $0x21] sm:$0xff]
        %v4781 = vld [vmem:[#allocation4 + $0x31] sm:$0xff]
        %v4782 = vld [vmem:[#allocation4 + $0x39] sm:$0xff]
        %v4783 = vld [vmem:[#allocation4 + $0x49] sm:$0xff]
        %v4784 = vld [vmem:[#allocation4 + $0x51] sm:$0xff]
        %v4785 = vld [vmem:[#allocation4 + $0x61] sm:$0xff]
        %v4786 = vld [vmem:[#allocation4 + $0x69] sm:$0xff]
        %v4787 = vld [vmem:[#allocation4 + $0x79] sm:$0xff]
        %v4788 = vld [vmem:[#allocation4 + $0x81] sm:$0xff]
        %v4789 = vld [vmem:[#allocation4 + $0x91] sm:$0xff]
        %v4790 = vld [vmem:[#allocation4 + $0x99] sm:$0xff]
        %v4791 = vld [vmem:[#allocation4 + $0xa9] sm:$0xff]
        %v4792 = vld [vmem:[#allocation4 + $0xb1] sm:$0xff]
        %v4793 = vld [vmem:[#allocation4 + $0xc1] sm:$0xff]
        %v4794 = vld [vmem:[#allocation4 + $0xc9] sm:$0xff]
        %v4795 = vld [vmem:[#allocation4 + $0xd9] sm:$0xff]
        %v4796 = vld [vmem:[#allocation4 + $0xe1] sm:$0xff]
        %v4797 = vld [vmem:[#allocation4 + $0xf1] sm:$0xff]
        %v4798 = vld [vmem:[#allocation4 + $0xf9] sm:$0xff]
        %v4799 = vld [vmem:[#allocation4 + $0x109] sm:$0xff]
        %v4800 = vld [vmem:[#allocation4 + $0x111] sm:$0xff]
        %v4801 = vld [vmem:[#allocation4 + $0x121] sm:$0xff]
        %v4802 = vld [vmem:[#allocation4 + $0x129] sm:$0xff]
        %v4803 = vld [vmem:[#allocation4 + $0x139] sm:$0xff]
        %v4804 = vld [vmem:[#allocation4 + $0x141] sm:$0xff]
        %v4805 = vld [vmem:[#allocation4 + $0x151] sm:$0xff]
        %v4806 = vld [vmem:[#allocation4 + $0x159] sm:$0xff]
        %v4807 = vld [vmem:[#allocation4 + $0x169] sm:$0xff]
        %v4808 = vld [vmem:[#allocation4 + $0x171] sm:$0xff]
        %v4809 = vld [vmem:[#allocation4 + $0x2] sm:$0xff]
        %v4810 = vld [vmem:[#allocation4 + $0xa] sm:$0xff]
        %v4811 = vld [vmem:[#allocation4 + $0x1a] sm:$0xff]
        %v4812 = vld [vmem:[#allocation4 + $0x22] sm:$0xff]
        %v4813 = vld [vmem:[#allocation4 + $0x32] sm:$0xff]
        %v4814 = vld [vmem:[#allocation4 + $0x3a] sm:$0xff]
        %v4815 = vld [vmem:[#allocation4 + $0x4a] sm:$0xff]
        %v4816 = vld [vmem:[#allocation4 + $0x52] sm:$0xff]
        %v4817 = vld [vmem:[#allocation4 + $0x62] sm:$0xff]
        %v4818 = vld [vmem:[#allocation4 + $0x6a] sm:$0xff]
        %v4819 = vld [vmem:[#allocation4 + $0x7a] sm:$0xff]
        %v4820 = vld [vmem:[#allocation4 + $0x82] sm:$0xff]
        %v4821 = vld [vmem:[#allocation4 + $0x92] sm:$0xff]
        %v4822 = vld [vmem:[#allocation4 + $0x9a] sm:$0xff]
        %v4823 = vld [vmem:[#allocation4 + $0xaa] sm:$0xff]
        %v4824 = vld [vmem:[#allocation4 + $0xb2] sm:$0xff]
        %v4825 = vld [vmem:[#allocation4 + $0xc2] sm:$0xff]
        %v4826 = vld [vmem:[#allocation4 + $0xca] sm:$0xff]
        %v4827 = vld [vmem:[#allocation4 + $0xda] sm:$0xff]
        %v4828 = vld [vmem:[#allocation4 + $0xe2] sm:$0xff]
        %v4829 = vld [vmem:[#allocation4 + $0xf2] sm:$0xff]
        %v4830 = vld [vmem:[#allocation4 + $0xfa] sm:$0xff]
        %v4831 = vld [vmem:[#allocation4 + $0x10a] sm:$0xff]
        %v4832 = vld [vmem:[#allocation4 + $0x112] sm:$0xff]
        %v4833 = vld [vmem:[#allocation4 + $0x122] sm:$0xff]
        %v4834 = vld [vmem:[#allocation4 + $0x12a] sm:$0xff]
        %v4835 = vld [vmem:[#allocation4 + $0x13a] sm:$0xff]
        %v4836 = vld [vmem:[#allocation4 + $0x142] sm:$0xff]
        %v4837 = vld [vmem:[#allocation4 + $0x152] sm:$0xff]
        %v4838 = vld [vmem:[#allocation4 + $0x15a] sm:$0xff]
        %v4839 = vld [vmem:[#allocation4 + $0x16a] sm:$0xff]
        %v4840 = vld [vmem:[#allocation4 + $0x172] sm:$0xff]
        %v4841 = vld [vmem:[%s4712] sm:$0xff]
        %v4842 = vld [vmem:[%s4712 + $0x8] sm:$0xff]
        %v4843 = vld [vmem:[%s4712 + $0x18] sm:$0xff]
        %v4844 = vld [vmem:[%s4712 + $0x20] sm:$0xff]
        %v4845 = vld [vmem:[%s4712 + $0x30] sm:$0xff]
        %v4846 = vld [vmem:[%s4712 + $0x38] sm:$0xff]
        %v4847 = vld [vmem:[%s4712 + $0x48] sm:$0xff]
        %v4848 = vld [vmem:[%s4712 + $0x50] sm:$0xff]
        %v4849 = vld [vmem:[%s4712 + $0x60] sm:$0xff]
        %v4850 = vld [vmem:[%s4712 + $0x68] sm:$0xff]
        %v4851 = vld [vmem:[%s4712 + $0x78] sm:$0xff]
        %v4852 = vld [vmem:[%s4712 + $0x80] sm:$0xff]
        %v4853 = vld [vmem:[%s4712 + $0x90] sm:$0xff]
        %v4854 = vld [vmem:[%s4712 + $0x98] sm:$0xff]
        %v4855 = vld [vmem:[%s4712 + $0xa8] sm:$0xff]
        %v4856 = vld [vmem:[%s4712 + $0xb0] sm:$0xff]
        %v4857 = vld [vmem:[%s4712 + $0xc0] sm:$0xff]
        %v4858 = vld [vmem:[%s4712 + $0xc8] sm:$0xff]
        %v4859 = vld [vmem:[%s4712 + $0xd8] sm:$0xff]
        %v4860 = vld [vmem:[%s4712 + $0xe0] sm:$0xff]
        %v4861 = vld [vmem:[%s4712 + $0xf0] sm:$0xff]
        %v4862 = vld [vmem:[%s4712 + $0xf8] sm:$0xff]
        %v4863 = vld [vmem:[%s4712 + $0x108] sm:$0xff]
        %v4864 = vld [vmem:[%s4712 + $0x110] sm:$0xff]
        %v4865 = vld [vmem:[%s4712 + $0x120] sm:$0xff]
        %v4866 = vld [vmem:[%s4712 + $0x128] sm:$0xff]
        %v4867 = vld [vmem:[%s4712 + $0x138] sm:$0xff]
        %v4868 = vld [vmem:[%s4712 + $0x140] sm:$0xff]
        %v4869 = vld [vmem:[%s4712 + $0x150] sm:$0xff]
        %v4870 = vld [vmem:[%s4712 + $0x158] sm:$0xff]
        %v4871 = vld [vmem:[%s4712 + $0x168] sm:$0xff]
        %v4872 = vld [vmem:[%s4712 + $0x170] sm:$0xff]
        %v4873 = vld [vmem:[%s4712 + $0x1] sm:$0xff]
        %v4874 = vld [vmem:[%s4712 + $0x9] sm:$0xff]
        %v4875 = vld [vmem:[%s4712 + $0x19] sm:$0xff]
        %v4876 = vld [vmem:[%s4712 + $0x21] sm:$0xff]
        %v4877 = vld [vmem:[%s4712 + $0x31] sm:$0xff]
        %v4878 = vld [vmem:[%s4712 + $0x39] sm:$0xff]
        %v4879 = vld [vmem:[%s4712 + $0x49] sm:$0xff]
        %v4880 = vld [vmem:[%s4712 + $0x51] sm:$0xff]
        %v4881 = vld [vmem:[%s4712 + $0x61] sm:$0xff]
        %v4882 = vld [vmem:[%s4712 + $0x69] sm:$0xff]
        %v4883 = vld [vmem:[%s4712 + $0x79] sm:$0xff]
        %v4884 = vld [vmem:[%s4712 + $0x81] sm:$0xff]
        %v4885 = vld [vmem:[%s4712 + $0x91] sm:$0xff]
        %v4886 = vld [vmem:[%s4712 + $0x99] sm:$0xff]
        %v4887 = vld [vmem:[%s4712 + $0xa9] sm:$0xff]
        %v4888 = vld [vmem:[%s4712 + $0xb1] sm:$0xff]
        %v4889 = vld [vmem:[%s4712 + $0xc1] sm:$0xff]
        %v4890 = vld [vmem:[%s4712 + $0xc9] sm:$0xff]
        %v4891 = vld [vmem:[%s4712 + $0xd9] sm:$0xff]
        %v4892 = vld [vmem:[%s4712 + $0xe1] sm:$0xff]
        %v4893 = vld [vmem:[%s4712 + $0xf1] sm:$0xff]
        %v4894 = vld [vmem:[%s4712 + $0xf9] sm:$0xff]
        %v4895 = vld [vmem:[%s4712 + $0x109] sm:$0xff]
        %v4896 = vld [vmem:[%s4712 + $0x111] sm:$0xff]
        %v4897 = vld [vmem:[%s4712 + $0x121] sm:$0xff]
        %v4898 = vld [vmem:[%s4712 + $0x129] sm:$0xff]
        %v4899 = vld [vmem:[%s4712 + $0x139] sm:$0xff]
        %v4900 = vld [vmem:[%s4712 + $0x141] sm:$0xff]
        %v4901 = vld [vmem:[%s4712 + $0x151] sm:$0xff]
        %v4902 = vld [vmem:[%s4712 + $0x159] sm:$0xff]
        %v4903 = vld [vmem:[%s4712 + $0x169] sm:$0xff]
        %v4904 = vld [vmem:[%s4712 + $0x171] sm:$0xff]
        %v4905 = vld [vmem:[%s4712 + $0x2] sm:$0xff]
        %v4906 = vld [vmem:[%s4712 + $0xa] sm:$0xff]
        %v4907 = vld [vmem:[%s4712 + $0x1a] sm:$0xff]
        %v4908 = vld [vmem:[%s4712 + $0x22] sm:$0xff]
        %v4909 = vld [vmem:[%s4712 + $0x32] sm:$0xff]
        %v4910 = vld [vmem:[%s4712 + $0x3a] sm:$0xff]
        %v4911 = vld [vmem:[%s4712 + $0x4a] sm:$0xff]
        %v4912 = vld [vmem:[%s4712 + $0x52] sm:$0xff]
        %v4913 = vld [vmem:[%s4712 + $0x62] sm:$0xff]
        %v4914 = vld [vmem:[%s4712 + $0x6a] sm:$0xff]
        %v4915 = vld [vmem:[%s4712 + $0x7a] sm:$0xff]
        %v4916 = vld [vmem:[%s4712 + $0x82] sm:$0xff]
        %v4917 = vld [vmem:[%s4712 + $0x92] sm:$0xff]
        %v4918 = vld [vmem:[%s4712 + $0x9a] sm:$0xff]
        %v4919 = vld [vmem:[%s4712 + $0xaa] sm:$0xff]
        %v4920 = vld [vmem:[%s4712 + $0xb2] sm:$0xff]
        %v4921 = vld [vmem:[%s4712 + $0xc2] sm:$0xff]
        %v4922 = vld [vmem:[%s4712 + $0xca] sm:$0xff]
        %v4923 = vld [vmem:[%s4712 + $0xda] sm:$0xff]
        %v4924 = vld [vmem:[%s4712 + $0xe2] sm:$0xff]
        %v4925 = vld [vmem:[%s4712 + $0xf2] sm:$0xff]
        %v4926 = vld [vmem:[%s4712 + $0xfa] sm:$0xff]
        %v4927 = vld [vmem:[%s4712 + $0x10a] sm:$0xff]
        %v4928 = vld [vmem:[%s4712 + $0x112] sm:$0xff]
        %v4929 = vld [vmem:[%s4712 + $0x122] sm:$0xff]
        %v4930 = vld [vmem:[%s4712 + $0x12a] sm:$0xff]
        %v4931 = vld [vmem:[%s4712 + $0x13a] sm:$0xff]
        %v4932 = vld [vmem:[%s4712 + $0x142] sm:$0xff]
        %v4933 = vld [vmem:[%s4712 + $0x152] sm:$0xff]
        %v4934 = vld [vmem:[%s4712 + $0x15a] sm:$0xff]
        %v4935 = vld [vmem:[%s4712 + $0x16a] sm:$0xff]
        %v4936 = vld [vmem:[%s4712 + $0x172] sm:$0xff]
        %s4937 = scalar_lea.vmem [#allocation4], 48
        %v4938 = vld [vmem:[%s4937] sm:$0xff]
        %v4939 = vld [vmem:[%s4937 + $0x8] sm:$0xff]
        %v4940 = vld [vmem:[%s4937 + $0x18] sm:$0xff]
        %v4941 = vld [vmem:[%s4937 + $0x20] sm:$0xff]
        %v4942 = vld [vmem:[%s4937 + $0x30] sm:$0xff]
        %v4943 = vld [vmem:[%s4937 + $0x38] sm:$0xff]
        %v4944 = vld [vmem:[%s4937 + $0x48] sm:$0xff]
        %v4945 = vld [vmem:[%s4937 + $0x50] sm:$0xff]
        %v4946 = vld [vmem:[%s4937 + $0x60] sm:$0xff]
        %v4947 = vld [vmem:[%s4937 + $0x68] sm:$0xff]
        %v4948 = vld [vmem:[%s4937 + $0x78] sm:$0xff]
        %v4949 = vld [vmem:[%s4937 + $0x80] sm:$0xff]
        %v4950 = vld [vmem:[%s4937 + $0x90] sm:$0xff]
        %v4951 = vld [vmem:[%s4937 + $0x98] sm:$0xff]
        %v4952 = vld [vmem:[%s4937 + $0xa8] sm:$0xff]
        %v4953 = vld [vmem:[%s4937 + $0xb0] sm:$0xff]
        %v4954 = vld [vmem:[%s4937 + $0xc0] sm:$0xff]
        %v4955 = vld [vmem:[%s4937 + $0xc8] sm:$0xff]
        %v4956 = vld [vmem:[%s4937 + $0xd8] sm:$0xff]
        %v4957 = vld [vmem:[%s4937 + $0xe0] sm:$0xff]
        %v4958 = vld [vmem:[%s4937 + $0xf0] sm:$0xff]
        %v4959 = vld [vmem:[%s4937 + $0xf8] sm:$0xff]
        %v4960 = vld [vmem:[%s4937 + $0x108] sm:$0xff]
        %v4961 = vld [vmem:[%s4937 + $0x110] sm:$0xff]
        %v4962 = vld [vmem:[%s4937 + $0x120] sm:$0xff]
        %v4963 = vld [vmem:[%s4937 + $0x128] sm:$0xff]
        %v4964 = vld [vmem:[%s4937 + $0x138] sm:$0xff]
        %v4965 = vld [vmem:[%s4937 + $0x140] sm:$0xff]
        %v4966 = vld [vmem:[%s4937 + $0x150] sm:$0xff]
        %v4967 = vld [vmem:[%s4937 + $0x158] sm:$0xff]
        %v4968 = vld [vmem:[%s4937 + $0x168] sm:$0xff]
        %v4969 = vld [vmem:[%s4937 + $0x170] sm:$0xff]
        %v4970 = vld [vmem:[%s4937 + $0x1] sm:$0xff]
        %v4971 = vld [vmem:[%s4937 + $0x9] sm:$0xff]
        %v4972 = vld [vmem:[%s4937 + $0x19] sm:$0xff]
        %v4973 = vld [vmem:[%s4937 + $0x21] sm:$0xff]
        %v4974 = vld [vmem:[%s4937 + $0x31] sm:$0xff]
        %v4975 = vld [vmem:[%s4937 + $0x39] sm:$0xff]
        %v4976 = vld [vmem:[%s4937 + $0x49] sm:$0xff]
        %v4977 = vld [vmem:[%s4937 + $0x51] sm:$0xff]
        %v4978 = vld [vmem:[%s4937 + $0x61] sm:$0xff]
        %v4979 = vld [vmem:[%s4937 + $0x69] sm:$0xff]
        %v4980 = vld [vmem:[%s4937 + $0x79] sm:$0xff]
        %v4981 = vld [vmem:[%s4937 + $0x81] sm:$0xff]
        %v4982 = vld [vmem:[%s4937 + $0x91] sm:$0xff]
        %v4983 = vld [vmem:[%s4937 + $0x99] sm:$0xff]
        %v4984 = vld [vmem:[%s4937 + $0xa9] sm:$0xff]
        %v4985 = vld [vmem:[%s4937 + $0xb1] sm:$0xff]
        %v4986 = vld [vmem:[%s4937 + $0xc1] sm:$0xff]
        %v4987 = vld [vmem:[%s4937 + $0xc9] sm:$0xff]
        %v4988 = vld [vmem:[%s4937 + $0xd9] sm:$0xff]
        %v4989 = vld [vmem:[%s4937 + $0xe1] sm:$0xff]
        %v4990 = vld [vmem:[%s4937 + $0xf1] sm:$0xff]
        %v4991 = vld [vmem:[%s4937 + $0xf9] sm:$0xff]
        %v4992 = vld [vmem:[%s4937 + $0x109] sm:$0xff]
        %v4993 = vld [vmem:[%s4937 + $0x111] sm:$0xff]
        %v4994 = vld [vmem:[%s4937 + $0x121] sm:$0xff]
        %v4995 = vld [vmem:[%s4937 + $0x129] sm:$0xff]
        %v4996 = vld [vmem:[%s4937 + $0x139] sm:$0xff]
        %v4997 = vld [vmem:[%s4937 + $0x141] sm:$0xff]
        %v4998 = vld [vmem:[%s4937 + $0x151] sm:$0xff]
        %v4999 = vld [vmem:[%s4937 + $0x159] sm:$0xff]
        %v5000 = vld [vmem:[%s4937 + $0x169] sm:$0xff]
        %v5001 = vld [vmem:[%s4937 + $0x171] sm:$0xff]
        %v5002 = vld [vmem:[%s4937 + $0x2] sm:$0xff]
        %v5003 = vld [vmem:[%s4937 + $0xa] sm:$0xff]
        %v5004 = vld [vmem:[%s4937 + $0x1a] sm:$0xff]
        %v5005 = vld [vmem:[%s4937 + $0x22] sm:$0xff]
        %v5006 = vld [vmem:[%s4937 + $0x32] sm:$0xff]
        %v5007 = vld [vmem:[%s4937 + $0x3a] sm:$0xff]
        %v5008 = vld [vmem:[%s4937 + $0x4a] sm:$0xff]
        %v5009 = vld [vmem:[%s4937 + $0x52] sm:$0xff]
        %v5010 = vld [vmem:[%s4937 + $0x62] sm:$0xff]
        %v5011 = vld [vmem:[%s4937 + $0x6a] sm:$0xff]
        %v5012 = vld [vmem:[%s4937 + $0x7a] sm:$0xff]
        %v5013 = vld [vmem:[%s4937 + $0x82] sm:$0xff]
        %v5014 = vld [vmem:[%s4937 + $0x92] sm:$0xff]
        %v5015 = vld [vmem:[%s4937 + $0x9a] sm:$0xff]
        %v5016 = vld [vmem:[%s4937 + $0xaa] sm:$0xff]
        %v5017 = vld [vmem:[%s4937 + $0xb2] sm:$0xff]
        %v5018 = vld [vmem:[%s4937 + $0xc2] sm:$0xff]
        %v5019 = vld [vmem:[%s4937 + $0xca] sm:$0xff]
        %v5020 = vld [vmem:[%s4937 + $0xda] sm:$0xff]
        %v5021 = vld [vmem:[%s4937 + $0xe2] sm:$0xff]
        %v5022 = vld [vmem:[%s4937 + $0xf2] sm:$0xff]
        %v5023 = vld [vmem:[%s4937 + $0xfa] sm:$0xff]
        %v5024 = vld [vmem:[%s4937 + $0x10a] sm:$0xff]
        %v5025 = vld [vmem:[%s4937 + $0x112] sm:$0xff]
        %v5026 = vld [vmem:[%s4937 + $0x122] sm:$0xff]
        %v5027 = vld [vmem:[%s4937 + $0x12a] sm:$0xff]
        %v5028 = vld [vmem:[%s4937 + $0x13a] sm:$0xff]
        %v5029 = vld [vmem:[%s4937 + $0x142] sm:$0xff]
        %v5030 = vld [vmem:[%s4937 + $0x152] sm:$0xff]
        %v5031 = vld [vmem:[%s4937 + $0x15a] sm:$0xff]
        %v5032 = vld [vmem:[%s4937 + $0x16a] sm:$0xff]
        %v5033 = vld [vmem:[%s4937 + $0x172] sm:$0xff]
        %5066 = vrot.lane.b32.xlu0 %v4777, 4
        %v5067 = vpop.permute.xlu0 %5066
        %5068 = vrot.lane.b32.xlu0 %v4778, 4
        %v5069 = vpop.permute.xlu0 %5068
        %5070 = vrot.lane.b32.xlu0 %v4779, 4
        %v5071 = vpop.permute.xlu0 %5070
        %5072 = vrot.lane.b32.xlu0 %v4780, 4
        %v5073 = vpop.permute.xlu0 %5072
        %5074 = vrot.lane.b32.xlu0 %v4781, 4
        %v5075 = vpop.permute.xlu0 %5074
        %5076 = vrot.lane.b32.xlu0 %v4782, 4
        %v5077 = vpop.permute.xlu0 %5076
        %5078 = vrot.lane.b32.xlu0 %v4783, 4
        %v5079 = vpop.permute.xlu0 %5078
        %5080 = vrot.lane.b32.xlu0 %v4784, 4
        %v5081 = vpop.permute.xlu0 %5080
        %5082 = vrot.lane.b32.xlu0 %v4785, 4
        %v5083 = vpop.permute.xlu0 %5082
        %5084 = vrot.lane.b32.xlu0 %v4786, 4
        %v5085 = vpop.permute.xlu0 %5084
        %5086 = vrot.lane.b32.xlu0 %v4787, 4
        %v5087 = vpop.permute.xlu0 %5086
        %5088 = vrot.lane.b32.xlu0 %v4788, 4
        %v5089 = vpop.permute.xlu0 %5088
        %5090 = vrot.lane.b32.xlu0 %v4789, 4
        %v5091 = vpop.permute.xlu0 %5090
        %5092 = vrot.lane.b32.xlu0 %v4790, 4
        %v5093 = vpop.permute.xlu0 %5092
        %5094 = vrot.lane.b32.xlu0 %v4791, 4
        %v5095 = vpop.permute.xlu0 %5094
        %5096 = vrot.lane.b32.xlu0 %v4792, 4
        %v5097 = vpop.permute.xlu0 %5096
        %5098 = vrot.lane.b32.xlu0 %v4793, 4
        %v5099 = vpop.permute.xlu0 %5098
        %5100 = vrot.lane.b32.xlu0 %v4794, 4
        %v5101 = vpop.permute.xlu0 %5100
        %5102 = vrot.lane.b32.xlu0 %v4795, 4
        %v5103 = vpop.permute.xlu0 %5102
        %5104 = vrot.lane.b32.xlu0 %v4796, 4
        %v5105 = vpop.permute.xlu0 %5104
        %5106 = vrot.lane.b32.xlu0 %v4797, 4
        %v5107 = vpop.permute.xlu0 %5106
        %5108 = vrot.lane.b32.xlu0 %v4798, 4
        %v5109 = vpop.permute.xlu0 %5108
        %5110 = vrot.lane.b32.xlu0 %v4799, 4
        %v5111 = vpop.permute.xlu0 %5110
        %5112 = vrot.lane.b32.xlu0 %v4800, 4
        %v5113 = vpop.permute.xlu0 %5112
        %5114 = vrot.lane.b32.xlu0 %v4801, 4
        %v5115 = vpop.permute.xlu0 %5114
        %5116 = vrot.lane.b32.xlu0 %v4802, 4
        %v5117 = vpop.permute.xlu0 %5116
        %5118 = vrot.lane.b32.xlu0 %v4803, 4
        %v5119 = vpop.permute.xlu0 %5118
        %5120 = vrot.lane.b32.xlu0 %v4804, 4
        %v5121 = vpop.permute.xlu0 %5120
        %5122 = vrot.lane.b32.xlu0 %v4805, 4
        %v5123 = vpop.permute.xlu0 %5122
        %5124 = vrot.lane.b32.xlu0 %v4806, 4
        %v5125 = vpop.permute.xlu0 %5124
        %5126 = vrot.lane.b32.xlu0 %v4807, 4
        %v5127 = vpop.permute.xlu0 %5126
        %5128 = vrot.lane.b32.xlu0 %v4808, 4
        %v5129 = vpop.permute.xlu0 %5128
        %5194 = vrot.lane.b32.xlu0 %v4809, 8
        %v5195 = vpop.permute.xlu0 %5194
        %5196 = vrot.lane.b32.xlu0 %v4810, 8
        %v5197 = vpop.permute.xlu0 %5196
        %5198 = vrot.lane.b32.xlu0 %v4811, 8
        %v5199 = vpop.permute.xlu0 %5198
        %5200 = vrot.lane.b32.xlu0 %v4812, 8
        %v5201 = vpop.permute.xlu0 %5200
        %5202 = vrot.lane.b32.xlu0 %v4813, 8
        %v5203 = vpop.permute.xlu0 %5202
        %5204 = vrot.lane.b32.xlu0 %v4814, 8
        %v5205 = vpop.permute.xlu0 %5204
        %5206 = vrot.lane.b32.xlu0 %v4815, 8
        %v5207 = vpop.permute.xlu0 %5206
        %5208 = vrot.lane.b32.xlu0 %v4816, 8
        %v5209 = vpop.permute.xlu0 %5208
        %5210 = vrot.lane.b32.xlu0 %v4817, 8
        %v5211 = vpop.permute.xlu0 %5210
        %5212 = vrot.lane.b32.xlu0 %v4818, 8
        %v5213 = vpop.permute.xlu0 %5212
        %5214 = vrot.lane.b32.xlu0 %v4819, 8
        %v5215 = vpop.permute.xlu0 %5214
        %5216 = vrot.lane.b32.xlu0 %v4820, 8
        %v5217 = vpop.permute.xlu0 %5216
        %5218 = vrot.lane.b32.xlu0 %v4821, 8
        %v5219 = vpop.permute.xlu0 %5218
        %5220 = vrot.lane.b32.xlu0 %v4822, 8
        %v5221 = vpop.permute.xlu0 %5220
        %5222 = vrot.lane.b32.xlu0 %v4823, 8
        %v5223 = vpop.permute.xlu0 %5222
        %5224 = vrot.lane.b32.xlu0 %v4824, 8
        %v5225 = vpop.permute.xlu0 %5224
        %5226 = vrot.lane.b32.xlu0 %v4825, 8
        %v5227 = vpop.permute.xlu0 %5226
        %5228 = vrot.lane.b32.xlu0 %v4826, 8
        %v5229 = vpop.permute.xlu0 %5228
        %5230 = vrot.lane.b32.xlu0 %v4827, 8
        %v5231 = vpop.permute.xlu0 %5230
        %5232 = vrot.lane.b32.xlu0 %v4828, 8
        %v5233 = vpop.permute.xlu0 %5232
        %5234 = vrot.lane.b32.xlu0 %v4829, 8
        %v5235 = vpop.permute.xlu0 %5234
        %5236 = vrot.lane.b32.xlu0 %v4830, 8
        %v5237 = vpop.permute.xlu0 %5236
        %5238 = vrot.lane.b32.xlu0 %v4831, 8
        %v5239 = vpop.permute.xlu0 %5238
        %5240 = vrot.lane.b32.xlu0 %v4832, 8
        %v5241 = vpop.permute.xlu0 %5240
        %5242 = vrot.lane.b32.xlu0 %v4833, 8
        %v5243 = vpop.permute.xlu0 %5242
        %5244 = vrot.lane.b32.xlu0 %v4834, 8
        %v5245 = vpop.permute.xlu0 %5244
        %5246 = vrot.lane.b32.xlu0 %v4835, 8
        %v5247 = vpop.permute.xlu0 %5246
        %5248 = vrot.lane.b32.xlu0 %v4836, 8
        %v5249 = vpop.permute.xlu0 %5248
        %5250 = vrot.lane.b32.xlu0 %v4837, 8
        %v5251 = vpop.permute.xlu0 %5250
        %5252 = vrot.lane.b32.xlu0 %v4838, 8
        %v5253 = vpop.permute.xlu0 %5252
        %5254 = vrot.lane.b32.xlu0 %v4839, 8
        %v5255 = vpop.permute.xlu0 %5254
        %5256 = vrot.lane.b32.xlu0 %v4840, 8
        %v5257 = vpop.permute.xlu0 %5256
        %5322 = vrot.lane.b32.xlu0 %v4841, 12
        %v5323 = vpop.permute.xlu0 %5322
        %5324 = vrot.lane.b32.xlu0 %v4842, 12
        %v5325 = vpop.permute.xlu0 %5324
        %5326 = vrot.lane.b32.xlu0 %v4843, 12
        %v5327 = vpop.permute.xlu0 %5326
        %5328 = vrot.lane.b32.xlu0 %v4844, 12
        %v5329 = vpop.permute.xlu0 %5328
        %5330 = vrot.lane.b32.xlu0 %v4845, 12
        %v5331 = vpop.permute.xlu0 %5330
        %5332 = vrot.lane.b32.xlu0 %v4846, 12
        %v5333 = vpop.permute.xlu0 %5332
        %5334 = vrot.lane.b32.xlu0 %v4847, 12
        %v5335 = vpop.permute.xlu0 %5334
        %5336 = vrot.lane.b32.xlu0 %v4848, 12
        %v5337 = vpop.permute.xlu0 %5336
        %5338 = vrot.lane.b32.xlu0 %v4849, 12
        %v5339 = vpop.permute.xlu0 %5338
        %5340 = vrot.lane.b32.xlu0 %v4850, 12
        %v5341 = vpop.permute.xlu0 %5340
        %5342 = vrot.lane.b32.xlu0 %v4851, 12
        %v5343 = vpop.permute.xlu0 %5342
        %5344 = vrot.lane.b32.xlu0 %v4852, 12
        %v5345 = vpop.permute.xlu0 %5344
        %5346 = vrot.lane.b32.xlu0 %v4853, 12
        %v5347 = vpop.permute.xlu0 %5346
        %5348 = vrot.lane.b32.xlu0 %v4854, 12
        %v5349 = vpop.permute.xlu0 %5348
        %5350 = vrot.lane.b32.xlu0 %v4855, 12
        %v5351 = vpop.permute.xlu0 %5350
        %5352 = vrot.lane.b32.xlu0 %v4856, 12
        %v5353 = vpop.permute.xlu0 %5352
        %5354 = vrot.lane.b32.xlu0 %v4857, 12
        %v5355 = vpop.permute.xlu0 %5354
        %5356 = vrot.lane.b32.xlu0 %v4858, 12
        %v5357 = vpop.permute.xlu0 %5356
        %5358 = vrot.lane.b32.xlu0 %v4859, 12
        %v5359 = vpop.permute.xlu0 %5358
        %5360 = vrot.lane.b32.xlu0 %v4860, 12
        %v5361 = vpop.permute.xlu0 %5360
        %5362 = vrot.lane.b32.xlu0 %v4861, 12
        %v5363 = vpop.permute.xlu0 %5362
        %5364 = vrot.lane.b32.xlu0 %v4862, 12
        %v5365 = vpop.permute.xlu0 %5364
        %5366 = vrot.lane.b32.xlu0 %v4863, 12
        %v5367 = vpop.permute.xlu0 %5366
        %5368 = vrot.lane.b32.xlu0 %v4864, 12
        %v5369 = vpop.permute.xlu0 %5368
        %5370 = vrot.lane.b32.xlu0 %v4865, 12
        %v5371 = vpop.permute.xlu0 %5370
        %5372 = vrot.lane.b32.xlu0 %v4866, 12
        %v5373 = vpop.permute.xlu0 %5372
        %5374 = vrot.lane.b32.xlu0 %v4867, 12
        %v5375 = vpop.permute.xlu0 %5374
        %5376 = vrot.lane.b32.xlu0 %v4868, 12
        %v5377 = vpop.permute.xlu0 %5376
        %5378 = vrot.lane.b32.xlu0 %v4869, 12
        %v5379 = vpop.permute.xlu0 %5378
        %5380 = vrot.lane.b32.xlu0 %v4870, 12
        %v5381 = vpop.permute.xlu0 %5380
        %5382 = vrot.lane.b32.xlu0 %v4871, 12
        %v5383 = vpop.permute.xlu0 %5382
        %5384 = vrot.lane.b32.xlu0 %v4872, 12
        %v5385 = vpop.permute.xlu0 %5384
        %5450 = vrot.lane.b32.xlu0 %v4873, 16
        %v5451 = vpop.permute.xlu0 %5450
        %5452 = vrot.lane.b32.xlu0 %v4874, 16
        %v5453 = vpop.permute.xlu0 %5452
        %5454 = vrot.lane.b32.xlu0 %v4875, 16
        %v5455 = vpop.permute.xlu0 %5454
        %5456 = vrot.lane.b32.xlu0 %v4876, 16
        %v5457 = vpop.permute.xlu0 %5456
        %5458 = vrot.lane.b32.xlu0 %v4877, 16
        %v5459 = vpop.permute.xlu0 %5458
        %5460 = vrot.lane.b32.xlu0 %v4878, 16
        %v5461 = vpop.permute.xlu0 %5460
        %5462 = vrot.lane.b32.xlu0 %v4879, 16
        %v5463 = vpop.permute.xlu0 %5462
        %5464 = vrot.lane.b32.xlu0 %v4880, 16
        %v5465 = vpop.permute.xlu0 %5464
        %5466 = vrot.lane.b32.xlu0 %v4881, 16
        %v5467 = vpop.permute.xlu0 %5466
        %5468 = vrot.lane.b32.xlu0 %v4882, 16
        %v5469 = vpop.permute.xlu0 %5468
        %5470 = vrot.lane.b32.xlu0 %v4883, 16
        %v5471 = vpop.permute.xlu0 %5470
        %5472 = vrot.lane.b32.xlu0 %v4884, 16
        %v5473 = vpop.permute.xlu0 %5472
        %5474 = vrot.lane.b32.xlu0 %v4885, 16
        %v5475 = vpop.permute.xlu0 %5474
        %5476 = vrot.lane.b32.xlu0 %v4886, 16
        %v5477 = vpop.permute.xlu0 %5476
        %5478 = vrot.lane.b32.xlu0 %v4887, 16
        %v5479 = vpop.permute.xlu0 %5478
        %5480 = vrot.lane.b32.xlu0 %v4888, 16
        %v5481 = vpop.permute.xlu0 %5480
        %5482 = vrot.lane.b32.xlu0 %v4889, 16
        %v5483 = vpop.permute.xlu0 %5482
        %5484 = vrot.lane.b32.xlu0 %v4890, 16
        %v5485 = vpop.permute.xlu0 %5484
        %5486 = vrot.lane.b32.xlu0 %v4891, 16
        %v5487 = vpop.permute.xlu0 %5486
        %5488 = vrot.lane.b32.xlu0 %v4892, 16
        %v5489 = vpop.permute.xlu0 %5488
        %5490 = vrot.lane.b32.xlu0 %v4893, 16
        %v5491 = vpop.permute.xlu0 %5490
        %5492 = vrot.lane.b32.xlu0 %v4894, 16
        %v5493 = vpop.permute.xlu0 %5492
        %5494 = vrot.lane.b32.xlu0 %v4895, 16
        %v5495 = vpop.permute.xlu0 %5494
        %5496 = vrot.lane.b32.xlu0 %v4896, 16
        %v5497 = vpop.permute.xlu0 %5496
        %5498 = vrot.lane.b32.xlu0 %v4897, 16
        %v5499 = vpop.permute.xlu0 %5498
        %5500 = vrot.lane.b32.xlu0 %v4898, 16
        %v5501 = vpop.permute.xlu0 %5500
        %5502 = vrot.lane.b32.xlu0 %v4899, 16
        %v5503 = vpop.permute.xlu0 %5502
        %5504 = vrot.lane.b32.xlu0 %v4900, 16
        %v5505 = vpop.permute.xlu0 %5504
        %5506 = vrot.lane.b32.xlu0 %v4901, 16
        %v5507 = vpop.permute.xlu0 %5506
        %5508 = vrot.lane.b32.xlu0 %v4902, 16
        %v5509 = vpop.permute.xlu0 %5508
        %5510 = vrot.lane.b32.xlu0 %v4903, 16
        %v5511 = vpop.permute.xlu0 %5510
        %5512 = vrot.lane.b32.xlu0 %v4904, 16
        %v5513 = vpop.permute.xlu0 %5512
        %5578 = vrot.lane.b32.xlu0 %v4905, 20
        %v5579 = vpop.permute.xlu0 %5578
        %5580 = vrot.lane.b32.xlu0 %v4906, 20
        %v5581 = vpop.permute.xlu0 %5580
        %5582 = vrot.lane.b32.xlu0 %v4907, 20
        %v5583 = vpop.permute.xlu0 %5582
        %5584 = vrot.lane.b32.xlu0 %v4908, 20
        %v5585 = vpop.permute.xlu0 %5584
        %5586 = vrot.lane.b32.xlu0 %v4909, 20
        %v5587 = vpop.permute.xlu0 %5586
        %5588 = vrot.lane.b32.xlu0 %v4910, 20
        %v5589 = vpop.permute.xlu0 %5588
        %5590 = vrot.lane.b32.xlu0 %v4911, 20
        %v5591 = vpop.permute.xlu0 %5590
        %5592 = vrot.lane.b32.xlu0 %v4912, 20
        %v5593 = vpop.permute.xlu0 %5592
        %5594 = vrot.lane.b32.xlu0 %v4913, 20
        %v5595 = vpop.permute.xlu0 %5594
        %5596 = vrot.lane.b32.xlu0 %v4914, 20
        %v5597 = vpop.permute.xlu0 %5596
        %5598 = vrot.lane.b32.xlu0 %v4915, 20
        %v5599 = vpop.permute.xlu0 %5598
        %5600 = vrot.lane.b32.xlu0 %v4916, 20
        %v5601 = vpop.permute.xlu0 %5600
        %5602 = vrot.lane.b32.xlu0 %v4917, 20
        %v5603 = vpop.permute.xlu0 %5602
        %5604 = vrot.lane.b32.xlu0 %v4918, 20
        %v5605 = vpop.permute.xlu0 %5604
        %5606 = vrot.lane.b32.xlu0 %v4919, 20
        %v5607 = vpop.permute.xlu0 %5606
        %5608 = vrot.lane.b32.xlu0 %v4920, 20
        %v5609 = vpop.permute.xlu0 %5608
        %5610 = vrot.lane.b32.xlu0 %v4921, 20
        %v5611 = vpop.permute.xlu0 %5610
        %5612 = vrot.lane.b32.xlu0 %v4922, 20
        %v5613 = vpop.permute.xlu0 %5612
        %5614 = vrot.lane.b32.xlu0 %v4923, 20
        %v5615 = vpop.permute.xlu0 %5614
        %5616 = vrot.lane.b32.xlu0 %v4924, 20
        %v5617 = vpop.permute.xlu0 %5616
        %5618 = vrot.lane.b32.xlu0 %v4925, 20
        %v5619 = vpop.permute.xlu0 %5618
        %5620 = vrot.lane.b32.xlu0 %v4926, 20
        %v5621 = vpop.permute.xlu0 %5620
        %5622 = vrot.lane.b32.xlu0 %v4927, 20
        %v5623 = vpop.permute.xlu0 %5622
        %5624 = vrot.lane.b32.xlu0 %v4928, 20
        %v5625 = vpop.permute.xlu0 %5624
        %5626 = vrot.lane.b32.xlu0 %v4929, 20
        %v5627 = vpop.permute.xlu0 %5626
        %5628 = vrot.lane.b32.xlu0 %v4930, 20
        %v5629 = vpop.permute.xlu0 %5628
        %5630 = vrot.lane.b32.xlu0 %v4931, 20
        %v5631 = vpop.permute.xlu0 %5630
        %5632 = vrot.lane.b32.xlu0 %v4932, 20
        %v5633 = vpop.permute.xlu0 %5632
        %5634 = vrot.lane.b32.xlu0 %v4933, 20
        %v5635 = vpop.permute.xlu0 %5634
        %5636 = vrot.lane.b32.xlu0 %v4934, 20
        %v5637 = vpop.permute.xlu0 %5636
        %5638 = vrot.lane.b32.xlu0 %v4935, 20
        %v5639 = vpop.permute.xlu0 %5638
        %5640 = vrot.lane.b32.xlu0 %v4936, 20
        %v5641 = vpop.permute.xlu0 %5640
        %5706 = vrot.lane.b32.xlu0 %v4938, 24
        %v5707 = vpop.permute.xlu0 %5706
        %5708 = vrot.lane.b32.xlu0 %v4939, 24
        %v5709 = vpop.permute.xlu0 %5708
        %5710 = vrot.lane.b32.xlu0 %v4940, 24
        %v5711 = vpop.permute.xlu0 %5710
        %5712 = vrot.lane.b32.xlu0 %v4941, 24
        %v5713 = vpop.permute.xlu0 %5712
        %5714 = vrot.lane.b32.xlu0 %v4942, 24
        %v5715 = vpop.permute.xlu0 %5714
        %5716 = vrot.lane.b32.xlu0 %v4943, 24
        %v5717 = vpop.permute.xlu0 %5716
        %5718 = vrot.lane.b32.xlu0 %v4944, 24
        %v5719 = vpop.permute.xlu0 %5718
        %5720 = vrot.lane.b32.xlu0 %v4945, 24
        %v5721 = vpop.permute.xlu0 %5720
        %5722 = vrot.lane.b32.xlu0 %v4946, 24
        %v5723 = vpop.permute.xlu0 %5722
        %5724 = vrot.lane.b32.xlu0 %v4947, 24
        %v5725 = vpop.permute.xlu0 %5724
        %5726 = vrot.lane.b32.xlu0 %v4948, 24
        %v5727 = vpop.permute.xlu0 %5726
        %5728 = vrot.lane.b32.xlu0 %v4949, 24
        %v5729 = vpop.permute.xlu0 %5728
        %5730 = vrot.lane.b32.xlu0 %v4950, 24
        %v5731 = vpop.permute.xlu0 %5730
        %5732 = vrot.lane.b32.xlu0 %v4951, 24
        %v5733 = vpop.permute.xlu0 %5732
        %5734 = vrot.lane.b32.xlu0 %v4952, 24
        %v5735 = vpop.permute.xlu0 %5734
        %5736 = vrot.lane.b32.xlu0 %v4953, 24
        %v5737 = vpop.permute.xlu0 %5736
        %5738 = vrot.lane.b32.xlu0 %v4954, 24
        %v5739 = vpop.permute.xlu0 %5738
        %5740 = vrot.lane.b32.xlu0 %v4955, 24
        %v5741 = vpop.permute.xlu0 %5740
        %5742 = vrot.lane.b32.xlu0 %v4956, 24
        %v5743 = vpop.permute.xlu0 %5742
        %5744 = vrot.lane.b32.xlu0 %v4957, 24
        %v5745 = vpop.permute.xlu0 %5744
        %5746 = vrot.lane.b32.xlu0 %v4958, 24
        %v5747 = vpop.permute.xlu0 %5746
        %5748 = vrot.lane.b32.xlu0 %v4959, 24
        %v5749 = vpop.permute.xlu0 %5748
        %5750 = vrot.lane.b32.xlu0 %v4960, 24
        %v5751 = vpop.permute.xlu0 %5750
        %5752 = vrot.lane.b32.xlu0 %v4961, 24
        %v5753 = vpop.permute.xlu0 %5752
        %5754 = vrot.lane.b32.xlu0 %v4962, 24
        %v5755 = vpop.permute.xlu0 %5754
        %5756 = vrot.lane.b32.xlu0 %v4963, 24
        %v5757 = vpop.permute.xlu0 %5756
        %5758 = vrot.lane.b32.xlu0 %v4964, 24
        %v5759 = vpop.permute.xlu0 %5758
        %5760 = vrot.lane.b32.xlu0 %v4965, 24
        %v5761 = vpop.permute.xlu0 %5760
        %5762 = vrot.lane.b32.xlu0 %v4966, 24
        %v5763 = vpop.permute.xlu0 %5762
        %5764 = vrot.lane.b32.xlu0 %v4967, 24
        %v5765 = vpop.permute.xlu0 %5764
        %5766 = vrot.lane.b32.xlu0 %v4968, 24
        %v5767 = vpop.permute.xlu0 %5766
        %5768 = vrot.lane.b32.xlu0 %v4969, 24
        %v5769 = vpop.permute.xlu0 %5768
        %5834 = vrot.lane.b32.xlu0 %v4970, 28
        %v5835 = vpop.permute.xlu0 %5834
        %5836 = vrot.lane.b32.xlu0 %v4971, 28
        %v5837 = vpop.permute.xlu0 %5836
        %5838 = vrot.lane.b32.xlu0 %v4972, 28
        %v5839 = vpop.permute.xlu0 %5838
        %5840 = vrot.lane.b32.xlu0 %v4973, 28
        %v5841 = vpop.permute.xlu0 %5840
        %5842 = vrot.lane.b32.xlu0 %v4974, 28
        %v5843 = vpop.permute.xlu0 %5842
        %5844 = vrot.lane.b32.xlu0 %v4975, 28
        %v5845 = vpop.permute.xlu0 %5844
        %5846 = vrot.lane.b32.xlu0 %v4976, 28
        %v5847 = vpop.permute.xlu0 %5846
        %5848 = vrot.lane.b32.xlu0 %v4977, 28
        %v5849 = vpop.permute.xlu0 %5848
        %5850 = vrot.lane.b32.xlu0 %v4978, 28
        %v5851 = vpop.permute.xlu0 %5850
        %5852 = vrot.lane.b32.xlu0 %v4979, 28
        %v5853 = vpop.permute.xlu0 %5852
        %5854 = vrot.lane.b32.xlu0 %v4980, 28
        %v5855 = vpop.permute.xlu0 %5854
        %5856 = vrot.lane.b32.xlu0 %v4981, 28
        %v5857 = vpop.permute.xlu0 %5856
        %5858 = vrot.lane.b32.xlu0 %v4982, 28
        %v5859 = vpop.permute.xlu0 %5858
        %5860 = vrot.lane.b32.xlu0 %v4983, 28
        %v5861 = vpop.permute.xlu0 %5860
        %5862 = vrot.lane.b32.xlu0 %v4984, 28
        %v5863 = vpop.permute.xlu0 %5862
        %5864 = vrot.lane.b32.xlu0 %v4985, 28
        %v5865 = vpop.permute.xlu0 %5864
        %5866 = vrot.lane.b32.xlu0 %v4986, 28
        %v5867 = vpop.permute.xlu0 %5866
        %5868 = vrot.lane.b32.xlu0 %v4987, 28
        %v5869 = vpop.permute.xlu0 %5868
        %5870 = vrot.lane.b32.xlu0 %v4988, 28
        %v5871 = vpop.permute.xlu0 %5870
        %5872 = vrot.lane.b32.xlu0 %v4989, 28
        %v5873 = vpop.permute.xlu0 %5872
        %5874 = vrot.lane.b32.xlu0 %v4990, 28
        %v5875 = vpop.permute.xlu0 %5874
        %5876 = vrot.lane.b32.xlu0 %v4991, 28
        %v5877 = vpop.permute.xlu0 %5876
        %5878 = vrot.lane.b32.xlu0 %v4992, 28
        %v5879 = vpop.permute.xlu0 %5878
        %5880 = vrot.lane.b32.xlu0 %v4993, 28
        %v5881 = vpop.permute.xlu0 %5880
        %5882 = vrot.lane.b32.xlu0 %v4994, 28
        %v5883 = vpop.permute.xlu0 %5882
        %5884 = vrot.lane.b32.xlu0 %v4995, 28
        %v5885 = vpop.permute.xlu0 %5884
        %5886 = vrot.lane.b32.xlu0 %v4996, 28
        %v5887 = vpop.permute.xlu0 %5886
        %5888 = vrot.lane.b32.xlu0 %v4997, 28
        %v5889 = vpop.permute.xlu0 %5888
        %5890 = vrot.lane.b32.xlu0 %v4998, 28
        %v5891 = vpop.permute.xlu0 %5890
        %5892 = vrot.lane.b32.xlu0 %v4999, 28
        %v5893 = vpop.permute.xlu0 %5892
        %5894 = vrot.lane.b32.xlu0 %v5000, 28
        %v5895 = vpop.permute.xlu0 %5894
        %5896 = vrot.lane.b32.xlu0 %v5001, 28
        %v5897 = vpop.permute.xlu0 %5896
        %5962 = vrot.lane.b32.xlu0 %v5002, 32
        %v5963 = vpop.permute.xlu0 %5962
        %5964 = vrot.lane.b32.xlu0 %v5003, 32
        %v5965 = vpop.permute.xlu0 %5964
        %5966 = vrot.lane.b32.xlu0 %v5004, 32
        %v5967 = vpop.permute.xlu0 %5966
        %5968 = vrot.lane.b32.xlu0 %v5005, 32
        %v5969 = vpop.permute.xlu0 %5968
        %5970 = vrot.lane.b32.xlu0 %v5006, 32
        %v5971 = vpop.permute.xlu0 %5970
        %5972 = vrot.lane.b32.xlu0 %v5007, 32
        %v5973 = vpop.permute.xlu0 %5972
        %5974 = vrot.lane.b32.xlu0 %v5008, 32
        %v5975 = vpop.permute.xlu0 %5974
        %5976 = vrot.lane.b32.xlu0 %v5009, 32
        %v5977 = vpop.permute.xlu0 %5976
        %5978 = vrot.lane.b32.xlu0 %v5010, 32
        %v5979 = vpop.permute.xlu0 %5978
        %5980 = vrot.lane.b32.xlu0 %v5011, 32
        %v5981 = vpop.permute.xlu0 %5980
        %5982 = vrot.lane.b32.xlu0 %v5012, 32
        %v5983 = vpop.permute.xlu0 %5982
        %5984 = vrot.lane.b32.xlu0 %v5013, 32
        %v5985 = vpop.permute.xlu0 %5984
        %5986 = vrot.lane.b32.xlu0 %v5014, 32
        %v5987 = vpop.permute.xlu0 %5986
        %5988 = vrot.lane.b32.xlu0 %v5015, 32
        %v5989 = vpop.permute.xlu0 %5988
        %5990 = vrot.lane.b32.xlu0 %v5016, 32
        %v5991 = vpop.permute.xlu0 %5990
        %5992 = vrot.lane.b32.xlu0 %v5017, 32
        %v5993 = vpop.permute.xlu0 %5992
        %5994 = vrot.lane.b32.xlu0 %v5018, 32
        %v5995 = vpop.permute.xlu0 %5994
        %5996 = vrot.lane.b32.xlu0 %v5019, 32
        %v5997 = vpop.permute.xlu0 %5996
        %5998 = vrot.lane.b32.xlu0 %v5020, 32
        %v5999 = vpop.permute.xlu0 %5998
        %6000 = vrot.lane.b32.xlu0 %v5021, 32
        %v6001 = vpop.permute.xlu0 %6000
        %6002 = vrot.lane.b32.xlu0 %v5022, 32
        %v6003 = vpop.permute.xlu0 %6002
        %6004 = vrot.lane.b32.xlu0 %v5023, 32
        %v6005 = vpop.permute.xlu0 %6004
        %6006 = vrot.lane.b32.xlu0 %v5024, 32
        %v6007 = vpop.permute.xlu0 %6006
        %6008 = vrot.lane.b32.xlu0 %v5025, 32
        %v6009 = vpop.permute.xlu0 %6008
        %6010 = vrot.lane.b32.xlu0 %v5026, 32
        %v6011 = vpop.permute.xlu0 %6010
        %6012 = vrot.lane.b32.xlu0 %v5027, 32
        %v6013 = vpop.permute.xlu0 %6012
        %6014 = vrot.lane.b32.xlu0 %v5028, 32
        %v6015 = vpop.permute.xlu0 %6014
        %6016 = vrot.lane.b32.xlu0 %v5029, 32
        %v6017 = vpop.permute.xlu0 %6016
        %6018 = vrot.lane.b32.xlu0 %v5030, 32
        %v6019 = vpop.permute.xlu0 %6018
        %6020 = vrot.lane.b32.xlu0 %v5031, 32
        %v6021 = vpop.permute.xlu0 %6020
        %6022 = vrot.lane.b32.xlu0 %v5032, 32
        %v6023 = vpop.permute.xlu0 %6022
        %6024 = vrot.lane.b32.xlu0 %v5033, 32
        %v6025 = vpop.permute.xlu0 %6024
        %v6058 = vsel %vm496, %v4745, %v5067
        %v6059 = vsel %vm496, %v4746, %v5069
        %v6060 = vsel %vm496, %v4747, %v5071
        %v6061 = vsel %vm496, %v4748, %v5073
        %v6062 = vsel %vm496, %v4749, %v5075
        %v6063 = vsel %vm496, %v4750, %v5077
        %v6064 = vsel %vm496, %v4751, %v5079
        %v6065 = vsel %vm496, %v4752, %v5081
        %v6066 = vsel %vm496, %v4753, %v5083
        %v6067 = vsel %vm496, %v4754, %v5085
        %v6068 = vsel %vm496, %v4755, %v5087
        %v6069 = vsel %vm496, %v4756, %v5089
        %v6070 = vsel %vm496, %v4757, %v5091
        %v6071 = vsel %vm496, %v4758, %v5093
        %v6072 = vsel %vm496, %v4759, %v5095
        %v6073 = vsel %vm496, %v4760, %v5097
        %v6074 = vsel %vm496, %v4761, %v5099
        %v6075 = vsel %vm496, %v4762, %v5101
        %v6076 = vsel %vm496, %v4763, %v5103
        %v6077 = vsel %vm496, %v4764, %v5105
        %v6078 = vsel %vm496, %v4765, %v5107
        %v6079 = vsel %vm496, %v4766, %v5109
        %v6080 = vsel %vm496, %v4767, %v5111
        %v6081 = vsel %vm496, %v4768, %v5113
        %v6082 = vsel %vm496, %v4769, %v5115
        %v6083 = vsel %vm496, %v4770, %v5117
        %v6084 = vsel %vm496, %v4771, %v5119
        %v6085 = vsel %vm496, %v4772, %v5121
        %v6086 = vsel %vm496, %v4773, %v5123
        %v6087 = vsel %vm496, %v4774, %v5125
        %v6088 = vsel %vm496, %v4775, %v5127
        %v6089 = vsel %vm496, %v4776, %v5129
        %v6090 = vsel %vm1973, %v6058, %v5195
        %v6091 = vsel %vm1973, %v6059, %v5197
        %v6092 = vsel %vm1973, %v6060, %v5199
        %v6093 = vsel %vm1973, %v6061, %v5201
        %v6094 = vsel %vm1973, %v6062, %v5203
        %v6095 = vsel %vm1973, %v6063, %v5205
        %v6096 = vsel %vm1973, %v6064, %v5207
        %v6097 = vsel %vm1973, %v6065, %v5209
        %v6098 = vsel %vm1973, %v6066, %v5211
        %v6099 = vsel %vm1973, %v6067, %v5213
        %v6100 = vsel %vm1973, %v6068, %v5215
        %v6101 = vsel %vm1973, %v6069, %v5217
        %v6102 = vsel %vm1973, %v6070, %v5219
        %v6103 = vsel %vm1973, %v6071, %v5221
        %v6104 = vsel %vm1973, %v6072, %v5223
        %v6105 = vsel %vm1973, %v6073, %v5225
        %v6106 = vsel %vm1973, %v6074, %v5227
        %v6107 = vsel %vm1973, %v6075, %v5229
        %v6108 = vsel %vm1973, %v6076, %v5231
        %v6109 = vsel %vm1973, %v6077, %v5233
        %v6110 = vsel %vm1973, %v6078, %v5235
        %v6111 = vsel %vm1973, %v6079, %v5237
        %v6112 = vsel %vm1973, %v6080, %v5239
        %v6113 = vsel %vm1973, %v6081, %v5241
        %v6114 = vsel %vm1973, %v6082, %v5243
        %v6115 = vsel %vm1973, %v6083, %v5245
        %v6116 = vsel %vm1973, %v6084, %v5247
        %v6117 = vsel %vm1973, %v6085, %v5249
        %v6118 = vsel %vm1973, %v6086, %v5251
        %v6119 = vsel %vm1973, %v6087, %v5253
        %v6120 = vsel %vm1973, %v6088, %v5255
        %v6121 = vsel %vm1973, %v6089, %v5257
        %vm6122 = vcmask 97280
        %v6123 = vsel %vm6122, %v6090, %v5323
        %v6124 = vsel %vm6122, %v6091, %v5325
        %v6125 = vsel %vm6122, %v6092, %v5327
        %v6126 = vsel %vm6122, %v6093, %v5329
        %v6127 = vsel %vm6122, %v6094, %v5331
        %v6128 = vsel %vm6122, %v6095, %v5333
        %v6129 = vsel %vm6122, %v6096, %v5335
        %v6130 = vsel %vm6122, %v6097, %v5337
        %v6131 = vsel %vm6122, %v6098, %v5339
        %v6132 = vsel %vm6122, %v6099, %v5341
        %v6133 = vsel %vm6122, %v6100, %v5343
        %v6134 = vsel %vm6122, %v6101, %v5345
        %v6135 = vsel %vm6122, %v6102, %v5347
        %v6136 = vsel %vm6122, %v6103, %v5349
        %v6137 = vsel %vm6122, %v6104, %v5351
        %v6138 = vsel %vm6122, %v6105, %v5353
        %v6139 = vsel %vm6122, %v6106, %v5355
        %v6140 = vsel %vm6122, %v6107, %v5357
        %v6141 = vsel %vm6122, %v6108, %v5359
        %v6142 = vsel %vm6122, %v6109, %v5361
        %v6143 = vsel %vm6122, %v6110, %v5363
        %v6144 = vsel %vm6122, %v6111, %v5365
        %v6145 = vsel %vm6122, %v6112, %v5367
        %v6146 = vsel %vm6122, %v6113, %v5369
        %v6147 = vsel %vm6122, %v6114, %v5371
        %v6148 = vsel %vm6122, %v6115, %v5373
        %v6149 = vsel %vm6122, %v6116, %v5375
        %v6150 = vsel %vm6122, %v6117, %v5377
        %v6151 = vsel %vm6122, %v6118, %v5379
        %v6152 = vsel %vm6122, %v6119, %v5381
        %v6153 = vsel %vm6122, %v6120, %v5383
        %v6154 = vsel %vm6122, %v6121, %v5385
        %v6155 = vsel %vm2105, %v6123, %v5451
        %v6156 = vsel %vm2105, %v6124, %v5453
        %v6157 = vsel %vm2105, %v6125, %v5455
        %v6158 = vsel %vm2105, %v6126, %v5457
        %v6159 = vsel %vm2105, %v6127, %v5459
        %v6160 = vsel %vm2105, %v6128, %v5461
        %v6161 = vsel %vm2105, %v6129, %v5463
        %v6162 = vsel %vm2105, %v6130, %v5465
        %v6163 = vsel %vm2105, %v6131, %v5467
        %v6164 = vsel %vm2105, %v6132, %v5469
        %v6165 = vsel %vm2105, %v6133, %v5471
        %v6166 = vsel %vm2105, %v6134, %v5473
        %v6167 = vsel %vm2105, %v6135, %v5475
        %v6168 = vsel %vm2105, %v6136, %v5477
        %v6169 = vsel %vm2105, %v6137, %v5479
        %v6170 = vsel %vm2105, %v6138, %v5481
        %v6171 = vsel %vm2105, %v6139, %v5483
        %v6172 = vsel %vm2105, %v6140, %v5485
        %v6173 = vsel %vm2105, %v6141, %v5487
        %v6174 = vsel %vm2105, %v6142, %v5489
        %v6175 = vsel %vm2105, %v6143, %v5491
        %v6176 = vsel %vm2105, %v6144, %v5493
        %v6177 = vsel %vm2105, %v6145, %v5495
        %v6178 = vsel %vm2105, %v6146, %v5497
        %v6179 = vsel %vm2105, %v6147, %v5499
        %v6180 = vsel %vm2105, %v6148, %v5501
        %v6181 = vsel %vm2105, %v6149, %v5503
        %v6182 = vsel %vm2105, %v6150, %v5505
        %v6183 = vsel %vm2105, %v6151, %v5507
        %v6184 = vsel %vm2105, %v6152, %v5509
        %v6185 = vsel %vm2105, %v6153, %v5511
        %v6186 = vsel %vm2105, %v6154, %v5513
        %vm6187 = vcmask 162816
        %v6188 = vsel %vm6187, %v6155, %v5579
        %v6189 = vsel %vm6187, %v6156, %v5581
        %v6190 = vsel %vm6187, %v6157, %v5583
        %v6191 = vsel %vm6187, %v6158, %v5585
        %v6192 = vsel %vm6187, %v6159, %v5587
        %v6193 = vsel %vm6187, %v6160, %v5589
        %v6194 = vsel %vm6187, %v6161, %v5591
        %v6195 = vsel %vm6187, %v6162, %v5593
        %v6196 = vsel %vm6187, %v6163, %v5595
        %v6197 = vsel %vm6187, %v6164, %v5597
        %v6198 = vsel %vm6187, %v6165, %v5599
        %v6199 = vsel %vm6187, %v6166, %v5601
        %v6200 = vsel %vm6187, %v6167, %v5603
        %v6201 = vsel %vm6187, %v6168, %v5605
        %v6202 = vsel %vm6187, %v6169, %v5607
        %v6203 = vsel %vm6187, %v6170, %v5609
        %v6204 = vsel %vm6187, %v6171, %v5611
        %v6205 = vsel %vm6187, %v6172, %v5613
        %v6206 = vsel %vm6187, %v6173, %v5615
        %v6207 = vsel %vm6187, %v6174, %v5617
        %v6208 = vsel %vm6187, %v6175, %v5619
        %v6209 = vsel %vm6187, %v6176, %v5621
        %v6210 = vsel %vm6187, %v6177, %v5623
        %v6211 = vsel %vm6187, %v6178, %v5625
        %v6212 = vsel %vm6187, %v6179, %v5627
        %v6213 = vsel %vm6187, %v6180, %v5629
        %v6214 = vsel %vm6187, %v6181, %v5631
        %v6215 = vsel %vm6187, %v6182, %v5633
        %v6216 = vsel %vm6187, %v6183, %v5635
        %v6217 = vsel %vm6187, %v6184, %v5637
        %v6218 = vsel %vm6187, %v6185, %v5639
        %v6219 = vsel %vm6187, %v6186, %v5641
        %vm6220 = vcmask 195584
        %v6221 = vsel %vm6220, %v6188, %v5707
        %v6222 = vsel %vm6220, %v6189, %v5709
        %v6223 = vsel %vm6220, %v6190, %v5711
        %v6224 = vsel %vm6220, %v6191, %v5713
        %v6225 = vsel %vm6220, %v6192, %v5715
        %v6226 = vsel %vm6220, %v6193, %v5717
        %v6227 = vsel %vm6220, %v6194, %v5719
        %v6228 = vsel %vm6220, %v6195, %v5721
        %v6229 = vsel %vm6220, %v6196, %v5723
        %v6230 = vsel %vm6220, %v6197, %v5725
        %v6231 = vsel %vm6220, %v6198, %v5727
        %v6232 = vsel %vm6220, %v6199, %v5729
        %v6233 = vsel %vm6220, %v6200, %v5731
        %v6234 = vsel %vm6220, %v6201, %v5733
        %v6235 = vsel %vm6220, %v6202, %v5735
        %v6236 = vsel %vm6220, %v6203, %v5737
        %v6237 = vsel %vm6220, %v6204, %v5739
        %v6238 = vsel %vm6220, %v6205, %v5741
        %v6239 = vsel %vm6220, %v6206, %v5743
        %v6240 = vsel %vm6220, %v6207, %v5745
        %v6241 = vsel %vm6220, %v6208, %v5747
        %v6242 = vsel %vm6220, %v6209, %v5749
        %v6243 = vsel %vm6220, %v6210, %v5751
        %v6244 = vsel %vm6220, %v6211, %v5753
        %v6245 = vsel %vm6220, %v6212, %v5755
        %v6246 = vsel %vm6220, %v6213, %v5757
        %v6247 = vsel %vm6220, %v6214, %v5759
        %v6248 = vsel %vm6220, %v6215, %v5761
        %v6249 = vsel %vm6220, %v6216, %v5763
        %v6250 = vsel %vm6220, %v6217, %v5765
        %v6251 = vsel %vm6220, %v6218, %v5767
        %v6252 = vsel %vm6220, %v6219, %v5769
        %vm6253 = vcmask 228352
        %v6254 = vsel %vm6253, %v6221, %v5835
        %v6255 = vsel %vm6253, %v6222, %v5837
        %v6256 = vsel %vm6253, %v6223, %v5839
        %v6257 = vsel %vm6253, %v6224, %v5841
        %v6258 = vsel %vm6253, %v6225, %v5843
        %v6259 = vsel %vm6253, %v6226, %v5845
        %v6260 = vsel %vm6253, %v6227, %v5847
        %v6261 = vsel %vm6253, %v6228, %v5849
        %v6262 = vsel %vm6253, %v6229, %v5851
        %v6263 = vsel %vm6253, %v6230, %v5853
        %v6264 = vsel %vm6253, %v6231, %v5855
        %v6265 = vsel %vm6253, %v6232, %v5857
        %v6266 = vsel %vm6253, %v6233, %v5859
        %v6267 = vsel %vm6253, %v6234, %v5861
        %v6268 = vsel %vm6253, %v6235, %v5863
        %v6269 = vsel %vm6253, %v6236, %v5865
        %v6270 = vsel %vm6253, %v6237, %v5867
        %v6271 = vsel %vm6253, %v6238, %v5869
        %v6272 = vsel %vm6253, %v6239, %v5871
        %v6273 = vsel %vm6253, %v6240, %v5873
        %v6274 = vsel %vm6253, %v6241, %v5875
        %v6275 = vsel %vm6253, %v6242, %v5877
        %v6276 = vsel %vm6253, %v6243, %v5879
        %v6277 = vsel %vm6253, %v6244, %v5881
        %v6278 = vsel %vm6253, %v6245, %v5883
        %v6279 = vsel %vm6253, %v6246, %v5885
        %v6280 = vsel %vm6253, %v6247, %v5887
        %v6281 = vsel %vm6253, %v6248, %v5889
        %v6282 = vsel %vm6253, %v6249, %v5891
        %v6283 = vsel %vm6253, %v6250, %v5893
        %v6284 = vsel %vm6253, %v6251, %v5895
        %v6285 = vsel %vm6253, %v6252, %v5897
        %v6286 = vsel %vm2698, %v6254, %v5963
        %v6287 = vsel %vm2698, %v6255, %v5965
        %v6288 = vsel %vm2698, %v6256, %v5967
        %v6289 = vsel %vm2698, %v6257, %v5969
        %v6290 = vsel %vm2698, %v6258, %v5971
        %v6291 = vsel %vm2698, %v6259, %v5973
        %v6292 = vsel %vm2698, %v6260, %v5975
        %v6293 = vsel %vm2698, %v6261, %v5977
        %v6294 = vsel %vm2698, %v6262, %v5979
        %v6295 = vsel %vm2698, %v6263, %v5981
        %v6296 = vsel %vm2698, %v6264, %v5983
        %v6297 = vsel %vm2698, %v6265, %v5985
        %v6298 = vsel %vm2698, %v6266, %v5987
        %v6299 = vsel %vm2698, %v6267, %v5989
        %v6300 = vsel %vm2698, %v6268, %v5991
        %v6301 = vsel %vm2698, %v6269, %v5993
        %v6302 = vsel %vm2698, %v6270, %v5995
        %v6303 = vsel %vm2698, %v6271, %v5997
        %v6304 = vsel %vm2698, %v6272, %v5999
        %v6305 = vsel %vm2698, %v6273, %v6001
        %v6306 = vsel %vm2698, %v6274, %v6003
        %v6307 = vsel %vm2698, %v6275, %v6005
        %v6308 = vsel %vm2698, %v6276, %v6007
        %v6309 = vsel %vm2698, %v6277, %v6009
        %v6310 = vsel %vm2698, %v6278, %v6011
        %v6311 = vsel %vm2698, %v6279, %v6013
        %v6312 = vsel %vm2698, %v6280, %v6015
        %v6313 = vsel %vm2698, %v6281, %v6017
        %v6314 = vsel %vm2698, %v6282, %v6019
        %v6315 = vsel %vm2698, %v6283, %v6021
        %v6316 = vsel %vm2698, %v6284, %v6023
        %v6317 = vsel %vm2698, %v6285, %v6025
        %v6318 = vpack.c.bf16 %v6287, %v6286
        %v6319 = vpack.c.bf16 %v6289, %v6288
        %v6320 = vpack.c.bf16 %v6291, %v6290
        %v6321 = vpack.c.bf16 %v6293, %v6292
        %v6322 = vpack.c.bf16 %v6295, %v6294
        %v6323 = vpack.c.bf16 %v6297, %v6296
        %v6324 = vpack.c.bf16 %v6299, %v6298
        %v6325 = vpack.c.bf16 %v6301, %v6300
        %v6326 = vpack.c.bf16 %v6303, %v6302
        %v6327 = vpack.c.bf16 %v6305, %v6304
        %v6328 = vpack.c.bf16 %v6307, %v6306
        %v6329 = vpack.c.bf16 %v6309, %v6308
        %v6330 = vpack.c.bf16 %v6311, %v6310
        %v6331 = vpack.c.bf16 %v6313, %v6312
        %v6332 = vpack.c.bf16 %v6315, %v6314
        %v6333 = vpack.c.bf16 %v6317, %v6316
        %v6334 = vld [vmem:[%s6] sm:$0xf]
        %v6335 = vld [vmem:[%s6 + $0x4] sm:$0xf]
        %v6336 = vld [vmem:[%s6 + $0x8] sm:$0xf]
        %v6337 = vld [vmem:[%s6 + $0xc] sm:$0xf]
        %v6338 = vld [vmem:[%s6 + $0x10] sm:$0x3]
        %v6339 = vld [vmem:[%s7] sm:$0x1]
        %v6341 = vperm.slane %v6339, 0
        %v6348 = vunpack.c.l.b16 %v6334
        %v6349 = vunpack.c.l.b16 %v6335
        %v6350 = vunpack.c.l.b16 %v6336
        %v6351 = vunpack.c.l.b16 %v6337
        %v6352 = vunpack.c.l.b16 %v6338
        %v6353 = vpack.c.b16 %v6349, %v6348
        %v6354 = vpack.c.b16 %v6351, %v6350
        %v6355 = vpack.c.b16 %v6352, %v6352
        %vm6358 = vcmask 293888
        %v6360 = vsel %vm6358, %v6318, 0
        %v6363 = vsel %vm6358, %v6319, 0
        %v6366 = vsel %vm6358, %v6320, 0
        %v6369 = vsel %vm6358, %v6321, 0
        %v6372 = vsel %vm6358, %v6322, 0
        %v6375 = vsel %vm6358, %v6323, 0
        %v6378 = vsel %vm6358, %v6324, 0
        %v6381 = vsel %vm6358, %v6325, 0
        %v6384 = vsel %vm6358, %v6326, 0
        %v6387 = vsel %vm6358, %v6327, 0
        %v6390 = vsel %vm6358, %v6328, 0
        %v6393 = vsel %vm6358, %v6329, 0
        %v6396 = vsel %vm6358, %v6330, 0
        %v6399 = vsel %vm6358, %v6331, 0
        %v6402 = vsel %vm6358, %v6332, 0
        %v6405 = vsel %vm6358, %v6333, 0
        %vm6407 = vcmask 1041408
        %v6409 = vsel %vm6407, %v6355, 0
        %6411 = vmatpush.bf16.msra.mxu0 0
        %6412 = vmatpush.bf16.msra.mxu0 0
        %6413 = vmatpush.bf16.msra.mxu0 0
        %6414 = vmatpush.bf16.msra.mxu0 0
        %6415 = vmatpush.bf16.msra.mxu0 0
        %6416 = vmatpush.bf16.msra.mxu0 %v6409
        %6417 = vmatpush.bf16.msra.mxu0 %v6354
        %6418 = vmatpush.bf16.msra.mxu0 %v6353
        %6419 = vmatmul.bf16.gmra.mxu0 %v6360
        %v6420 = vpop.f32.mrf.mxu0
        %v6421 = vadd.f32 %v6341, %v6420
        %v6422 = vpop.f32.mrf.mxu0
        %v6423 = vadd.f32 %v6341, %v6422
        %6424 = vmatmul.bf16.gmra.mxu0 %v6363
        %v6425 = vpop.f32.mrf.mxu0
        %v6426 = vadd.f32 %v6341, %v6425
        %v6427 = vpop.f32.mrf.mxu0
        %v6428 = vadd.f32 %v6341, %v6427
        %6429 = vmatmul.bf16.gmra.mxu0 %v6366
        %v6430 = vpop.f32.mrf.mxu0
        %v6431 = vadd.f32 %v6341, %v6430
        %v6432 = vpop.f32.mrf.mxu0
        %v6433 = vadd.f32 %v6341, %v6432
        %6434 = vmatmul.bf16.gmra.mxu0 %v6369
        %v6435 = vpop.f32.mrf.mxu0
        %v6436 = vadd.f32 %v6341, %v6435
        %v6437 = vpop.f32.mrf.mxu0
        %v6438 = vadd.f32 %v6341, %v6437
        %6439 = vmatmul.bf16.gmra.mxu0 %v6372
        %v6440 = vpop.f32.mrf.mxu0
        %v6441 = vadd.f32 %v6341, %v6440
        %v6442 = vpop.f32.mrf.mxu0
        %v6443 = vadd.f32 %v6341, %v6442
        %6444 = vmatmul.bf16.gmra.mxu0 %v6375
        %v6445 = vpop.f32.mrf.mxu0
        %v6446 = vadd.f32 %v6341, %v6445
        %v6447 = vpop.f32.mrf.mxu0
        %v6448 = vadd.f32 %v6341, %v6447
        %6449 = vmatmul.bf16.gmra.mxu0 %v6378
        %v6450 = vpop.f32.mrf.mxu0
        %v6451 = vadd.f32 %v6341, %v6450
        %v6452 = vpop.f32.mrf.mxu0
        %v6453 = vadd.f32 %v6341, %v6452
        %6454 = vmatmul.bf16.gmra.mxu0 %v6381
        %v6455 = vpop.f32.mrf.mxu0
        %v6456 = vadd.f32 %v6341, %v6455
        %v6457 = vpop.f32.mrf.mxu0
        %v6458 = vadd.f32 %v6341, %v6457
        %6459 = vmatmul.bf16.gmra.mxu0 %v6384
        %v6460 = vpop.f32.mrf.mxu0
        %v6461 = vadd.f32 %v6341, %v6460
        %v6462 = vpop.f32.mrf.mxu0
        %v6463 = vadd.f32 %v6341, %v6462
        %6464 = vmatmul.bf16.gmra.mxu0 %v6387
        %v6465 = vpop.f32.mrf.mxu0
        %v6466 = vadd.f32 %v6341, %v6465
        %v6467 = vpop.f32.mrf.mxu0
        %v6468 = vadd.f32 %v6341, %v6467
        %6469 = vmatmul.bf16.gmra.mxu0 %v6390
        %v6470 = vpop.f32.mrf.mxu0
        %v6471 = vadd.f32 %v6341, %v6470
        %v6472 = vpop.f32.mrf.mxu0
        %v6473 = vadd.f32 %v6341, %v6472
        %6474 = vmatmul.bf16.gmra.mxu0 %v6393
        %v6475 = vpop.f32.mrf.mxu0
        %v6476 = vadd.f32 %v6341, %v6475
        %v6477 = vpop.f32.mrf.mxu0
        %v6478 = vadd.f32 %v6341, %v6477
        %6479 = vmatmul.bf16.gmra.mxu0 %v6396
        %v6480 = vpop.f32.mrf.mxu0
        %v6481 = vadd.f32 %v6341, %v6480
        %v6482 = vpop.f32.mrf.mxu0
        %v6483 = vadd.f32 %v6341, %v6482
        %6484 = vmatmul.bf16.gmra.mxu0 %v6399
        %v6485 = vpop.f32.mrf.mxu0
        %v6486 = vadd.f32 %v6341, %v6485
        %v6487 = vpop.f32.mrf.mxu0
        %v6488 = vadd.f32 %v6341, %v6487
        %6489 = vmatmul.bf16.gmra.mxu0 %v6402
        %v6490 = vpop.f32.mrf.mxu0
        %v6491 = vadd.f32 %v6341, %v6490
        %v6492 = vpop.f32.mrf.mxu0
        %v6493 = vadd.f32 %v6341, %v6492
        %6494 = vmatmul.bf16.gmra.mxu0 %v6405
        %v6495 = vpop.f32.mrf.mxu0
        %v6496 = vadd.f32 %v6341, %v6495
        %v6497 = vpop.f32.mrf.mxu0
        %v6498 = vadd.f32 %v6341, %v6497
        %6499 = vdwg.mxu0
        %v6500 = vmax.f32 %v6421, 0.0
        %v6501 = vmax.f32 %v6423, 0.0
        %v6502 = vmax.f32 %v6426, 0.0
        %v6503 = vmax.f32 %v6428, 0.0
        %v6504 = vmax.f32 %v6431, 0.0
        %v6505 = vmax.f32 %v6433, 0.0
        %v6506 = vmax.f32 %v6436, 0.0
        %v6507 = vmax.f32 %v6438, 0.0
        %v6508 = vmax.f32 %v6441, 0.0
        %v6509 = vmax.f32 %v6443, 0.0
        %v6510 = vmax.f32 %v6446, 0.0
        %v6511 = vmax.f32 %v6448, 0.0
        %v6512 = vmax.f32 %v6451, 0.0
        %v6513 = vmax.f32 %v6453, 0.0
        %v6514 = vmax.f32 %v6456, 0.0
        %v6515 = vmax.f32 %v6458, 0.0
        %v6516 = vmax.f32 %v6461, 0.0
        %v6517 = vmax.f32 %v6463, 0.0
        %v6518 = vmax.f32 %v6466, 0.0
        %v6519 = vmax.f32 %v6468, 0.0
        %v6520 = vmax.f32 %v6471, 0.0
        %v6521 = vmax.f32 %v6473, 0.0
        %v6522 = vmax.f32 %v6476, 0.0
        %v6523 = vmax.f32 %v6478, 0.0
        %v6524 = vmax.f32 %v6481, 0.0
        %v6525 = vmax.f32 %v6483, 0.0
        %v6526 = vmax.f32 %v6486, 0.0
        %v6527 = vmax.f32 %v6488, 0.0
        %v6528 = vmax.f32 %v6491, 0.0
        %v6529 = vmax.f32 %v6493, 0.0
        %v6530 = vmax.f32 %v6496, 0.0
        %v6531 = vmax.f32 %v6498, 0.0
        %v6532 = vsel %vm2698, %v6500, 0.0
        %v6533 = vsel %vm2698, %v6501, 0.0
        %v6534 = vadd.f32 %v6532, %v6533
        %v6535 = vsel %vm2698, %v6502, 0.0
        %v6536 = vadd.f32 %v6534, %v6535
        %v6537 = vsel %vm2698, %v6503, 0.0
        %v6538 = vadd.f32 %v6536, %v6537
        %v6539 = vsel %vm2698, %v6504, 0.0
        %v6540 = vadd.f32 %v6538, %v6539
        %v6541 = vsel %vm2698, %v6505, 0.0
        %v6542 = vadd.f32 %v6540, %v6541
        %v6543 = vsel %vm2698, %v6506, 0.0
        %v6544 = vadd.f32 %v6542, %v6543
        %v6545 = vsel %vm2698, %v6507, 0.0
        %v6546 = vadd.f32 %v6544, %v6545
        %v6547 = vsel %vm2698, %v6508, 0.0
        %v6548 = vadd.f32 %v6546, %v6547
        %v6549 = vsel %vm2698, %v6509, 0.0
        %v6550 = vadd.f32 %v6548, %v6549
        %v6551 = vsel %vm2698, %v6510, 0.0
        %v6552 = vadd.f32 %v6550, %v6551
        %v6553 = vsel %vm2698, %v6511, 0.0
        %v6554 = vadd.f32 %v6552, %v6553
        %v6555 = vsel %vm2698, %v6512, 0.0
        %v6556 = vadd.f32 %v6554, %v6555
        %v6557 = vsel %vm2698, %v6513, 0.0
        %v6558 = vadd.f32 %v6556, %v6557
        %v6559 = vsel %vm2698, %v6514, 0.0
        %v6560 = vadd.f32 %v6558, %v6559
        %v6561 = vsel %vm2698, %v6515, 0.0
        %v6562 = vadd.f32 %v6560, %v6561
        %v6563 = vsel %vm2698, %v6516, 0.0
        %v6564 = vadd.f32 %v6562, %v6563
        %v6565 = vsel %vm2698, %v6517, 0.0
        %v6566 = vadd.f32 %v6564, %v6565
        %v6567 = vsel %vm2698, %v6518, 0.0
        %v6568 = vadd.f32 %v6566, %v6567
        %v6569 = vsel %vm2698, %v6519, 0.0
        %v6570 = vadd.f32 %v6568, %v6569
        %v6571 = vsel %vm2698, %v6520, 0.0
        %v6572 = vadd.f32 %v6570, %v6571
        %v6573 = vsel %vm2698, %v6521, 0.0
        %v6574 = vadd.f32 %v6572, %v6573
        %v6575 = vsel %vm2698, %v6522, 0.0
        %v6576 = vadd.f32 %v6574, %v6575
        %v6577 = vsel %vm2698, %v6523, 0.0
        %v6578 = vadd.f32 %v6576, %v6577
        %v6579 = vsel %vm2698, %v6524, 0.0
        %v6580 = vadd.f32 %v6578, %v6579
        %v6581 = vsel %vm2698, %v6525, 0.0
        %v6582 = vadd.f32 %v6580, %v6581
        %v6583 = vsel %vm2698, %v6526, 0.0
        %v6584 = vadd.f32 %v6582, %v6583
        %v6585 = vsel %vm2698, %v6527, 0.0
        %v6586 = vadd.f32 %v6584, %v6585
        %v6587 = vsel %vm2698, %v6528, 0.0
        %v6588 = vadd.f32 %v6586, %v6587
        %v6589 = vsel %vm2698, %v6529, 0.0
        %v6590 = vadd.f32 %v6588, %v6589
        %v6591 = vsel %vm2698, %v6530, 0.0
        %v6592 = vadd.f32 %v6590, %v6591
        %v6593 = vsel %vm2698, %v6531, 0.0
        %v6594 = vadd.f32 %v6592, %v6593
        %v6595 = vrot.slane %v6594, 4
        %v6596 = vadd.f32 %v6594, %v6595
        %v6597 = vrot.slane %v6596, 2
        %v6598 = vadd.f32 %v6596, %v6597
        %v6599 = vrot.slane %v6598, 1
        %v6600 = vadd.f32 %v6598, %v6599
        %v6601 = vrcp.pop 256.0
        %v6602 = vmul.f32 256.0, %v6601
        %v6603 = vsub.f32 1.0, %v6602
        %v6604 = vmul.f32 %v6601, %v6603
        %v6605 = vadd.f32 %v6601, %v6604
        %vm6606 = vweird.f32 %v6601
        %v6607 = vsel %vm6606, %v6601, %v6605
        %v6608 = vmul.f32 %v6600, %v6607
        %v6609 = vld [vmem:[%s8] sm:$0xff]
        %v6610 = vld [vmem:[%s8 + $0x8] sm:$0xff]
        %v6611 = vld [vmem:[%s8 + $0x10] sm:$0xff]
        %v6612 = vld [vmem:[%s8 + $0x18] sm:$0xff]
        %v6613 = vld [vmem:[%s9] sm:$0x1]
        %v6615 = vsel %vm2698, %v6608, 0
        %6617 = vmatpush.msra.mxu0 0.0
        %6618 = vmatpush.msra.mxu0 0.0
        %6619 = vmatpush.msra.mxu0 0.0
        %6620 = vmatpush.msra.mxu0 0.0
        %6621 = vmatpush.msra.mxu0 0.0
        %6622 = vmatpush.msra.mxu0 0.0
        %6623 = vmatpush.msra.mxu0 0.0
        %6624 = vmatpush.msra.mxu0 0.0
        %6625 = vmatpush.msra.mxu0 0.0
        %6626 = vmatpush.msra.mxu0 0.0
        %6627 = vmatpush.msra.mxu0 0.0
        %6628 = vmatpush.msra.mxu0 0.0
        %6629 = vmatpush.msra.mxu0 %v6612
        %6630 = vmatpush.msra.mxu0 %v6611
        %6631 = vmatpush.msra.mxu0 %v6610
        %6632 = vmatpush.msra.mxu0 %v6609
        %6633 = vmatmul.f32.gmra.mxu0 %v6615
        %v6634 = vpop.f32.mrf.mxu0
        %v6635 = vadd.f32 %v6613, %v6634
        %6636 = vdwg.mxu0
        %6637 = vst [vmem:[%s397] sm:$0x1] %v6635
        %p6638 = scmp.lt.s32.totalorder %s26, 1
        %s6639 = scalar_select %p6638, %s26, 1
        %s6640 = smul.addr %s6639, 32
        %s6641 = smul.addr %s6640, 8
        %s6642 = scalar_lea.vmem %s10, %s6641
        %s6643 = sand.u32 %s280, 1
        %s6644 = scalar_lea.sflag [#allocation6], %s6643
        %s6645 = sand.u32 %s280, 1
        %s6646 = scalar_lea.vmem [#allocation5], %s6645
        // Predicated region
        $region61: #{encoder_decoder_forward.1} parent=59 // pred_check
          %p6647 = pneg %p264
        $region62: #{encoder_decoder_forward.1} parent=59 // pred_check_branch
          %6649 = sbr.rel (%p6647) target = $region64
        $region63: #{encoder_decoder_forward.1} parent=59 // pred_region
          _
        $region64: #{encoder_decoder_forward.1} parent=59 // pred_fallthru
          _
        // Predicated region
        $region65: #{encoder_decoder_forward.1} parent=59 // pred_check
          %p6650 = pneg %p290
        $region66: #{encoder_decoder_forward.1} parent=59 // pred_check_branch
          %6652 = sbr.rel (%p6650) target = $region68
        $region67: #{encoder_decoder_forward.1} parent=59 // pred_region
          %6654 = vsyncadd %s6644, 0
          %s6655 = scalar_lea.hbm %s11, %s26
          %s6657 = sshll.u32 %s6646, 4
          %s6658 = int_to_ptr.vmem [resolvable:$true] %s6657
          %s6659 = sshll.u32 %s6655, 4
          %s6660 = int_to_ptr.hbm [resolvable:$true] %s6659
          %6662 = dma.vmem_to_hbm [thread:$0]  %s6658, 16, %s6660, %s6644
        $region68: #{encoder_decoder_forward.1} parent=59 // pred_fallthru
          _
      $region60: #{encoder_decoder_forward.1} parent=5 // pred_fallthru
        _
      %p6663 = scmp.le.s32.totalorder 2, %s21
      // Predicated region
      $region69: #{encoder_decoder_forward.1} parent=5 // pred_check
        %p6664 = pneg %p6663
      $region70: #{encoder_decoder_forward.1} parent=5 // pred_check_branch
        %6666 = sbr.rel (%p6664) target = $region72
      $region71: #{encoder_decoder_forward.1} parent=5 // pred_region
        %s6667 = ssub.s32 %s21, 2
        // Predicated region
        $region73: #{encoder_decoder_forward.1} parent=71 // pred_check
          %p6668 = pneg %p270
        $region74: #{encoder_decoder_forward.1} parent=71 // pred_check_branch
          %6670 = sbr.rel (%p6668) target = $region76
        $region75: #{encoder_decoder_forward.1} parent=71 // pred_region
          %p6671 = scmp.lt.s32.totalorder %s27, 1
          %s6672 = scalar_select %p6671, %s27, 1
          %s6673 = smul.addr %s6672, 32
          %s6674 = smul.addr %s6673, 8
          %s6675 = scalar_lea.vmem %s10, %s6674
        $region76: #{encoder_decoder_forward.1} parent=71 // pred_fallthru
          _
        // Predicated region
        $region77: #{encoder_decoder_forward.1} parent=71 // pred_check
          %p6676 = pneg %p296
        $region78: #{encoder_decoder_forward.1} parent=71 // pred_check_branch
          %6678 = sbr.rel (%p6676) target = $region80
        $region79: #{encoder_decoder_forward.1} parent=71 // pred_region
          %s6679 = sand.u32 %s281, 1
          %s6680 = scalar_lea.sflag [#allocation6], %s6679
          %s6681 = sand.u32 %s281, 1
          %s6682 = scalar_lea.vmem [#allocation5], %s6681
          %6684 = dma.done %s6680, 16
        $region80: #{encoder_decoder_forward.1} parent=71 // pred_fallthru
          _
      $region72: #{encoder_decoder_forward.1} parent=5 // pred_fallthru
        _
    $region6: #{encoder_decoder_forward.1} parent=1 // loop_footer
      %s25 = sadd.s32 1, %s21
    $region7: #{encoder_decoder_forward.1} parent=1 // loop_footer_branch
      %20 = sbr.rel target = $region3
    $region8: #{encoder_decoder_forward.1} parent=1 // loop_exit
      _
    %6685 = vsyncpa [#allocation6], 1
    %s6686 = scalar_lea.sflag [#allocation6], 1
    %6687 = vsyncpa %s6686, 1

</llo_original>
